<compile_context>
chip_gen: v5e
topology: v5e:2x2
jax: 0.10.0
libtpu: 0.0.40
codegen_flags: <defaults>
</compile_context>

<pallas_src>
import functools

import jax
import jax.numpy as jnp
from jax.experimental import pallas as pl
from jax.experimental.pallas import tpu as pltpu


def _round_up(x, m):
    return ((x + m - 1) // m) * m


def _pick_time_block(L, max_block=64):
    """Largest divisor of L that is <= max_block (amortizes per-grid-step overhead)."""
    t = min(L, max_block)
    while L % t:
        t -= 1
    return t


# --------------------------------------------------------------------------
# Fused bidirectional LSTM recurrence kernel.
# Grid axis 0 walks blocks of T_BLK timesteps (sequential carry -> "arbitrary").
# Inputs:
#   gxf_ref : (T_BLK, B, 4H)  precomputed x@W_ih_f + b_f for this block (time order)
#   gxr_ref : (T_BLK, B, 4H)  precomputed x@W_ih_r + b_r for the mirrored block
#   whhf/whhr : (H, 4H)       hidden-to-hidden weights, gate columns [i|f|o|g]
# Outputs:
#   yf_ref  : (T_BLK, B, H)   forward hidden states for this block
#   yr_ref  : (T_BLK, B, H)   reverse hidden states for the mirrored block
#   hT/cT   : (2, B, H)       final states, [0]=forward, [1]=reverse
# Scratch: h/c per direction, persistent across grid steps.
# --------------------------------------------------------------------------
def _bilstm_kernel(gxf_ref, gxr_ref, whhf_ref, whhr_ref,
                   yf_ref, yr_ref, hT_ref, cT_ref,
                   hf_sc, cf_sc, hr_sc, cr_sc):
    tb = pl.program_id(0)
    nb = pl.num_programs(0)
    t_blk = yf_ref.shape[0]
    H = hf_sc.shape[-1]

    @pl.when(tb == 0)
    def _():
        hf_sc[...] = jnp.zeros_like(hf_sc)
        cf_sc[...] = jnp.zeros_like(cf_sc)
        hr_sc[...] = jnp.zeros_like(hr_sc)
        cr_sc[...] = jnp.zeros_like(cr_sc)

    def cell(gates, c):
        # gate columns are [i | f | o | g]: one sigmoid over a contiguous 3H slab.
        ifo = jax.nn.sigmoid(gates[:, :3 * H])
        g = jnp.tanh(gates[:, 3 * H:])
        i_g = ifo[:, 0 * H:1 * H]
        f_g = ifo[:, 1 * H:2 * H]
        o_g = ifo[:, 2 * H:3 * H]
        c_new = f_g * c + i_g * g
        h_new = o_g * jnp.tanh(c_new)
        return h_new, c_new

    @pl.loop(0, t_blk, unroll=(t_blk <= 8))
    def _(i):
        j = t_blk - 1 - i      # the reverse stream walks its (mirrored) block backwards
        gates_f = gxf_ref[i] + jnp.dot(hf_sc[...], whhf_ref[...],
                                       preferred_element_type=jnp.float32)
        gates_r = gxr_ref[j] + jnp.dot(hr_sc[...], whhr_ref[...],
                                       preferred_element_type=jnp.float32)
        h_f, c_f = cell(gates_f, cf_sc[...])
        h_r, c_r = cell(gates_r, cr_sc[...])
        hf_sc[...] = h_f
        cf_sc[...] = c_f
        hr_sc[...] = h_r
        cr_sc[...] = c_r
        yf_ref[i] = h_f
        yr_ref[j] = h_r

    # Final-state writes only on the last grid step (saves 2 stores per step).
    @pl.when(tb == nb - 1)
    def _():
        hT_ref[0] = hf_sc[...]
        hT_ref[1] = hr_sc[...]
        cT_ref[0] = cf_sc[...]
        cT_ref[1] = cr_sc[...]


# --------------------------------------------------------------------------
# Wrappers
# --------------------------------------------------------------------------
def _prep_direction(w_ih, w_hh, b_ih, b_hh, H):
    """PyTorch layout (4H, Din)/(4H, H)/(4H,) with gate rows [i,f,g,o] ->
    transposed (Din, 4H)/(H, 4H)/(4H,) with gate columns re-ordered to [i,f,o,g]."""
    def reorder(a):
        return jnp.concatenate([a[0:H], a[H:2 * H], a[3 * H:4 * H], a[2 * H:3 * H]],
                               axis=0)
    w_ih = reorder(jnp.asarray(w_ih, jnp.float32))
    w_hh = reorder(jnp.asarray(w_hh, jnp.float32))
    b = reorder((jnp.asarray(b_ih) + jnp.asarray(b_hh)).astype(jnp.float32))
    return w_ih.T, w_hh.T, b


def bilstm_layer_tm(x_tm, params, max_time_block=64):
    """Fused bidirectional LSTM over a time-major, batch-padded input.
    x_tm: (L, Bp, Din) float32, Bp a multiple of 8.
    Returns out_tm (L, Bp, 2H) and (h_n, c_n) each (2, Bp, H)."""
    L, Bp, Din = x_tm.shape
    H = params["w_hh_f"].shape[1]
    assert Bp % 8 == 0
    assert H % 32 == 0, "hidden_dim must be a multiple of 32 so 4H is lane-divisible"

    wih_f, whh_f, b_f = _prep_direction(params["w_ih_f"], params["w_hh_f"],
                                        params["b_ih_f"], params["b_hh_f"], H)
    wih_r, whh_r, b_r = _prep_direction(params["w_ih_r"], params["w_hh_r"],
                                        params["b_ih_r"], params["b_hh_r"], H)

    # Hoisted input projection for BOTH directions: one big (L*Bp, Din)x(Din, 8H)
    # matmul instead of a tiny per-timestep matmul inside the serial recurrence.
    w_ih_cat = jnp.concatenate([wih_f, wih_r], axis=1)          # (Din, 8H)
    b_cat = jnp.concatenate([b_f, b_r], axis=0)                 # (8H,)
    gx = jnp.einsum("lbd,dg->lbg", x_tm.astype(jnp.float32), w_ih_cat) + b_cat

    t_blk = _pick_time_block(L, max_time_block)
    nb = L // t_blk

    # Forward stream reads gx block tb, columns [0:4H]; reverse stream reads the
    # mirrored block nb-1-tb, columns [4H:8H] (no materialized flips).
    y_f, y_r, h_n, c_n = pl.pallas_call(
        _bilstm_kernel,
        out_shape=(jax.ShapeDtypeStruct((L, Bp, H), jnp.float32),
                   jax.ShapeDtypeStruct((L, Bp, H), jnp.float32),
                   jax.ShapeDtypeStruct((2, Bp, H), jnp.float32),
                   jax.ShapeDtypeStruct((2, Bp, H), jnp.float32)),
        grid_spec=pltpu.PrefetchScalarGridSpec(
            num_scalar_prefetch=0,
            grid=(nb,),
            in_specs=[
                pl.BlockSpec((t_blk, Bp, 4 * H), lambda tb: (tb, 0, 0)),
                pl.BlockSpec((t_blk, Bp, 4 * H), lambda tb: (nb - 1 - tb, 0, 1)),
                pl.BlockSpec((H, 4 * H), lambda tb: (0, 0)),
                pl.BlockSpec((H, 4 * H), lambda tb: (0, 0)),
            ],
            out_specs=(
                pl.BlockSpec((t_blk, Bp, H), lambda tb: (tb, 0, 0)),
                pl.BlockSpec((t_blk, Bp, H), lambda tb: (nb - 1 - tb, 0, 0)),
                pl.BlockSpec((2, Bp, H), lambda tb: (0, 0, 0)),
                pl.BlockSpec((2, Bp, H), lambda tb: (0, 0, 0)),
            ),
            scratch_shapes=[pltpu.VMEM((Bp, H), jnp.float32)] * 4,
        ),
        compiler_params=pltpu.CompilerParams(
            dimension_semantics=("arbitrary",)),
    )(gx, gx, whh_f, whh_r)

    out_tm = jnp.concatenate([y_f, y_r], axis=-1)               # (L, Bp, 2H)
    return out_tm, (h_n, c_n)


def _pyramid_reduce_tm(x_tm):
    """(L, B, D) -> (L//2, B, 2D): concat consecutive frame pairs along features.
    Time-major equivalent of the PyTorch batch-first view(B, L//2, 2D)."""
    return jnp.concatenate([x_tm[0::2], x_tm[1::2]], axis=-1)


def _pad_batch_tm(inputs):
    B = inputs.shape[0]
    Bp = max(8, _round_up(B, 8))                 # >=8 sublanes / MXU rows
    x_tm = jnp.transpose(inputs.astype(jnp.float32), (1, 0, 2))
    if Bp != B:
        x_tm = jnp.pad(x_tm, ((0, 0), (0, Bp - B), (0, 0)))
    return x_tm, B


def pyramid_lstm_layer(inputs, params, max_time_block=64):
    """PyramidLSTMLayer.forward (batch-first API, matches the PyTorch module)."""
    x_tm, B = _pad_batch_tm(inputs)
    x_tm = _pyramid_reduce_tm(x_tm)
    out_tm, (h_n, c_n) = bilstm_layer_tm(x_tm, params, max_time_block)
    outputs = jnp.transpose(out_tm, (1, 0, 2))[:B]
    return outputs, (h_n[:, :B], c_n[:, :B])


def listener_forward(inputs, input_lengths, layer_params, max_time_block=64):
    """Listener.forward: stack of pyramid BiLSTM layers. Layers chain in time-major
    layout so there are no per-layer transposes between pallas_calls.
    `input_lengths` is unused by the reference forward."""
    del input_lengths
    x_tm, B = _pad_batch_tm(inputs)
    hiddens = None
    for p in layer_params:
        x_tm = _pyramid_reduce_tm(x_tm)
        x_tm, hiddens = bilstm_layer_tm(x_tm, p, max_time_block)
    outputs = jnp.transpose(x_tm, (1, 0, 2))[:B]
    h_n, c_n = hiddens
    return outputs, (h_n[:, :B], c_n[:, :B])


# --------------------------------------------------------------------------
# Deterministic parameter init (PyTorch-style uniform(-1/sqrt(H), 1/sqrt(H))).
# --------------------------------------------------------------------------
def init_listener_params(key, input_dim, hidden_dim, num_pyramid_layers):
    params = []
    bound = 1.0 / jnp.sqrt(hidden_dim)
    for layer in range(num_pyramid_layers):
        lstm_in = input_dim * 2 if layer == 0 else (hidden_dim * 2) * 2
        p = {}
        for direction in ("f", "r"):
            key, k1, k2, k3, k4 = jax.random.split(key, 5)
            p[f"w_ih_{direction}"] = jax.random.uniform(
                k1, (4 * hidden_dim, lstm_in), jnp.float32, -bound, bound)
            p[f"w_hh_{direction}"] = jax.random.uniform(
                k2, (4 * hidden_dim, hidden_dim), jnp.float32, -bound, bound)
            p[f"b_ih_{direction}"] = jax.random.uniform(
                k3, (4 * hidden_dim,), jnp.float32, -bound, bound)
            p[f"b_hh_{direction}"] = jax.random.uniform(
                k4, (4 * hidden_dim,), jnp.float32, -bound, bound)
        params.append(p)
    return params


# --------------------------------------------------------------------------
# Pure-JAX reference (lax.scan, PyTorch gate order) for correctness checks.
# --------------------------------------------------------------------------
def _ref_lstm_dir(x_tbd, w_ih, w_hh, b_ih, b_hh):
    H = w_hh.shape[1]
    bias = b_ih + b_hh

    def step(carry, x_t):
        h, c = carry
        gates = x_t @ w_ih.T + h @ w_hh.T + bias
        i = jax.nn.sigmoid(gates[:, 0 * H:1 * H])
        f = jax.nn.sigmoid(gates[:, 1 * H:2 * H])
        g = jnp.tanh(gates[:, 2 * H:3 * H])
        o = jax.nn.sigmoid(gates[:, 3 * H:4 * H])
        c = f * c + i * g
        h = o * jnp.tanh(c)
        return (h, c), h

    B = x_tbd.shape[1]
    init = (jnp.zeros((B, H), jnp.float32), jnp.zeros((B, H), jnp.float32))
    (hT, cT), ys = jax.lax.scan(step, init, x_tbd)
    return ys, hT, cT


def _ref_listener(inputs, layer_params):
    out = inputs
    hiddens = None
    for p in layer_params:
        B, L, D = out.shape
        x = out.reshape(B, L // 2, D * 2)
        x_tbd = jnp.transpose(x, (1, 0, 2))
        yf, hf, cf = _ref_lstm_dir(x_tbd, p["w_ih_f"], p["w_hh_f"],
                                   p["b_ih_f"], p["b_hh_f"])
        yr, hr, cr = _ref_lstm_dir(x_tbd[::-1], p["w_ih_r"], p["w_hh_r"],
                                   p["b_ih_r"], p["b_hh_r"])
        yr = yr[::-1]
        out = jnp.transpose(jnp.concatenate([yf, yr], -1), (1, 0, 2))
        hiddens = (jnp.stack([hf, hr], 0), jnp.stack([cf, cr], 0))
    return out, hiddens


if __name__ == "__main__":
    # Tolerance note: both paths use f32 matmuls on the MXU with default precision
    # (bf16 passes); accumulation order differs between the Pallas kernel and the
    # XLA scan reference, hence 1e-3 instead of machine epsilon.
    ATOL = RTOL = 1e-3

    # ---- Test 1 & 2: small shapes; H a multiple of 128 keeps everything lane-aligned.
    B, T, INPUT_DIM, HIDDEN, N_LAYERS = 2, 8, 8, 128, 2
    key = jax.random.PRNGKey(0)
    key, k_in = jax.random.split(key)
    inputs = jax.random.normal(k_in, (B, T, INPUT_DIM), jnp.float32)
    input_lengths = jnp.full((B,), T, jnp.int32)   # unused by forward (as in reference)
    key, k_p = jax.random.split(key)
    layer_params = init_listener_params(k_p, INPUT_DIM, HIDDEN, N_LAYERS)

    # (1) single PyramidLSTMLayer (module-equivalent batch-first entry point)
    out1, (h1, c1) = jax.jit(pyramid_lstm_layer)(inputs, layer_params[0])
    out1 = jax.block_until_ready(out1)
    ref1, (rh1, rc1) = _ref_listener(inputs, layer_params[:1])
    assert out1.shape == (B, T // 2, 2 * HIDDEN), out1.shape
    assert h1.shape == (2, B, HIDDEN) and c1.shape == (2, B, HIDDEN)
    assert jnp.allclose(out1, ref1, atol=ATOL, rtol=RTOL)
    assert jnp.allclose(h1, rh1, atol=ATOL, rtol=RTOL)
    assert jnp.allclose(c1, rc1, atol=ATOL, rtol=RTOL)

    # (2) full Listener stack (2 pyramid layers)
    outputs, (h_n, c_n) = jax.jit(listener_forward)(inputs, input_lengths, layer_params)
    outputs = jax.block_until_ready(outputs)
    assert outputs.shape == (B, T // (2 ** N_LAYERS), 2 * HIDDEN), outputs.shape
    assert h_n.shape == (2, B, HIDDEN) and c_n.shape == (2, B, HIDDEN)
    ref_out, (ref_h, ref_c) = _ref_listener(inputs, layer_params)
    assert jnp.allclose(outputs, ref_out, atol=ATOL, rtol=RTOL)
    assert jnp.allclose(h_n, ref_h, atol=ATOL, rtol=RTOL)
    assert jnp.allclose(c_n, ref_c, atol=ATOL, rtol=RTOL)

    # (3) multi-block time grid (reverse stream crosses block boundaries),
    #     batch padding (3 -> 8) and a small H (32).
    B2, T2, D2, H2, NL2 = 3, 64, 8, 32, 2
    key, k_in2, k_p2 = jax.random.split(key, 3)
    inputs2 = jax.random.normal(k_in2, (B2, T2, D2), jnp.float32)
    params2 = init_listener_params(k_p2, D2, H2, NL2)
    fwd2 = jax.jit(functools.partial(listener_forward, max_time_block=16))
    out2, (h2, c2) = fwd2(inputs2, jnp.full((B2,), T2, jnp.int32), params2)
    out2 = jax.block_until_ready(out2)
    ref2, (rh2, rc2) = _ref_listener(inputs2, params2)
    assert out2.shape == (B2, T2 // (2 ** NL2), 2 * H2), out2.shape
    assert jnp.allclose(out2, ref2, atol=ATOL, rtol=RTOL)
    assert jnp.allclose(h2, rh2, atol=ATOL, rtol=RTOL)
    assert jnp.allclose(c2, rc2, atol=ATOL, rtol=RTOL)

    print("KERNEL_OK")
</pallas_src>

<mosaic_0001>
module attributes {stable_mosaic.version = 11 : i64} {
  func.func @_bilstm_kernel(%arg0: i32, %arg1: memref<4x8x512xf32, #tpu.memory_space<vmem>>, %arg2: memref<4x8x512xf32, #tpu.memory_space<vmem>>, %arg3: memref<128x512xf32, #tpu.memory_space<vmem>>, %arg4: memref<128x512xf32, #tpu.memory_space<vmem>>, %arg5: memref<4x8x128xf32, #tpu.memory_space<vmem>>, %arg6: memref<4x8x128xf32, #tpu.memory_space<vmem>>, %arg7: memref<2x8x128xf32, #tpu.memory_space<vmem>>, %arg8: memref<2x8x128xf32, #tpu.memory_space<vmem>>, %arg9: memref<8x128xf32, #tpu.memory_space<vmem>>, %arg10: memref<8x128xf32, #tpu.memory_space<vmem>>, %arg11: memref<8x128xf32, #tpu.memory_space<vmem>>, %arg12: memref<8x128xf32, #tpu.memory_space<vmem>>) attributes {dimension_semantics = [#tpu.dimension_semantics<arbitrary>], iteration_bounds = array<i64: 1>, scalar_prefetch = 0 : i64, scratch_operands = 4 : i64, tpu.core_type = #tpu.core_type<tc>, window_params = [{transform_indices = @transform_0, window_bounds = array<i64: 4, 8, 512>}, {transform_indices = @transform_1, window_bounds = array<i64: 4, 8, 512>}, {pipeline_mode = #tpu.pipeline_mode<synchronous>, transform_indices = @transform_2, window_bounds = array<i64: 128, 512>}, {pipeline_mode = #tpu.pipeline_mode<synchronous>, transform_indices = @transform_3, window_bounds = array<i64: 128, 512>}, {transform_indices = @transform_4, window_bounds = array<i64: 4, 8, 128>}, {transform_indices = @transform_5, window_bounds = array<i64: 4, 8, 128>}, {pipeline_mode = #tpu.pipeline_mode<synchronous>, transform_indices = @transform_6, window_bounds = array<i64: 2, 8, 128>}, {pipeline_mode = #tpu.pipeline_mode<synchronous>, transform_indices = @transform_7, window_bounds = array<i64: 2, 8, 128>}]} {
    %c0_i32 = arith.constant 0 : i32
    %0 = arith.cmpi eq, %arg0, %c0_i32 : i32
    %1 = arith.extui %0 : i1 to i32
    %c0_i32_0 = arith.constant 0 : i32
    %2 = arith.cmpi ne, %1, %c0_i32_0 : i32
    scf.if %2 {
      %cst_142 = arith.constant 0.000000e+00 : f32
      %258 = vector.broadcast %cst_142 : f32 to vector<8x128xf32>
      %c0_143 = arith.constant 0 : index
      %c0_144 = arith.constant 0 : index
      %259 = vector.load %arg9[%c0_143, %c0_144] : memref<8x128xf32, #tpu.memory_space<vmem>>, vector<8x128xf32>
      tpu.vector_store %arg9[%c0_143, %c0_144], %258 {strides = array<i32>} : memref<8x128xf32, #tpu.memory_space<vmem>>, vector<8x128xf32>,
      %cst_145 = arith.constant 0.000000e+00 : f32
      %260 = vector.broadcast %cst_145 : f32 to vector<8x128xf32>
      %c0_146 = arith.constant 0 : index
      %c0_147 = arith.constant 0 : index
      %261 = vector.load %arg10[%c0_146, %c0_147] : memref<8x128xf32, #tpu.memory_space<vmem>>, vector<8x128xf32>
      tpu.vector_store %arg10[%c0_146, %c0_147], %260 {strides = array<i32>} : memref<8x128xf32, #tpu.memory_space<vmem>>, vector<8x128xf32>,
      %cst_148 = arith.constant 0.000000e+00 : f32
      %262 = vector.broadcast %cst_148 : f32 to vector<8x128xf32>
      %c0_149 = arith.constant 0 : index
      %c0_150 = arith.constant 0 : index
      %263 = vector.load %arg11[%c0_149, %c0_150] : memref<8x128xf32, #tpu.memory_space<vmem>>, vector<8x128xf32>
      tpu.vector_store %arg11[%c0_149, %c0_150], %262 {strides = array<i32>} : memref<8x128xf32, #tpu.memory_space<vmem>>, vector<8x128xf32>,
      %cst_151 = arith.constant 0.000000e+00 : f32
      %264 = vector.broadcast %cst_151 : f32 to vector<8x128xf32>
      %c0_152 = arith.constant 0 : index
      %c0_153 = arith.constant 0 : index
      %265 = vector.load %arg12[%c0_152, %c0_153] : memref<8x128xf32, #tpu.memory_space<vmem>>, vector<8x128xf32>
      tpu.vector_store %arg12[%c0_152, %c0_153], %264 {strides = array<i32>} : memref<8x128xf32, #tpu.memory_space<vmem>>, vector<8x128xf32>,
    } else {
    }
    %c0_i32_1 = arith.constant 0 : i32
    %c1_i32 = arith.constant 1 : i32
    %3 = arith.muli %c0_i32_1, %c1_i32 : i32
    %c0_i32_2 = arith.constant 0 : i32
    %4 = arith.addi %c0_i32_2, %3 : i32
    %c3_i32 = arith.constant 3 : i32
    %5 = arith.subi %c3_i32, %4 : i32
    %6 = arith.index_cast %4 : i32 to index
    %c0 = arith.constant 0 : index
    %c0_3 = arith.constant 0 : index
    %7 = vector.load %arg1[%6, %c0, %c0_3] : memref<4x8x512xf32, #tpu.memory_space<vmem>>, vector<1x8x512xf32>
    %8 = vector.shape_cast %7 : vector<1x8x512xf32> to vector<8x512xf32>
    %c0_4 = arith.constant 0 : index
    %c0_5 = arith.constant 0 : index
    %9 = vector.load %arg9[%c0_4, %c0_5] : memref<8x128xf32, #tpu.memory_space<vmem>>, vector<8x128xf32>
    %c0_6 = arith.constant 0 : index
    %c0_7 = arith.constant 0 : index
    %10 = vector.load %arg3[%c0_6, %c0_7] : memref<128x512xf32, #tpu.memory_space<vmem>>, vector<128x512xf32>
    %cst = arith.constant dense<0.000000e+00> : vector<8x512xf32>
    %11 = tpu.matmul %9, %10, %cst {dimension_numbers = #tpu.dot_dimension_numbers<[1], [0], [0], [1], [0, 0, 1, 1], [], []>} : vector<8x128xf32>, vector<128x512xf32>, vector<8x512xf32> -> vector<8x512xf32>
    %12 = arith.addf %8, %11 : vector<8x512xf32>
    %13 = arith.index_cast %5 : i32 to index
    %c0_8 = arith.constant 0 : index
    %c0_9 = arith.constant 0 : index
    %14 = vector.load %arg2[%13, %c0_8, %c0_9] : memref<4x8x512xf32, #tpu.memory_space<vmem>>, vector<1x8x512xf32>
    %15 = vector.shape_cast %14 : vector<1x8x512xf32> to vector<8x512xf32>
    %c0_10 = arith.constant 0 : index
    %c0_11 = arith.constant 0 : index
    %16 = vector.load %arg11[%c0_10, %c0_11] : memref<8x128xf32, #tpu.memory_space<vmem>>, vector<8x128xf32>
    %c0_12 = arith.constant 0 : index
    %c0_13 = arith.constant 0 : index
    %17 = vector.load %arg4[%c0_12, %c0_13] : memref<128x512xf32, #tpu.memory_space<vmem>>, vector<128x512xf32>
    %cst_14 = arith.constant dense<0.000000e+00> : vector<8x512xf32>
    %18 = tpu.matmul %16, %17, %cst_14 {dimension_numbers = #tpu.dot_dimension_numbers<[1], [0], [0], [1], [0, 0, 1, 1], [], []>} : vector<8x128xf32>, vector<128x512xf32>, vector<8x512xf32> -> vector<8x512xf32>
    %19 = arith.addf %15, %18 : vector<8x512xf32>
    %c0_15 = arith.constant 0 : index
    %c0_16 = arith.constant 0 : index
    %20 = vector.load %arg10[%c0_15, %c0_16] : memref<8x128xf32, #tpu.memory_space<vmem>>, vector<8x128xf32>
    %21 = vector.extract_strided_slice %12 {offsets = [0, 0], sizes = [8, 384], strides = [1, 1]} : vector<8x512xf32> to vector<8x384xf32>
    %22 = arith.negf %21 : vector<8x384xf32>
    %23 = math.exp %22 : vector<8x384xf32>
    %cst_17 = arith.constant 1.000000e+00 : f32
    %24 = vector.broadcast %cst_17 : f32 to vector<8x384xf32>
    %25 = arith.addf %24, %23 : vector<8x384xf32>
    %26 = arith.divf %24, %25 : vector<8x384xf32>
    %27 = vector.extract_strided_slice %12 {offsets = [0, 384], sizes = [8, 128], strides = [1, 1]} : vector<8x512xf32> to vector<8x128xf32>
    %28 = math.tanh %27 : vector<8x128xf32>
    %29 = vector.extract_strided_slice %26 {offsets = [0, 0], sizes = [8, 128], strides = [1, 1]} : vector<8x384xf32> to vector<8x128xf32>
    %30 = vector.extract_strided_slice %26 {offsets = [0, 128], sizes = [8, 128], strides = [1, 1]} : vector<8x384xf32> to vector<8x128xf32>
    %31 = vector.extract_strided_slice %26 {offsets = [0, 256], sizes = [8, 128], strides = [1, 1]} : vector<8x384xf32> to vector<8x128xf32>
    %32 = arith.mulf %30, %20 : vector<8x128xf32>
    %33 = arith.mulf %29, %28 : vector<8x128xf32>
    %34 = arith.addf %32, %33 : vector<8x128xf32>
    %35 = math.tanh %34 : vector<8x128xf32>
    %36 = arith.mulf %31, %35 : vector<8x128xf32>
    %c0_18 = arith.constant 0 : index
    %c0_19 = arith.constant 0 : index
    %37 = vector.load %arg12[%c0_18, %c0_19] : memref<8x128xf32, #tpu.memory_space<vmem>>, vector<8x128xf32>
    %38 = vector.extract_strided_slice %19 {offsets = [0, 0], sizes = [8, 384], strides = [1, 1]} : vector<8x512xf32> to vector<8x384xf32>
    %39 = arith.negf %38 : vector<8x384xf32>
    %40 = math.exp %39 : vector<8x384xf32>
    %cst_20 = arith.constant 1.000000e+00 : f32
    %41 = vector.broadcast %cst_20 : f32 to vector<8x384xf32>
    %42 = arith.addf %41, %40 : vector<8x384xf32>
    %43 = arith.divf %41, %42 : vector<8x384xf32>
    %44 = vector.extract_strided_slice %19 {offsets = [0, 384], sizes = [8, 128], strides = [1, 1]} : vector<8x512xf32> to vector<8x128xf32>
    %45 = math.tanh %44 : vector<8x128xf32>
    %46 = vector.extract_strided_slice %43 {offsets = [0, 0], sizes = [8, 128], strides = [1, 1]} : vector<8x384xf32> to vector<8x128xf32>
    %47 = vector.extract_strided_slice %43 {offsets = [0, 128], sizes = [8, 128], strides = [1, 1]} : vector<8x384xf32> to vector<8x128xf32>
    %48 = vector.extract_strided_slice %43 {offsets = [0, 256], sizes = [8, 128], strides = [1, 1]} : vector<8x384xf32> to vector<8x128xf32>
    %49 = arith.mulf %47, %37 : vector<8x128xf32>
    %50 = arith.mulf %46, %45 : vector<8x128xf32>
    %51 = arith.addf %49, %50 : vector<8x128xf32>
    %52 = math.tanh %51 : vector<8x128xf32>
    %53 = arith.mulf %48, %52 : vector<8x128xf32>
    %c0_21 = arith.constant 0 : index
    %c0_22 = arith.constant 0 : index
    %54 = vector.load %arg9[%c0_21, %c0_22] : memref<8x128xf32, #tpu.memory_space<vmem>>, vector<8x128xf32>
    tpu.vector_store %arg9[%c0_21, %c0_22], %36 {strides = array<i32>} : memref<8x128xf32, #tpu.memory_space<vmem>>, vector<8x128xf32>,
    %c0_23 = arith.constant 0 : index
    %c0_24 = arith.constant 0 : index
    %55 = vector.load %arg10[%c0_23, %c0_24] : memref<8x128xf32, #tpu.memory_space<vmem>>, vector<8x128xf32>
    tpu.vector_store %arg10[%c0_23, %c0_24], %34 {strides = array<i32>} : memref<8x128xf32, #tpu.memory_space<vmem>>, vector<8x128xf32>,
    %c0_25 = arith.constant 0 : index
    %c0_26 = arith.constant 0 : index
    %56 = vector.load %arg11[%c0_25, %c0_26] : memref<8x128xf32, #tpu.memory_space<vmem>>, vector<8x128xf32>
    tpu.vector_store %arg11[%c0_25, %c0_26], %53 {strides = array<i32>} : memref<8x128xf32, #tpu.memory_space<vmem>>, vector<8x128xf32>,
    %c0_27 = arith.constant 0 : index
    %c0_28 = arith.constant 0 : index
    %57 = vector.load %arg12[%c0_27, %c0_28] : memref<8x128xf32, #tpu.memory_space<vmem>>, vector<8x128xf32>
    tpu.vector_store %arg12[%c0_27, %c0_28], %51 {strides = array<i32>} : memref<8x128xf32, #tpu.memory_space<vmem>>, vector<8x128xf32>,
    %58 = arith.index_cast %4 : i32 to index
    %c0_29 = arith.constant 0 : index
    %c0_30 = arith.constant 0 : index
    %59 = vector.load %arg5[%58, %c0_29, %c0_30] : memref<4x8x128xf32, #tpu.memory_space<vmem>>, vector<1x8x128xf32>
    %60 = vector.shape_cast %59 : vector<1x8x128xf32> to vector<8x128xf32>
    %61 = vector.shape_cast %36 : vector<8x128xf32> to vector<1x8x128xf32>
    tpu.vector_store %arg5[%58, %c0_29, %c0_30], %61 {strides = array<i32>} : memref<4x8x128xf32, #tpu.memory_space<vmem>>, vector<1x8x128xf32>,
    %62 = arith.index_cast %5 : i32 to index
    %c0_31 = arith.constant 0 : index
    %c0_32 = arith.constant 0 : index
    %63 = vector.load %arg6[%62, %c0_31, %c0_32] : memref<4x8x128xf32, #tpu.memory_space<vmem>>, vector<1x8x128xf32>
    %64 = vector.shape_cast %63 : vector<1x8x128xf32> to vector<8x128xf32>
    %65 = vector.shape_cast %53 : vector<8x128xf32> to vector<1x8x128xf32>
    tpu.vector_store %arg6[%62, %c0_31, %c0_32], %65 {strides = array<i32>} : memref<4x8x128xf32, #tpu.memory_space<vmem>>, vector<1x8x128xf32>,
    %c1_i32_33 = arith.constant 1 : i32
    %c1_i32_34 = arith.constant 1 : i32
    %66 = arith.muli %c1_i32_33, %c1_i32_34 : i32
    %c0_i32_35 = arith.constant 0 : i32
    %67 = arith.addi %c0_i32_35, %66 : i32
    %c3_i32_36 = arith.constant 3 : i32
    %68 = arith.subi %c3_i32_36, %67 : i32
    %69 = arith.index_cast %67 : i32 to index
    %c0_37 = arith.constant 0 : index
    %c0_38 = arith.constant 0 : index
    %70 = vector.load %arg1[%69, %c0_37, %c0_38] : memref<4x8x512xf32, #tpu.memory_space<vmem>>, vector<1x8x512xf32>
    %71 = vector.shape_cast %70 : vector<1x8x512xf32> to vector<8x512xf32>
    %c0_39 = arith.constant 0 : index
    %c0_40 = arith.constant 0 : index
    %72 = vector.load %arg9[%c0_39, %c0_40] : memref<8x128xf32, #tpu.memory_space<vmem>>, vector<8x128xf32>
    %c0_41 = arith.constant 0 : index
    %c0_42 = arith.constant 0 : index
    %73 = vector.load %arg3[%c0_41, %c0_42] : memref<128x512xf32, #tpu.memory_space<vmem>>, vector<128x512xf32>
    %cst_43 = arith.constant dense<0.000000e+00> : vector<8x512xf32>
    %74 = tpu.matmul %72, %73, %cst_43 {dimension_numbers = #tpu.dot_dimension_numbers<[1], [0], [0], [1], [0, 0, 1, 1], [], []>} : vector<8x128xf32>, vector<128x512xf32>, vector<8x512xf32> -> vector<8x512xf32>
    %75 = arith.addf %71, %74 : vector<8x512xf32>
    %76 = arith.index_cast %68 : i32 to index
    %c0_44 = arith.constant 0 : index
    %c0_45 = arith.constant 0 : index
    %77 = vector.load %arg2[%76, %c0_44, %c0_45] : memref<4x8x512xf32, #tpu.memory_space<vmem>>, vector<1x8x512xf32>
    %78 = vector.shape_cast %77 : vector<1x8x512xf32> to vector<8x512xf32>
    %c0_46 = arith.constant 0 : index
    %c0_47 = arith.constant 0 : index
    %79 = vector.load %arg11[%c0_46, %c0_47] : memref<8x128xf32, #tpu.memory_space<vmem>>, vector<8x128xf32>
    %c0_48 = arith.constant 0 : index
    %c0_49 = arith.constant 0 : index
    %80 = vector.load %arg4[%c0_48, %c0_49] : memref<128x512xf32, #tpu.memory_space<vmem>>, vector<128x512xf32>
    %cst_50 = arith.constant dense<0.000000e+00> : vector<8x512xf32>
    %81 = tpu.matmul %79, %80, %cst_50 {dimension_numbers = #tpu.dot_dimension_numbers<[1], [0], [0], [1], [0, 0, 1, 1], [], []>} : vector<8x128xf32>, vector<128x512xf32>, vector<8x512xf32> -> vector<8x512xf32>
    %82 = arith.addf %78, %81 : vector<8x512xf32>
    %c0_51 = arith.constant 0 : index
    %c0_52 = arith.constant 0 : index
    %83 = vector.load %arg10[%c0_51, %c0_52] : memref<8x128xf32, #tpu.memory_space<vmem>>, vector<8x128xf32>
    %84 = vector.extract_strided_slice %75 {offsets = [0, 0], sizes = [8, 384], strides = [1, 1]} : vector<8x512xf32> to vector<8x384xf32>
    %85 = arith.negf %84 : vector<8x384xf32>
    %86 = math.exp %85 : vector<8x384xf32>
    %cst_53 = arith.constant 1.000000e+00 : f32
    %87 = vector.broadcast %cst_53 : f32 to vector<8x384xf32>
    %88 = arith.addf %87, %86 : vector<8x384xf32>
    %89 = arith.divf %87, %88 : vector<8x384xf32>
    %90 = vector.extract_strided_slice %75 {offsets = [0, 384], sizes = [8, 128], strides = [1, 1]} : vector<8x512xf32> to vector<8x128xf32>
    %91 = math.tanh %90 : vector<8x128xf32>
    %92 = vector.extract_strided_slice %89 {offsets = [0, 0], sizes = [8, 128], strides = [1, 1]} : vector<8x384xf32> to vector<8x128xf32>
    %93 = vector.extract_strided_slice %89 {offsets = [0, 128], sizes = [8, 128], strides = [1, 1]} : vector<8x384xf32> to vector<8x128xf32>
    %94 = vector.extract_strided_slice %89 {offsets = [0, 256], sizes = [8, 128], strides = [1, 1]} : vector<8x384xf32> to vector<8x128xf32>
    %95 = arith.mulf %93, %83 : vector<8x128xf32>
    %96 = arith.mulf %92, %91 : vector<8x128xf32>
    %97 = arith.addf %95, %96 : vector<8x128xf32>
    %98 = math.tanh %97 : vector<8x128xf32>
    %99 = arith.mulf %94, %98 : vector<8x128xf32>
    %c0_54 = arith.constant 0 : index
    %c0_55 = arith.constant 0 : index
    %100 = vector.load %arg12[%c0_54, %c0_55] : memref<8x128xf32, #tpu.memory_space<vmem>>, vector<8x128xf32>
    %101 = vector.extract_strided_slice %82 {offsets = [0, 0], sizes = [8, 384], strides = [1, 1]} : vector<8x512xf32> to vector<8x384xf32>
    %102 = arith.negf %101 : vector<8x384xf32>
    %103 = math.exp %102 : vector<8x384xf32>
    %cst_56 = arith.constant 1.000000e+00 : f32
    %104 = vector.broadcast %cst_56 : f32 to vector<8x384xf32>
    %105 = arith.addf %104, %103 : vector<8x384xf32>
    %106 = arith.divf %104, %105 : vector<8x384xf32>
    %107 = vector.extract_strided_slice %82 {offsets = [0, 384], sizes = [8, 128], strides = [1, 1]} : vector<8x512xf32> to vector<8x128xf32>
    %108 = math.tanh %107 : vector<8x128xf32>
    %109 = vector.extract_strided_slice %106 {offsets = [0, 0], sizes = [8, 128], strides = [1, 1]} : vector<8x384xf32> to vector<8x128xf32>
    %110 = vector.extract_strided_slice %106 {offsets = [0, 128], sizes = [8, 128], strides = [1, 1]} : vector<8x384xf32> to vector<8x128xf32>
    %111 = vector.extract_strided_slice %106 {offsets = [0, 256], sizes = [8, 128], strides = [1, 1]} : vector<8x384xf32> to vector<8x128xf32>
    %112 = arith.mulf %110, %100 : vector<8x128xf32>
    %113 = arith.mulf %109, %108 : vector<8x128xf32>
    %114 = arith.addf %112, %113 : vector<8x128xf32>
    %115 = math.tanh %114 : vector<8x128xf32>
    %116 = arith.mulf %111, %115 : vector<8x128xf32>
    %c0_57 = arith.constant 0 : index
    %c0_58 = arith.constant 0 : index
    %117 = vector.load %arg9[%c0_57, %c0_58] : memref<8x128xf32, #tpu.memory_space<vmem>>, vector<8x128xf32>
    tpu.vector_store %arg9[%c0_57, %c0_58], %99 {strides = array<i32>} : memref<8x128xf32, #tpu.memory_space<vmem>>, vector<8x128xf32>,
    %c0_59 = arith.constant 0 : index
    %c0_60 = arith.constant 0 : index
    %118 = vector.load %arg10[%c0_59, %c0_60] : memref<8x128xf32, #tpu.memory_space<vmem>>, vector<8x128xf32>
    tpu.vector_store %arg10[%c0_59, %c0_60], %97 {strides = array<i32>} : memref<8x128xf32, #tpu.memory_space<vmem>>, vector<8x128xf32>,
    %c0_61 = arith.constant 0 : index
    %c0_62 = arith.constant 0 : index
    %119 = vector.load %arg11[%c0_61, %c0_62] : memref<8x128xf32, #tpu.memory_space<vmem>>, vector<8x128xf32>
    tpu.vector_store %arg11[%c0_61, %c0_62], %116 {strides = array<i32>} : memref<8x128xf32, #tpu.memory_space<vmem>>, vector<8x128xf32>,
    %c0_63 = arith.constant 0 : index
    %c0_64 = arith.constant 0 : index
    %120 = vector.load %arg12[%c0_63, %c0_64] : memref<8x128xf32, #tpu.memory_space<vmem>>, vector<8x128xf32>
    tpu.vector_store %arg12[%c0_63, %c0_64], %114 {strides = array<i32>} : memref<8x128xf32, #tpu.memory_space<vmem>>, vector<8x128xf32>,
    %121 = arith.index_cast %67 : i32 to index
    %c0_65 = arith.constant 0 : index
    %c0_66 = arith.constant 0 : index
    %122 = vector.load %arg5[%121, %c0_65, %c0_66] : memref<4x8x128xf32, #tpu.memory_space<vmem>>, vector<1x8x128xf32>
    %123 = vector.shape_cast %122 : vector<1x8x128xf32> to vector<8x128xf32>
    %124 = vector.shape_cast %99 : vector<8x128xf32> to vector<1x8x128xf32>
    tpu.vector_store %arg5[%121, %c0_65, %c0_66], %124 {strides = array<i32>} : memref<4x8x128xf32, #tpu.memory_space<vmem>>, vector<1x8x128xf32>,
    %125 = arith.index_cast %68 : i32 to index
    %c0_67 = arith.constant 0 : index
    %c0_68 = arith.constant 0 : index
    %126 = vector.load %arg6[%125, %c0_67, %c0_68] : memref<4x8x128xf32, #tpu.memory_space<vmem>>, vector<1x8x128xf32>
    %127 = vector.shape_cast %126 : vector<1x8x128xf32> to vector<8x128xf32>
    %128 = vector.shape_cast %116 : vector<8x128xf32> to vector<1x8x128xf32>
    tpu.vector_store %arg6[%125, %c0_67, %c0_68], %128 {strides = array<i32>} : memref<4x8x128xf32, #tpu.memory_space<vmem>>, vector<1x8x128xf32>,
    %c2_i32 = arith.constant 2 : i32
    %c1_i32_69 = arith.constant 1 : i32
    %129 = arith.muli %c2_i32, %c1_i32_69 : i32
    %c0_i32_70 = arith.constant 0 : i32
    %130 = arith.addi %c0_i32_70, %129 : i32
    %c3_i32_71 = arith.constant 3 : i32
    %131 = arith.subi %c3_i32_71, %130 : i32
    %132 = arith.index_cast %130 : i32 to index
    %c0_72 = arith.constant 0 : index
    %c0_73 = arith.constant 0 : index
    %133 = vector.load %arg1[%132, %c0_72, %c0_73] : memref<4x8x512xf32, #tpu.memory_space<vmem>>, vector<1x8x512xf32>
    %134 = vector.shape_cast %133 : vector<1x8x512xf32> to vector<8x512xf32>
    %c0_74 = arith.constant 0 : index
    %c0_75 = arith.constant 0 : index
    %135 = vector.load %arg9[%c0_74, %c0_75] : memref<8x128xf32, #tpu.memory_space<vmem>>, vector<8x128xf32>
    %c0_76 = arith.constant 0 : index
    %c0_77 = arith.constant 0 : index
    %136 = vector.load %arg3[%c0_76, %c0_77] : memref<128x512xf32, #tpu.memory_space<vmem>>, vector<128x512xf32>
    %cst_78 = arith.constant dense<0.000000e+00> : vector<8x512xf32>
    %137 = tpu.matmul %135, %136, %cst_78 {dimension_numbers = #tpu.dot_dimension_numbers<[1], [0], [0], [1], [0, 0, 1, 1], [], []>} : vector<8x128xf32>, vector<128x512xf32>, vector<8x512xf32> -> vector<8x512xf32>
    %138 = arith.addf %134, %137 : vector<8x512xf32>
    %139 = arith.index_cast %131 : i32 to index
    %c0_79 = arith.constant 0 : index
    %c0_80 = arith.constant 0 : index
    %140 = vector.load %arg2[%139, %c0_79, %c0_80] : memref<4x8x512xf32, #tpu.memory_space<vmem>>, vector<1x8x512xf32>
    %141 = vector.shape_cast %140 : vector<1x8x512xf32> to vector<8x512xf32>
    %c0_81 = arith.constant 0 : index
    %c0_82 = arith.constant 0 : index
    %142 = vector.load %arg11[%c0_81, %c0_82] : memref<8x128xf32, #tpu.memory_space<vmem>>, vector<8x128xf32>
    %c0_83 = arith.constant 0 : index
    %c0_84 = arith.constant 0 : index
    %143 = vector.load %arg4[%c0_83, %c0_84] : memref<128x512xf32, #tpu.memory_space<vmem>>, vector<128x512xf32>
    %cst_85 = arith.constant dense<0.000000e+00> : vector<8x512xf32>
    %144 = tpu.matmul %142, %143, %cst_85 {dimension_numbers = #tpu.dot_dimension_numbers<[1], [0], [0], [1], [0, 0, 1, 1], [], []>} : vector<8x128xf32>, vector<128x512xf32>, vector<8x512xf32> -> vector<8x512xf32>
    %145 = arith.addf %141, %144 : vector<8x512xf32>
    %c0_86 = arith.constant 0 : index
    %c0_87 = arith.constant 0 : index
    %146 = vector.load %arg10[%c0_86, %c0_87] : memref<8x128xf32, #tpu.memory_space<vmem>>, vector<8x128xf32>
    %147 = vector.extract_strided_slice %138 {offsets = [0, 0], sizes = [8, 384], strides = [1, 1]} : vector<8x512xf32> to vector<8x384xf32>
    %148 = arith.negf %147 : vector<8x384xf32>
    %149 = math.exp %148 : vector<8x384xf32>
    %cst_88 = arith.constant 1.000000e+00 : f32
    %150 = vector.broadcast %cst_88 : f32 to vector<8x384xf32>
    %151 = arith.addf %150, %149 : vector<8x384xf32>
    %152 = arith.divf %150, %151 : vector<8x384xf32>
    %153 = vector.extract_strided_slice %138 {offsets = [0, 384], sizes = [8, 128], strides = [1, 1]} : vector<8x512xf32> to vector<8x128xf32>
    %154 = math.tanh %153 : vector<8x128xf32>
    %155 = vector.extract_strided_slice %152 {offsets = [0, 0], sizes = [8, 128], strides = [1, 1]} : vector<8x384xf32> to vector<8x128xf32>
    %156 = vector.extract_strided_slice %152 {offsets = [0, 128], sizes = [8, 128], strides = [1, 1]} : vector<8x384xf32> to vector<8x128xf32>
    %157 = vector.extract_strided_slice %152 {offsets = [0, 256], sizes = [8, 128], strides = [1, 1]} : vector<8x384xf32> to vector<8x128xf32>
    %158 = arith.mulf %156, %146 : vector<8x128xf32>
    %159 = arith.mulf %155, %154 : vector<8x128xf32>
    %160 = arith.addf %158, %159 : vector<8x128xf32>
    %161 = math.tanh %160 : vector<8x128xf32>
    %162 = arith.mulf %157, %161 : vector<8x128xf32>
    %c0_89 = arith.constant 0 : index
    %c0_90 = arith.constant 0 : index
    %163 = vector.load %arg12[%c0_89, %c0_90] : memref<8x128xf32, #tpu.memory_space<vmem>>, vector<8x128xf32>
    %164 = vector.extract_strided_slice %145 {offsets = [0, 0], sizes = [8, 384], strides = [1, 1]} : vector<8x512xf32> to vector<8x384xf32>
    %165 = arith.negf %164 : vector<8x384xf32>
    %166 = math.exp %165 : vector<8x384xf32>
    %cst_91 = arith.constant 1.000000e+00 : f32
    %167 = vector.broadcast %cst_91 : f32 to vector<8x384xf32>
    %168 = arith.addf %167, %166 : vector<8x384xf32>
    %169 = arith.divf %167, %168 : vector<8x384xf32>
    %170 = vector.extract_strided_slice %145 {offsets = [0, 384], sizes = [8, 128], strides = [1, 1]} : vector<8x512xf32> to vector<8x128xf32>
    %171 = math.tanh %170 : vector<8x128xf32>
    %172 = vector.extract_strided_slice %169 {offsets = [0, 0], sizes = [8, 128], strides = [1, 1]} : vector<8x384xf32> to vector<8x128xf32>
    %173 = vector.extract_strided_slice %169 {offsets = [0, 128], sizes = [8, 128], strides = [1, 1]} : vector<8x384xf32> to vector<8x128xf32>
    %174 = vector.extract_strided_slice %169 {offsets = [0, 256], sizes = [8, 128], strides = [1, 1]} : vector<8x384xf32> to vector<8x128xf32>
    %175 = arith.mulf %173, %163 : vector<8x128xf32>
    %176 = arith.mulf %172, %171 : vector<8x128xf32>
    %177 = arith.addf %175, %176 : vector<8x128xf32>
    %178 = math.tanh %177 : vector<8x128xf32>
    %179 = arith.mulf %174, %178 : vector<8x128xf32>
    %c0_92 = arith.constant 0 : index
    %c0_93 = arith.constant 0 : index
    %180 = vector.load %arg9[%c0_92, %c0_93] : memref<8x128xf32, #tpu.memory_space<vmem>>, vector<8x128xf32>
    tpu.vector_store %arg9[%c0_92, %c0_93], %162 {strides = array<i32>} : memref<8x128xf32, #tpu.memory_space<vmem>>, vector<8x128xf32>,
    %c0_94 = arith.constant 0 : index
    %c0_95 = arith.constant 0 : index
    %181 = vector.load %arg10[%c0_94, %c0_95] : memref<8x128xf32, #tpu.memory_space<vmem>>, vector<8x128xf32>
    tpu.vector_store %arg10[%c0_94, %c0_95], %160 {strides = array<i32>} : memref<8x128xf32, #tpu.memory_space<vmem>>, vector<8x128xf32>,
    %c0_96 = arith.constant 0 : index
    %c0_97 = arith.constant 0 : index
    %182 = vector.load %arg11[%c0_96, %c0_97] : memref<8x128xf32, #tpu.memory_space<vmem>>, vector<8x128xf32>
    tpu.vector_store %arg11[%c0_96, %c0_97], %179 {strides = array<i32>} : memref<8x128xf32, #tpu.memory_space<vmem>>, vector<8x128xf32>,
    %c0_98 = arith.constant 0 : index
    %c0_99 = arith.constant 0 : index
    %183 = vector.load %arg12[%c0_98, %c0_99] : memref<8x128xf32, #tpu.memory_space<vmem>>, vector<8x128xf32>
    tpu.vector_store %arg12[%c0_98, %c0_99], %177 {strides = array<i32>} : memref<8x128xf32, #tpu.memory_space<vmem>>, vector<8x128xf32>,
    %184 = arith.index_cast %130 : i32 to index
    %c0_100 = arith.constant 0 : index
    %c0_101 = arith.constant 0 : index
    %185 = vector.load %arg5[%184, %c0_100, %c0_101] : memref<4x8x128xf32, #tpu.memory_space<vmem>>, vector<1x8x128xf32>
    %186 = vector.shape_cast %185 : vector<1x8x128xf32> to vector<8x128xf32>
    %187 = vector.shape_cast %162 : vector<8x128xf32> to vector<1x8x128xf32>
    tpu.vector_store %arg5[%184, %c0_100, %c0_101], %187 {strides = array<i32>} : memref<4x8x128xf32, #tpu.memory_space<vmem>>, vector<1x8x128xf32>,
    %188 = arith.index_cast %131 : i32 to index
    %c0_102 = arith.constant 0 : index
    %c0_103 = arith.constant 0 : index
    %189 = vector.load %arg6[%188, %c0_102, %c0_103] : memref<4x8x128xf32, #tpu.memory_space<vmem>>, vector<1x8x128xf32>
    %190 = vector.shape_cast %189 : vector<1x8x128xf32> to vector<8x128xf32>
    %191 = vector.shape_cast %179 : vector<8x128xf32> to vector<1x8x128xf32>
    tpu.vector_store %arg6[%188, %c0_102, %c0_103], %191 {strides = array<i32>} : memref<4x8x128xf32, #tpu.memory_space<vmem>>, vector<1x8x128xf32>,
    %c3_i32_104 = arith.constant 3 : i32
    %c1_i32_105 = arith.constant 1 : i32
    %192 = arith.muli %c3_i32_104, %c1_i32_105 : i32
    %c0_i32_106 = arith.constant 0 : i32
    %193 = arith.addi %c0_i32_106, %192 : i32
    %c3_i32_107 = arith.constant 3 : i32
    %194 = arith.subi %c3_i32_107, %193 : i32
    %195 = arith.index_cast %193 : i32 to index
    %c0_108 = arith.constant 0 : index
    %c0_109 = arith.constant 0 : index
    %196 = vector.load %arg1[%195, %c0_108, %c0_109] : memref<4x8x512xf32, #tpu.memory_space<vmem>>, vector<1x8x512xf32>
    %197 = vector.shape_cast %196 : vector<1x8x512xf32> to vector<8x512xf32>
    %c0_110 = arith.constant 0 : index
    %c0_111 = arith.constant 0 : index
    %198 = vector.load %arg9[%c0_110, %c0_111] : memref<8x128xf32, #tpu.memory_space<vmem>>, vector<8x128xf32>
    %c0_112 = arith.constant 0 : index
    %c0_113 = arith.constant 0 : index
    %199 = vector.load %arg3[%c0_112, %c0_113] : memref<128x512xf32, #tpu.memory_space<vmem>>, vector<128x512xf32>
    %cst_114 = arith.constant dense<0.000000e+00> : vector<8x512xf32>
    %200 = tpu.matmul %198, %199, %cst_114 {dimension_numbers = #tpu.dot_dimension_numbers<[1], [0], [0], [1], [0, 0, 1, 1], [], []>} : vector<8x128xf32>, vector<128x512xf32>, vector<8x512xf32> -> vector<8x512xf32>
    %201 = arith.addf %197, %200 : vector<8x512xf32>
    %202 = arith.index_cast %194 : i32 to index
    %c0_115 = arith.constant 0 : index
    %c0_116 = arith.constant 0 : index
    %203 = vector.load %arg2[%202, %c0_115, %c0_116] : memref<4x8x512xf32, #tpu.memory_space<vmem>>, vector<1x8x512xf32>
    %204 = vector.shape_cast %203 : vector<1x8x512xf32> to vector<8x512xf32>
    %c0_117 = arith.constant 0 : index
    %c0_118 = arith.constant 0 : index
    %205 = vector.load %arg11[%c0_117, %c0_118] : memref<8x128xf32, #tpu.memory_space<vmem>>, vector<8x128xf32>
    %c0_119 = arith.constant 0 : index
    %c0_120 = arith.constant 0 : index
    %206 = vector.load %arg4[%c0_119, %c0_120] : memref<128x512xf32, #tpu.memory_space<vmem>>, vector<128x512xf32>
    %cst_121 = arith.constant dense<0.000000e+00> : vector<8x512xf32>
    %207 = tpu.matmul %205, %206, %cst_121 {dimension_numbers = #tpu.dot_dimension_numbers<[1], [0], [0], [1], [0, 0, 1, 1], [], []>} : vector<8x128xf32>, vector<128x512xf32>, vector<8x512xf32> -> vector<8x512xf32>
    %208 = arith.addf %204, %207 : vector<8x512xf32>
    %c0_122 = arith.constant 0 : index
    %c0_123 = arith.constant 0 : index
    %209 = vector.load %arg10[%c0_122, %c0_123] : memref<8x128xf32, #tpu.memory_space<vmem>>, vector<8x128xf32>
    %210 = vector.extract_strided_slice %201 {offsets = [0, 0], sizes = [8, 384], strides = [1, 1]} : vector<8x512xf32> to vector<8x384xf32>
    %211 = arith.negf %210 : vector<8x384xf32>
    %212 = math.exp %211 : vector<8x384xf32>
    %cst_124 = arith.constant 1.000000e+00 : f32
    %213 = vector.broadcast %cst_124 : f32 to vector<8x384xf32>
    %214 = arith.addf %213, %212 : vector<8x384xf32>
    %215 = arith.divf %213, %214 : vector<8x384xf32>
    %216 = vector.extract_strided_slice %201 {offsets = [0, 384], sizes = [8, 128], strides = [1, 1]} : vector<8x512xf32> to vector<8x128xf32>
    %217 = math.tanh %216 : vector<8x128xf32>
    %218 = vector.extract_strided_slice %215 {offsets = [0, 0], sizes = [8, 128], strides = [1, 1]} : vector<8x384xf32> to vector<8x128xf32>
    %219 = vector.extract_strided_slice %215 {offsets = [0, 128], sizes = [8, 128], strides = [1, 1]} : vector<8x384xf32> to vector<8x128xf32>
    %220 = vector.extract_strided_slice %215 {offsets = [0, 256], sizes = [8, 128], strides = [1, 1]} : vector<8x384xf32> to vector<8x128xf32>
    %221 = arith.mulf %219, %209 : vector<8x128xf32>
    %222 = arith.mulf %218, %217 : vector<8x128xf32>
    %223 = arith.addf %221, %222 : vector<8x128xf32>
    %224 = math.tanh %223 : vector<8x128xf32>
    %225 = arith.mulf %220, %224 : vector<8x128xf32>
    %c0_125 = arith.constant 0 : index
    %c0_126 = arith.constant 0 : index
    %226 = vector.load %arg12[%c0_125, %c0_126] : memref<8x128xf32, #tpu.memory_space<vmem>>, vector<8x128xf32>
    %227 = vector.extract_strided_slice %208 {offsets = [0, 0], sizes = [8, 384], strides = [1, 1]} : vector<8x512xf32> to vector<8x384xf32>
    %228 = arith.negf %227 : vector<8x384xf32>
    %229 = math.exp %228 : vector<8x384xf32>
    %cst_127 = arith.constant 1.000000e+00 : f32
    %230 = vector.broadcast %cst_127 : f32 to vector<8x384xf32>
    %231 = arith.addf %230, %229 : vector<8x384xf32>
    %232 = arith.divf %230, %231 : vector<8x384xf32>
    %233 = vector.extract_strided_slice %208 {offsets = [0, 384], sizes = [8, 128], strides = [1, 1]} : vector<8x512xf32> to vector<8x128xf32>
    %234 = math.tanh %233 : vector<8x128xf32>
    %235 = vector.extract_strided_slice %232 {offsets = [0, 0], sizes = [8, 128], strides = [1, 1]} : vector<8x384xf32> to vector<8x128xf32>
    %236 = vector.extract_strided_slice %232 {offsets = [0, 128], sizes = [8, 128], strides = [1, 1]} : vector<8x384xf32> to vector<8x128xf32>
    %237 = vector.extract_strided_slice %232 {offsets = [0, 256], sizes = [8, 128], strides = [1, 1]} : vector<8x384xf32> to vector<8x128xf32>
    %238 = arith.mulf %236, %226 : vector<8x128xf32>
    %239 = arith.mulf %235, %234 : vector<8x128xf32>
    %240 = arith.addf %238, %239 : vector<8x128xf32>
    %241 = math.tanh %240 : vector<8x128xf32>
    %242 = arith.mulf %237, %241 : vector<8x128xf32>
    %c0_128 = arith.constant 0 : index
    %c0_129 = arith.constant 0 : index
    %243 = vector.load %arg9[%c0_128, %c0_129] : memref<8x128xf32, #tpu.memory_space<vmem>>, vector<8x128xf32>
    tpu.vector_store %arg9[%c0_128, %c0_129], %225 {strides = array<i32>} : memref<8x128xf32, #tpu.memory_space<vmem>>, vector<8x128xf32>,
    %c0_130 = arith.constant 0 : index
    %c0_131 = arith.constant 0 : index
    %244 = vector.load %arg10[%c0_130, %c0_131] : memref<8x128xf32, #tpu.memory_space<vmem>>, vector<8x128xf32>
    tpu.vector_store %arg10[%c0_130, %c0_131], %223 {strides = array<i32>} : memref<8x128xf32, #tpu.memory_space<vmem>>, vector<8x128xf32>,
    %c0_132 = arith.constant 0 : index
    %c0_133 = arith.constant 0 : index
    %245 = vector.load %arg11[%c0_132, %c0_133] : memref<8x128xf32, #tpu.memory_space<vmem>>, vector<8x128xf32>
    tpu.vector_store %arg11[%c0_132, %c0_133], %242 {strides = array<i32>} : memref<8x128xf32, #tpu.memory_space<vmem>>, vector<8x128xf32>,
    %c0_134 = arith.constant 0 : index
    %c0_135 = arith.constant 0 : index
    %246 = vector.load %arg12[%c0_134, %c0_135] : memref<8x128xf32, #tpu.memory_space<vmem>>, vector<8x128xf32>
    tpu.vector_store %arg12[%c0_134, %c0_135], %240 {strides = array<i32>} : memref<8x128xf32, #tpu.memory_space<vmem>>, vector<8x128xf32>,
    %247 = arith.index_cast %193 : i32 to index
    %c0_136 = arith.constant 0 : index
    %c0_137 = arith.constant 0 : index
    %248 = vector.load %arg5[%247, %c0_136, %c0_137] : memref<4x8x128xf32, #tpu.memory_space<vmem>>, vector<1x8x128xf32>
    %249 = vector.shape_cast %248 : vector<1x8x128xf32> to vector<8x128xf32>
    %250 = vector.shape_cast %225 : vector<8x128xf32> to vector<1x8x128xf32>
    tpu.vector_store %arg5[%247, %c0_136, %c0_137], %250 {strides = array<i32>} : memref<4x8x128xf32, #tpu.memory_space<vmem>>, vector<1x8x128xf32>,
    %251 = arith.index_cast %194 : i32 to index
    %c0_138 = arith.constant 0 : index
    %c0_139 = arith.constant 0 : index
    %252 = vector.load %arg6[%251, %c0_138, %c0_139] : memref<4x8x128xf32, #tpu.memory_space<vmem>>, vector<1x8x128xf32>
    %253 = vector.shape_cast %252 : vector<1x8x128xf32> to vector<8x128xf32>
    %254 = vector.shape_cast %242 : vector<8x128xf32> to vector<1x8x128xf32>
    tpu.vector_store %arg6[%251, %c0_138, %c0_139], %254 {strides = array<i32>} : memref<4x8x128xf32, #tpu.memory_space<vmem>>, vector<1x8x128xf32>,
    %c4_i32 = arith.constant 4 : i32
    %c0_i32_140 = arith.constant 0 : i32
    %255 = arith.cmpi eq, %arg0, %c0_i32_140 : i32
    %256 = arith.extui %255 : i1 to i32
    %c0_i32_141 = arith.constant 0 : i32
    %257 = arith.cmpi ne, %256, %c0_i32_141 : i32
    scf.if %257 {
      %c0_142 = arith.constant 0 : index
      %c0_143 = arith.constant 0 : index
      %258 = vector.load %arg9[%c0_142, %c0_143] : memref<8x128xf32, #tpu.memory_space<vmem>>, vector<8x128xf32>
      %c0_144 = arith.constant 0 : index
      %c0_145 = arith.constant 0 : index
      %c0_146 = arith.constant 0 : index
      %259 = vector.load %arg7[%c0_144, %c0_145, %c0_146] : memref<2x8x128xf32, #tpu.memory_space<vmem>>, vector<1x8x128xf32>
      %260 = vector.shape_cast %259 : vector<1x8x128xf32> to vector<8x128xf32>
      %261 = vector.shape_cast %258 : vector<8x128xf32> to vector<1x8x128xf32>
      tpu.vector_store %arg7[%c0_144, %c0_145, %c0_146], %261 {strides = array<i32>} : memref<2x8x128xf32, #tpu.memory_space<vmem>>, vector<1x8x128xf32>,
      %c0_147 = arith.constant 0 : index
      %c0_148 = arith.constant 0 : index
      %262 = vector.load %arg11[%c0_147, %c0_148] : memref<8x128xf32, #tpu.memory_space<vmem>>, vector<8x128xf32>
      %c1 = arith.constant 1 : index
      %c0_149 = arith.constant 0 : index
      %c0_150 = arith.constant 0 : index
      %263 = vector.load %arg7[%c1, %c0_149, %c0_150] : memref<2x8x128xf32, #tpu.memory_space<vmem>>, vector<1x8x128xf32>
      %264 = vector.shape_cast %263 : vector<1x8x128xf32> to vector<8x128xf32>
      %265 = vector.shape_cast %262 : vector<8x128xf32> to vector<1x8x128xf32>
      tpu.vector_store %arg7[%c1, %c0_149, %c0_150], %265 {strides = array<i32>} : memref<2x8x128xf32, #tpu.memory_space<vmem>>, vector<1x8x128xf32>,
      %c0_151 = arith.constant 0 : index
      %c0_152 = arith.constant 0 : index
      %266 = vector.load %arg10[%c0_151, %c0_152] : memref<8x128xf32, #tpu.memory_space<vmem>>, vector<8x128xf32>
      %c0_153 = arith.constant 0 : index
      %c0_154 = arith.constant 0 : index
      %c0_155 = arith.constant 0 : index
      %267 = vector.load %arg8[%c0_153, %c0_154, %c0_155] : memref<2x8x128xf32, #tpu.memory_space<vmem>>, vector<1x8x128xf32>
      %268 = vector.shape_cast %267 : vector<1x8x128xf32> to vector<8x128xf32>
      %269 = vector.shape_cast %266 : vector<8x128xf32> to vector<1x8x128xf32>
      tpu.vector_store %arg8[%c0_153, %c0_154, %c0_155], %269 {strides = array<i32>} : memref<2x8x128xf32, #tpu.memory_space<vmem>>, vector<1x8x128xf32>,
      %c0_156 = arith.constant 0 : index
      %c0_157 = arith.constant 0 : index
      %270 = vector.load %arg12[%c0_156, %c0_157] : memref<8x128xf32, #tpu.memory_space<vmem>>, vector<8x128xf32>
      %c1_158 = arith.constant 1 : index
      %c0_159 = arith.constant 0 : index
      %c0_160 = arith.constant 0 : index
      %271 = vector.load %arg8[%c1_158, %c0_159, %c0_160] : memref<2x8x128xf32, #tpu.memory_space<vmem>>, vector<1x8x128xf32>
      %272 = vector.shape_cast %271 : vector<1x8x128xf32> to vector<8x128xf32>
      %273 = vector.shape_cast %270 : vector<8x128xf32> to vector<1x8x128xf32>
      tpu.vector_store %arg8[%c1_158, %c0_159, %c0_160], %273 {strides = array<i32>} : memref<2x8x128xf32, #tpu.memory_space<vmem>>, vector<1x8x128xf32>,
    } else {
    }
    return
  }
  func.func @transform_0(%arg0: i32) -> (i32, i32, i32) {
    %c0_i32 = arith.constant 0 : i32
    %c0_i32_0 = arith.constant 0 : i32
    %c0_i32_1 = arith.constant 0 : i32
    return %arg0, %c0_i32, %c0_i32_0 : i32, i32, i32
  }
  func.func @transform_1(%arg0: i32) -> (i32, i32, i32) {
    %c0_i32 = arith.constant 0 : i32
    %0 = arith.subi %c0_i32, %arg0 : i32
    %c0_i32_0 = arith.constant 0 : i32
    %c1_i32 = arith.constant 1 : i32
    %c0_i32_1 = arith.constant 0 : i32
    return %0, %c0_i32_0, %c1_i32 : i32, i32, i32
  }
  func.func @transform_2(%arg0: i32) -> (i32, i32) {
    %c0_i32 = arith.constant 0 : i32
    %c0_i32_0 = arith.constant 0 : i32
    %c0_i32_1 = arith.constant 0 : i32
    return %c0_i32, %c0_i32_0 : i32, i32
  }
  func.func @transform_3(%arg0: i32) -> (i32, i32) {
    %c0_i32 = arith.constant 0 : i32
    %c0_i32_0 = arith.constant 0 : i32
    %c0_i32_1 = arith.constant 0 : i32
    return %c0_i32, %c0_i32_0 : i32, i32
  }
  func.func @transform_4(%arg0: i32) -> (i32, i32, i32) {
    %c0_i32 = arith.constant 0 : i32
    %c0_i32_0 = arith.constant 0 : i32
    %c0_i32_1 = arith.constant 0 : i32
    return %arg0, %c0_i32, %c0_i32_0 : i32, i32, i32
  }
  func.func @transform_5(%arg0: i32) -> (i32, i32, i32) {
    %c0_i32 = arith.constant 0 : i32
    %0 = arith.subi %c0_i32, %arg0 : i32
    %c0_i32_0 = arith.constant 0 : i32
    %c0_i32_1 = arith.constant 0 : i32
    %c0_i32_2 = arith.constant 0 : i32
    return %0, %c0_i32_0, %c0_i32_1 : i32, i32, i32
  }
  func.func @transform_6(%arg0: i32) -> (i32, i32, i32) {
    %c0_i32 = arith.constant 0 : i32
    %c0_i32_0 = arith.constant 0 : i32
    %c0_i32_1 = arith.constant 0 : i32
    %c0_i32_2 = arith.constant 0 : i32
    return %c0_i32, %c0_i32_0, %c0_i32_1 : i32, i32, i32
  }
  func.func @transform_7(%arg0: i32) -> (i32, i32, i32) {
    %c0_i32 = arith.constant 0 : i32
    %c0_i32_0 = arith.constant 0 : i32
    %c0_i32_1 = arith.constant 0 : i32
    %c0_i32_2 = arith.constant 0 : i32
    return %c0_i32, %c0_i32_0, %c0_i32_1 : i32, i32, i32
  }
}

</mosaic_0001>

<llo_original>
// kernel: custom-call
$region0: #{custom-call}
  %s0 = inlined_call_operand.vmem [shape: f32[1024], index: 0, kind: output, shape index: {}]

// kernel: pyramid_lstm_layer.1
$region0: #{pyramid_lstm_layer.1}
  #allocation0 [shape = 'u32[]', space=smem, size = 0x4, offset = 0x4, fixed_abs, tag = 'smem constant byte address 0x4 - core index']
  #allocation1 [shape = 'u32[72,128]{1,0:T(1,128)}', space=vmem, size = 0x9000, scoped, tag = 'internal scratch']
  #allocation2 [shape = 'f32[8,128]{1,0:T(8,128)}', space=vmem, size = 0x1000, scoped, tag = 'scratch operand']
  #allocation3 [shape = 'f32[8,128]{1,0:T(8,128)}', space=vmem, size = 0x1000, scoped, tag = 'scratch operand']
  #allocation4 [shape = 'f32[8,128]{1,0:T(8,128)}', space=vmem, size = 0x1000, scoped, tag = 'scratch operand']
  #allocation5 [shape = 'f32[8,128]{1,0:T(8,128)}', space=vmem, size = 0x1000, scoped, tag = 'scratch operand']
  %s0 = inlined_call_operand.vmem [shape: f32[4,8,1024], index: 0, kind: input, shape index: {}, may-alias: {0,1}]
  %s1 = inlined_call_operand.vmem [shape: f32[4,8,1024], index: 1, kind: input, shape index: {}, may-alias: {0,1}]
  %s2 = inlined_call_operand.vmem [shape: f32[128,512], index: 2, kind: input, shape index: {}]
  %s3 = inlined_call_operand.vmem [shape: f32[128,512], index: 3, kind: input, shape index: {}]
  %s4 = inlined_call_operand.vmem [shape: f32[4,8,128], index: 4, kind: output, shape index: {0}]
  %s5 = inlined_call_operand.vmem [shape: f32[4,8,128], index: 5, kind: output, shape index: {1}]
  %s6 = inlined_call_operand.vmem [shape: f32[2,8,128], index: 6, kind: output, shape index: {2}]
  %s7 = inlined_call_operand.vmem [shape: f32[2,8,128], index: 7, kind: output, shape index: {3}]
  %8 = xla_tuple %s4, %s5, %s6, %s7
  %s9 = sld [smem:[#allocation0]]
  $region104: #{pyramid_lstm_layer.1} parent=0
    _
  %s11 = ssub.s32 1, %s9
  %s12 = scalar_select 0, %s11, %s9
  $region1: #{pyramid_lstm_layer.1} parent=0
    #allocation6 [shape = 'u8[65536]{0}', space=vmem, size = 0x10000, scoped, tag = 'input window, operand 0, single buffered']
    #allocation7 [shape = 'u8[65536]{0}', space=vmem, size = 0x10000, scoped, tag = 'input window, operand 1, single buffered']
    // Predicated region
    $region2: #{pyramid_lstm_layer.1} parent=1 // pred_check
      _
    $region3: #{pyramid_lstm_layer.1} parent=1 // pred_check_branch
      %14 = sbr.rel (0) target = $region5
    $region4: #{pyramid_lstm_layer.1} parent=1 // pred_region
      // Predicated region
      $region6: #{pyramid_lstm_layer.1} parent=4 // pred_check
        _
      $region7: #{pyramid_lstm_layer.1} parent=4 // pred_check_branch
        %16 = sbr.rel (0) target = $region9
      $region8: #{pyramid_lstm_layer.1} parent=4 // pred_region
        // Predicated region
        $region10: #{pyramid_lstm_layer.1} parent=8 // pred_check
          _
        $region11: #{pyramid_lstm_layer.1} parent=8 // pred_check_branch
          %18 = sbr.rel (0) target = $region13
        $region12: #{pyramid_lstm_layer.1} parent=8 // pred_region
          loop: start=0, step=1, limit=1
          $region14: #{pyramid_lstm_layer.1} parent=12 // loop_pre_header
            _
          $region15: #{pyramid_lstm_layer.1} parent=12 // loop_header
            %s20 = sphi 0, %s24
            %p21 = scmp.ge.s32.totalorder %s20, 1
            %s25 = sphi %s0, %s0
            %s26 = sphi [#allocation6], [#allocation6]
          $region16: #{pyramid_lstm_layer.1} parent=12 // loop_header_branch
            %23 = sbr.rel (%p21) target = $region20
          $region17: #{pyramid_lstm_layer.1} parent=12 // loop_body
            %v27 = vld [vmem:[%s25] sm:$0xff]
            %28 = vst [vmem:[%s26] sm:$0xff] %v27
            %v29 = vld [vmem:[%s25 + $0x8] sm:$0xff]
            %30 = vst [vmem:[%s26 + $0x8] sm:$0xff] %v29
            %v31 = vld [vmem:[%s25 + $0x10] sm:$0xff]
            %32 = vst [vmem:[%s26 + $0x10] sm:$0xff] %v31
            %v33 = vld [vmem:[%s25 + $0x18] sm:$0xff]
            %34 = vst [vmem:[%s26 + $0x18] sm:$0xff] %v33
            %v35 = vld [vmem:[%s25 + $0x40] sm:$0xff]
            %36 = vst [vmem:[%s26 + $0x20] sm:$0xff] %v35
            %v37 = vld [vmem:[%s25 + $0x48] sm:$0xff]
            %38 = vst [vmem:[%s26 + $0x28] sm:$0xff] %v37
            %v39 = vld [vmem:[%s25 + $0x50] sm:$0xff]
            %40 = vst [vmem:[%s26 + $0x30] sm:$0xff] %v39
            %v41 = vld [vmem:[%s25 + $0x58] sm:$0xff]
            %42 = vst [vmem:[%s26 + $0x38] sm:$0xff] %v41
            %v43 = vld [vmem:[%s25 + $0x80] sm:$0xff]
            %44 = vst [vmem:[%s26 + $0x40] sm:$0xff] %v43
            %v45 = vld [vmem:[%s25 + $0x88] sm:$0xff]
            %46 = vst [vmem:[%s26 + $0x48] sm:$0xff] %v45
            %v47 = vld [vmem:[%s25 + $0x90] sm:$0xff]
            %48 = vst [vmem:[%s26 + $0x50] sm:$0xff] %v47
            %v49 = vld [vmem:[%s25 + $0x98] sm:$0xff]
            %50 = vst [vmem:[%s26 + $0x58] sm:$0xff] %v49
            %v51 = vld [vmem:[%s25 + $0xc0] sm:$0xff]
            %52 = vst [vmem:[%s26 + $0x60] sm:$0xff] %v51
            %v53 = vld [vmem:[%s25 + $0xc8] sm:$0xff]
            %54 = vst [vmem:[%s26 + $0x68] sm:$0xff] %v53
            %v55 = vld [vmem:[%s25 + $0xd0] sm:$0xff]
            %56 = vst [vmem:[%s26 + $0x70] sm:$0xff] %v55
            %v57 = vld [vmem:[%s25 + $0xd8] sm:$0xff]
            %58 = vst [vmem:[%s26 + $0x78] sm:$0xff] %v57
          $region18: #{pyramid_lstm_layer.1} parent=12 // loop_footer
            %s24 = sadd.s32 1, %s20
          $region19: #{pyramid_lstm_layer.1} parent=12 // loop_footer_branch
            %19 = sbr.rel target = $region15
          $region20: #{pyramid_lstm_layer.1} parent=12 // loop_exit
            _
        $region13: #{pyramid_lstm_layer.1} parent=8 // pred_fallthru
          _
        // Predicated region
        $region21: #{pyramid_lstm_layer.1} parent=8 // pred_check
          _
        $region22: #{pyramid_lstm_layer.1} parent=8 // pred_check_branch
          %60 = sbr.rel target = $region24
        $region23: #{pyramid_lstm_layer.1} parent=8 // pred_region
          _
        $region24: #{pyramid_lstm_layer.1} parent=8 // pred_fallthru
          _
      $region9: #{pyramid_lstm_layer.1} parent=4 // pred_fallthru
        _
      %61 = vnop
    $region5: #{pyramid_lstm_layer.1} parent=1 // pred_fallthru
      _
    // Predicated region
    $region25: #{pyramid_lstm_layer.1} parent=1 // pred_check
      _
    $region26: #{pyramid_lstm_layer.1} parent=1 // pred_check_branch
      %63 = sbr.rel (0) target = $region28
    $region27: #{pyramid_lstm_layer.1} parent=1 // pred_region
      %s64 = ssub.s32 0, 0
      %s65 = smul.u32 4, %s64
      %s66 = smul.addr %s65, 8
      %s67 = sadd.s32 4, %s66
      %s68 = smul.addr %s67, 8
      %s69 = scalar_lea.vmem %s1, %s68
      // Predicated region
      $region29: #{pyramid_lstm_layer.1} parent=27 // pred_check
        _
      $region30: #{pyramid_lstm_layer.1} parent=27 // pred_check_branch
        %71 = sbr.rel (0) target = $region32
      $region31: #{pyramid_lstm_layer.1} parent=27 // pred_region
        // Predicated region
        $region33: #{pyramid_lstm_layer.1} parent=31 // pred_check
          _
        $region34: #{pyramid_lstm_layer.1} parent=31 // pred_check_branch
          %73 = sbr.rel (0) target = $region36
        $region35: #{pyramid_lstm_layer.1} parent=31 // pred_region
          loop: start=0, step=1, limit=1
          $region37: #{pyramid_lstm_layer.1} parent=35 // loop_pre_header
            _
          $region38: #{pyramid_lstm_layer.1} parent=35 // loop_header
            %s75 = sphi 0, %s79
            %p76 = scmp.ge.s32.totalorder %s75, 1
            %s80 = sphi %s69, %s69
            %s81 = sphi [#allocation7], [#allocation7]
          $region39: #{pyramid_lstm_layer.1} parent=35 // loop_header_branch
            %78 = sbr.rel (%p76) target = $region43
          $region40: #{pyramid_lstm_layer.1} parent=35 // loop_body
            %v82 = vld [vmem:[%s80] sm:$0xff]
            %83 = vst [vmem:[%s81] sm:$0xff] %v82
            %v84 = vld [vmem:[%s80 + $0x8] sm:$0xff]
            %85 = vst [vmem:[%s81 + $0x8] sm:$0xff] %v84
            %v86 = vld [vmem:[%s80 + $0x10] sm:$0xff]
            %87 = vst [vmem:[%s81 + $0x10] sm:$0xff] %v86
            %v88 = vld [vmem:[%s80 + $0x18] sm:$0xff]
            %89 = vst [vmem:[%s81 + $0x18] sm:$0xff] %v88
            %v90 = vld [vmem:[%s80 + $0x40] sm:$0xff]
            %91 = vst [vmem:[%s81 + $0x20] sm:$0xff] %v90
            %v92 = vld [vmem:[%s80 + $0x48] sm:$0xff]
            %93 = vst [vmem:[%s81 + $0x28] sm:$0xff] %v92
            %v94 = vld [vmem:[%s80 + $0x50] sm:$0xff]
            %95 = vst [vmem:[%s81 + $0x30] sm:$0xff] %v94
            %v96 = vld [vmem:[%s80 + $0x58] sm:$0xff]
            %97 = vst [vmem:[%s81 + $0x38] sm:$0xff] %v96
            %v98 = vld [vmem:[%s80 + $0x80] sm:$0xff]
            %99 = vst [vmem:[%s81 + $0x40] sm:$0xff] %v98
            %v100 = vld [vmem:[%s80 + $0x88] sm:$0xff]
            %101 = vst [vmem:[%s81 + $0x48] sm:$0xff] %v100
            %v102 = vld [vmem:[%s80 + $0x90] sm:$0xff]
            %103 = vst [vmem:[%s81 + $0x50] sm:$0xff] %v102
            %v104 = vld [vmem:[%s80 + $0x98] sm:$0xff]
            %105 = vst [vmem:[%s81 + $0x58] sm:$0xff] %v104
            %v106 = vld [vmem:[%s80 + $0xc0] sm:$0xff]
            %107 = vst [vmem:[%s81 + $0x60] sm:$0xff] %v106
            %v108 = vld [vmem:[%s80 + $0xc8] sm:$0xff]
            %109 = vst [vmem:[%s81 + $0x68] sm:$0xff] %v108
            %v110 = vld [vmem:[%s80 + $0xd0] sm:$0xff]
            %111 = vst [vmem:[%s81 + $0x70] sm:$0xff] %v110
            %v112 = vld [vmem:[%s80 + $0xd8] sm:$0xff]
            %113 = vst [vmem:[%s81 + $0x78] sm:$0xff] %v112
          $region41: #{pyramid_lstm_layer.1} parent=35 // loop_footer
            %s79 = sadd.s32 1, %s75
          $region42: #{pyramid_lstm_layer.1} parent=35 // loop_footer_branch
            %74 = sbr.rel target = $region38
          $region43: #{pyramid_lstm_layer.1} parent=35 // loop_exit
            _
        $region36: #{pyramid_lstm_layer.1} parent=31 // pred_fallthru
          _
        // Predicated region
        $region44: #{pyramid_lstm_layer.1} parent=31 // pred_check
          _
        $region45: #{pyramid_lstm_layer.1} parent=31 // pred_check_branch
          %115 = sbr.rel target = $region47
        $region46: #{pyramid_lstm_layer.1} parent=31 // pred_region
          _
        $region47: #{pyramid_lstm_layer.1} parent=31 // pred_fallthru
          _
      $region32: #{pyramid_lstm_layer.1} parent=27 // pred_fallthru
        _
      %116 = vnop
    $region28: #{pyramid_lstm_layer.1} parent=1 // pred_fallthru
      _
    // Predicated region
    $region48: #{pyramid_lstm_layer.1} parent=1 // pred_check
      _
    $region49: #{pyramid_lstm_layer.1} parent=1 // pred_check_branch
      %118 = sbr.rel (0) target = $region51
    $region50: #{pyramid_lstm_layer.1} parent=1 // pred_region
      _
    $region51: #{pyramid_lstm_layer.1} parent=1 // pred_fallthru
      _
    // Predicated region
    $region52: #{pyramid_lstm_layer.1} parent=1 // pred_check
      _
    $region53: #{pyramid_lstm_layer.1} parent=1 // pred_check_branch
      %120 = sbr.rel (0) target = $region55
    $region54: #{pyramid_lstm_layer.1} parent=1 // pred_region
      _
    $region55: #{pyramid_lstm_layer.1} parent=1 // pred_fallthru
      _
    // Predicated region
    $region56: #{pyramid_lstm_layer.1} parent=1 // pred_check
      _
    $region57: #{pyramid_lstm_layer.1} parent=1 // pred_check_branch
      %122 = sbr.rel (0) target = $region59
    $region58: #{pyramid_lstm_layer.1} parent=1 // pred_region
      _
    $region59: #{pyramid_lstm_layer.1} parent=1 // pred_fallthru
      _
    // Predicated region
    $region60: #{pyramid_lstm_layer.1} parent=1 // pred_check
      _
    $region61: #{pyramid_lstm_layer.1} parent=1 // pred_check_branch
      %124 = sbr.rel (0) target = $region63
    $region62: #{pyramid_lstm_layer.1} parent=1 // pred_region
      _
    $region63: #{pyramid_lstm_layer.1} parent=1 // pred_fallthru
      _
    %s125 = ssub.s32 0, 0
    %s126 = smul.u32 4, %s125
    %p127 = scmp.lt.s32.totalorder %s126, 3
    %s128 = scalar_select %p127, %s126, 3
    %s129 = smul.addr %s128, 8
    %s130 = scalar_lea.vmem %s5, %s129
    %s131 = ssub.s32 0, 0
    %s132 = smul.u32 4, %s131
    %s133 = ssub.s32 0, 0
    %s134 = smul.u32 4, %s133
    %p135 = scmp.lt.s32.totalorder %s134, 3
    %s136 = scalar_select %p135, %s134, 3
    %s137 = smul.addr %s136, 8
    %s138 = scalar_lea.vmem %s5, %s137
    %s139 = ssub.s32 0, 0
    %s140 = smul.u32 4, %s139
    %p141 = scmp.eq.s32.totalorder 0, 0
    // Predicated region
    $region64: #{pyramid_lstm_layer.1} parent=1 // pred_check
      %p142 = pneg %p141
    $region65: #{pyramid_lstm_layer.1} parent=1 // pred_check_branch
      %144 = sbr.rel (%p142) target = $region67
    $region66: #{pyramid_lstm_layer.1} parent=1 // pred_region
      %145 = vst [vmem:[#allocation2] sm:$0xff] 0.0
      %146 = vst [vmem:[#allocation3] sm:$0xff] 0.0
      %147 = vst [vmem:[#allocation4] sm:$0xff] 0.0
      %148 = vst [vmem:[#allocation5] sm:$0xff] 0.0
    $region67: #{pyramid_lstm_layer.1} parent=1 // pred_fallthru
      _
    %v149 = vld [vmem:[#allocation6] sm:$0xff]
    %v150 = vld [vmem:[#allocation6 + $0x8] sm:$0xff]
    %v151 = vld [vmem:[#allocation6 + $0x10] sm:$0xff]
    %v152 = vld [vmem:[#allocation6 + $0x18] sm:$0xff]
    %v153 = vld [vmem:[#allocation2] sm:$0xff]
    %v154 = vld [vmem:[%s2] sm:$0xff]
    %v155 = vld [vmem:[%s2 + $0x8] sm:$0xff]
    %v156 = vld [vmem:[%s2 + $0x10] sm:$0xff]
    %v157 = vld [vmem:[%s2 + $0x18] sm:$0xff]
    %v158 = vld [vmem:[%s2 + $0x20] sm:$0xff]
    %v159 = vld [vmem:[%s2 + $0x28] sm:$0xff]
    %v160 = vld [vmem:[%s2 + $0x30] sm:$0xff]
    %v161 = vld [vmem:[%s2 + $0x38] sm:$0xff]
    %v162 = vld [vmem:[%s2 + $0x40] sm:$0xff]
    %v163 = vld [vmem:[%s2 + $0x48] sm:$0xff]
    %v164 = vld [vmem:[%s2 + $0x50] sm:$0xff]
    %v165 = vld [vmem:[%s2 + $0x58] sm:$0xff]
    %v166 = vld [vmem:[%s2 + $0x60] sm:$0xff]
    %v167 = vld [vmem:[%s2 + $0x68] sm:$0xff]
    %v168 = vld [vmem:[%s2 + $0x70] sm:$0xff]
    %v169 = vld [vmem:[%s2 + $0x78] sm:$0xff]
    %v170 = vld [vmem:[%s2 + $0x80] sm:$0xff]
    %v171 = vld [vmem:[%s2 + $0x88] sm:$0xff]
    %v172 = vld [vmem:[%s2 + $0x90] sm:$0xff]
    %v173 = vld [vmem:[%s2 + $0x98] sm:$0xff]
    %v174 = vld [vmem:[%s2 + $0xa0] sm:$0xff]
    %v175 = vld [vmem:[%s2 + $0xa8] sm:$0xff]
    %v176 = vld [vmem:[%s2 + $0xb0] sm:$0xff]
    %v177 = vld [vmem:[%s2 + $0xb8] sm:$0xff]
    %v178 = vld [vmem:[%s2 + $0xc0] sm:$0xff]
    %v179 = vld [vmem:[%s2 + $0xc8] sm:$0xff]
    %v180 = vld [vmem:[%s2 + $0xd0] sm:$0xff]
    %v181 = vld [vmem:[%s2 + $0xd8] sm:$0xff]
    %v182 = vld [vmem:[%s2 + $0xe0] sm:$0xff]
    %v183 = vld [vmem:[%s2 + $0xe8] sm:$0xff]
    %v184 = vld [vmem:[%s2 + $0xf0] sm:$0xff]
    %v185 = vld [vmem:[%s2 + $0xf8] sm:$0xff]
    %v186 = vld [vmem:[%s2 + $0x100] sm:$0xff]
    %v187 = vld [vmem:[%s2 + $0x108] sm:$0xff]
    %v188 = vld [vmem:[%s2 + $0x110] sm:$0xff]
    %v189 = vld [vmem:[%s2 + $0x118] sm:$0xff]
    %v190 = vld [vmem:[%s2 + $0x120] sm:$0xff]
    %v191 = vld [vmem:[%s2 + $0x128] sm:$0xff]
    %v192 = vld [vmem:[%s2 + $0x130] sm:$0xff]
    %v193 = vld [vmem:[%s2 + $0x138] sm:$0xff]
    %v194 = vld [vmem:[%s2 + $0x140] sm:$0xff]
    %v195 = vld [vmem:[%s2 + $0x148] sm:$0xff]
    %v196 = vld [vmem:[%s2 + $0x150] sm:$0xff]
    %v197 = vld [vmem:[%s2 + $0x158] sm:$0xff]
    %v198 = vld [vmem:[%s2 + $0x160] sm:$0xff]
    %v199 = vld [vmem:[%s2 + $0x168] sm:$0xff]
    %v200 = vld [vmem:[%s2 + $0x170] sm:$0xff]
    %v201 = vld [vmem:[%s2 + $0x178] sm:$0xff]
    %v202 = vld [vmem:[%s2 + $0x180] sm:$0xff]
    %v203 = vld [vmem:[%s2 + $0x188] sm:$0xff]
    %v204 = vld [vmem:[%s2 + $0x190] sm:$0xff]
    %v205 = vld [vmem:[%s2 + $0x198] sm:$0xff]
    %v206 = vld [vmem:[%s2 + $0x1a0] sm:$0xff]
    %v207 = vld [vmem:[%s2 + $0x1a8] sm:$0xff]
    %v208 = vld [vmem:[%s2 + $0x1b0] sm:$0xff]
    %v209 = vld [vmem:[%s2 + $0x1b8] sm:$0xff]
    %v210 = vld [vmem:[%s2 + $0x1c0] sm:$0xff]
    %v211 = vld [vmem:[%s2 + $0x1c8] sm:$0xff]
    %v212 = vld [vmem:[%s2 + $0x1d0] sm:$0xff]
    %v213 = vld [vmem:[%s2 + $0x1d8] sm:$0xff]
    %v214 = vld [vmem:[%s2 + $0x1e0] sm:$0xff]
    %v215 = vld [vmem:[%s2 + $0x1e8] sm:$0xff]
    %v216 = vld [vmem:[%s2 + $0x1f0] sm:$0xff]
    %v217 = vld [vmem:[%s2 + $0x1f8] sm:$0xff]
    %218 = vmatpush.msra.mxu0 %v214
    %219 = vmatpush.msra.mxu0 %v210
    %220 = vmatpush.msra.mxu0 %v206
    %221 = vmatpush.msra.mxu0 %v202
    %222 = vmatpush.msra.mxu0 %v198
    %223 = vmatpush.msra.mxu0 %v194
    %224 = vmatpush.msra.mxu0 %v190
    %225 = vmatpush.msra.mxu0 %v186
    %226 = vmatpush.msra.mxu0 %v182
    %227 = vmatpush.msra.mxu0 %v178
    %228 = vmatpush.msra.mxu0 %v174
    %229 = vmatpush.msra.mxu0 %v170
    %230 = vmatpush.msra.mxu0 %v166
    %231 = vmatpush.msra.mxu0 %v162
    %232 = vmatpush.msra.mxu0 %v158
    %233 = vmatpush.msra.mxu0 %v154
    %234 = vmatmul.f32.gmra.mxu0 %v153
    %v235 = vpop.f32.mrf.mxu0
    %v236 = vadd.f32 0.0, %v235
    %237 = vdwg.mxu0
    %238 = vmatpush.msra.mxu0 %v215
    %239 = vmatpush.msra.mxu0 %v211
    %240 = vmatpush.msra.mxu0 %v207
    %241 = vmatpush.msra.mxu0 %v203
    %242 = vmatpush.msra.mxu0 %v199
    %243 = vmatpush.msra.mxu0 %v195
    %244 = vmatpush.msra.mxu0 %v191
    %245 = vmatpush.msra.mxu0 %v187
    %246 = vmatpush.msra.mxu0 %v183
    %247 = vmatpush.msra.mxu0 %v179
    %248 = vmatpush.msra.mxu0 %v175
    %249 = vmatpush.msra.mxu0 %v171
    %250 = vmatpush.msra.mxu0 %v167
    %251 = vmatpush.msra.mxu0 %v163
    %252 = vmatpush.msra.mxu0 %v159
    %253 = vmatpush.msra.mxu0 %v155
    %254 = vmatmul.f32.gmra.mxu0 %v153
    %v255 = vpop.f32.mrf.mxu0
    %v256 = vadd.f32 0.0, %v255
    %257 = vdwg.mxu0
    %258 = vmatpush.msra.mxu0 %v216
    %259 = vmatpush.msra.mxu0 %v212
    %260 = vmatpush.msra.mxu0 %v208
    %261 = vmatpush.msra.mxu0 %v204
    %262 = vmatpush.msra.mxu0 %v200
    %263 = vmatpush.msra.mxu0 %v196
    %264 = vmatpush.msra.mxu0 %v192
    %265 = vmatpush.msra.mxu0 %v188
    %266 = vmatpush.msra.mxu0 %v184
    %267 = vmatpush.msra.mxu0 %v180
    %268 = vmatpush.msra.mxu0 %v176
    %269 = vmatpush.msra.mxu0 %v172
    %270 = vmatpush.msra.mxu0 %v168
    %271 = vmatpush.msra.mxu0 %v164
    %272 = vmatpush.msra.mxu0 %v160
    %273 = vmatpush.msra.mxu0 %v156
    %274 = vmatmul.f32.gmra.mxu0 %v153
    %v275 = vpop.f32.mrf.mxu0
    %v276 = vadd.f32 0.0, %v275
    %277 = vdwg.mxu0
    %278 = vmatpush.msra.mxu0 %v217
    %279 = vmatpush.msra.mxu0 %v213
    %280 = vmatpush.msra.mxu0 %v209
    %281 = vmatpush.msra.mxu0 %v205
    %282 = vmatpush.msra.mxu0 %v201
    %283 = vmatpush.msra.mxu0 %v197
    %284 = vmatpush.msra.mxu0 %v193
    %285 = vmatpush.msra.mxu0 %v189
    %286 = vmatpush.msra.mxu0 %v185
    %287 = vmatpush.msra.mxu0 %v181
    %288 = vmatpush.msra.mxu0 %v177
    %289 = vmatpush.msra.mxu0 %v173
    %290 = vmatpush.msra.mxu0 %v169
    %291 = vmatpush.msra.mxu0 %v165
    %292 = vmatpush.msra.mxu0 %v161
    %293 = vmatpush.msra.mxu0 %v157
    %294 = vmatmul.f32.gmra.mxu0 %v153
    %v295 = vpop.f32.mrf.mxu0
    %v296 = vadd.f32 0.0, %v295
    %297 = vdwg.mxu0
    %v298 = vadd.f32 %v149, %v236
    %v299 = vadd.f32 %v150, %v256
    %v300 = vadd.f32 %v151, %v276
    %v301 = vadd.f32 %v152, %v296
    %s302 = scalar_lea.vmem [#allocation7], 96
    %v303 = vld [vmem:[%s302] sm:$0xff]
    %v304 = vld [vmem:[%s302 + $0x8] sm:$0xff]
    %v305 = vld [vmem:[%s302 + $0x10] sm:$0xff]
    %v306 = vld [vmem:[%s302 + $0x18] sm:$0xff]
    %v307 = vld [vmem:[#allocation4] sm:$0xff]
    %v308 = vld [vmem:[%s3] sm:$0xff]
    %v309 = vld [vmem:[%s3 + $0x8] sm:$0xff]
    %v310 = vld [vmem:[%s3 + $0x10] sm:$0xff]
    %v311 = vld [vmem:[%s3 + $0x18] sm:$0xff]
    %v312 = vld [vmem:[%s3 + $0x20] sm:$0xff]
    %v313 = vld [vmem:[%s3 + $0x28] sm:$0xff]
    %v314 = vld [vmem:[%s3 + $0x30] sm:$0xff]
    %v315 = vld [vmem:[%s3 + $0x38] sm:$0xff]
    %v316 = vld [vmem:[%s3 + $0x40] sm:$0xff]
    %v317 = vld [vmem:[%s3 + $0x48] sm:$0xff]
    %v318 = vld [vmem:[%s3 + $0x50] sm:$0xff]
    %v319 = vld [vmem:[%s3 + $0x58] sm:$0xff]
    %v320 = vld [vmem:[%s3 + $0x60] sm:$0xff]
    %v321 = vld [vmem:[%s3 + $0x68] sm:$0xff]
    %v322 = vld [vmem:[%s3 + $0x70] sm:$0xff]
    %v323 = vld [vmem:[%s3 + $0x78] sm:$0xff]
    %v324 = vld [vmem:[%s3 + $0x80] sm:$0xff]
    %v325 = vld [vmem:[%s3 + $0x88] sm:$0xff]
    %v326 = vld [vmem:[%s3 + $0x90] sm:$0xff]
    %v327 = vld [vmem:[%s3 + $0x98] sm:$0xff]
    %v328 = vld [vmem:[%s3 + $0xa0] sm:$0xff]
    %v329 = vld [vmem:[%s3 + $0xa8] sm:$0xff]
    %v330 = vld [vmem:[%s3 + $0xb0] sm:$0xff]
    %v331 = vld [vmem:[%s3 + $0xb8] sm:$0xff]
    %v332 = vld [vmem:[%s3 + $0xc0] sm:$0xff]
    %v333 = vld [vmem:[%s3 + $0xc8] sm:$0xff]
    %v334 = vld [vmem:[%s3 + $0xd0] sm:$0xff]
    %v335 = vld [vmem:[%s3 + $0xd8] sm:$0xff]
    %v336 = vld [vmem:[%s3 + $0xe0] sm:$0xff]
    %v337 = vld [vmem:[%s3 + $0xe8] sm:$0xff]
    %v338 = vld [vmem:[%s3 + $0xf0] sm:$0xff]
    %v339 = vld [vmem:[%s3 + $0xf8] sm:$0xff]
    %v340 = vld [vmem:[%s3 + $0x100] sm:$0xff]
    %v341 = vld [vmem:[%s3 + $0x108] sm:$0xff]
    %v342 = vld [vmem:[%s3 + $0x110] sm:$0xff]
    %v343 = vld [vmem:[%s3 + $0x118] sm:$0xff]
    %v344 = vld [vmem:[%s3 + $0x120] sm:$0xff]
    %v345 = vld [vmem:[%s3 + $0x128] sm:$0xff]
    %v346 = vld [vmem:[%s3 + $0x130] sm:$0xff]
    %v347 = vld [vmem:[%s3 + $0x138] sm:$0xff]
    %v348 = vld [vmem:[%s3 + $0x140] sm:$0xff]
    %v349 = vld [vmem:[%s3 + $0x148] sm:$0xff]
    %v350 = vld [vmem:[%s3 + $0x150] sm:$0xff]
    %v351 = vld [vmem:[%s3 + $0x158] sm:$0xff]
    %v352 = vld [vmem:[%s3 + $0x160] sm:$0xff]
    %v353 = vld [vmem:[%s3 + $0x168] sm:$0xff]
    %v354 = vld [vmem:[%s3 + $0x170] sm:$0xff]
    %v355 = vld [vmem:[%s3 + $0x178] sm:$0xff]
    %v356 = vld [vmem:[%s3 + $0x180] sm:$0xff]
    %v357 = vld [vmem:[%s3 + $0x188] sm:$0xff]
    %v358 = vld [vmem:[%s3 + $0x190] sm:$0xff]
    %v359 = vld [vmem:[%s3 + $0x198] sm:$0xff]
    %v360 = vld [vmem:[%s3 + $0x1a0] sm:$0xff]
    %v361 = vld [vmem:[%s3 + $0x1a8] sm:$0xff]
    %v362 = vld [vmem:[%s3 + $0x1b0] sm:$0xff]
    %v363 = vld [vmem:[%s3 + $0x1b8] sm:$0xff]
    %v364 = vld [vmem:[%s3 + $0x1c0] sm:$0xff]
    %v365 = vld [vmem:[%s3 + $0x1c8] sm:$0xff]
    %v366 = vld [vmem:[%s3 + $0x1d0] sm:$0xff]
    %v367 = vld [vmem:[%s3 + $0x1d8] sm:$0xff]
    %v368 = vld [vmem:[%s3 + $0x1e0] sm:$0xff]
    %v369 = vld [vmem:[%s3 + $0x1e8] sm:$0xff]
    %v370 = vld [vmem:[%s3 + $0x1f0] sm:$0xff]
    %v371 = vld [vmem:[%s3 + $0x1f8] sm:$0xff]
    %372 = vmatpush.msra.mxu0 %v368
    %373 = vmatpush.msra.mxu0 %v364
    %374 = vmatpush.msra.mxu0 %v360
    %375 = vmatpush.msra.mxu0 %v356
    %376 = vmatpush.msra.mxu0 %v352
    %377 = vmatpush.msra.mxu0 %v348
    %378 = vmatpush.msra.mxu0 %v344
    %379 = vmatpush.msra.mxu0 %v340
    %380 = vmatpush.msra.mxu0 %v336
    %381 = vmatpush.msra.mxu0 %v332
    %382 = vmatpush.msra.mxu0 %v328
    %383 = vmatpush.msra.mxu0 %v324
    %384 = vmatpush.msra.mxu0 %v320
    %385 = vmatpush.msra.mxu0 %v316
    %386 = vmatpush.msra.mxu0 %v312
    %387 = vmatpush.msra.mxu0 %v308
    %388 = vmatmul.f32.gmra.mxu0 %v307
    %v389 = vpop.f32.mrf.mxu0
    %v390 = vadd.f32 0.0, %v389
    %391 = vdwg.mxu0
    %392 = vmatpush.msra.mxu0 %v369
    %393 = vmatpush.msra.mxu0 %v365
    %394 = vmatpush.msra.mxu0 %v361
    %395 = vmatpush.msra.mxu0 %v357
    %396 = vmatpush.msra.mxu0 %v353
    %397 = vmatpush.msra.mxu0 %v349
    %398 = vmatpush.msra.mxu0 %v345
    %399 = vmatpush.msra.mxu0 %v341
    %400 = vmatpush.msra.mxu0 %v337
    %401 = vmatpush.msra.mxu0 %v333
    %402 = vmatpush.msra.mxu0 %v329
    %403 = vmatpush.msra.mxu0 %v325
    %404 = vmatpush.msra.mxu0 %v321
    %405 = vmatpush.msra.mxu0 %v317
    %406 = vmatpush.msra.mxu0 %v313
    %407 = vmatpush.msra.mxu0 %v309
    %408 = vmatmul.f32.gmra.mxu0 %v307
    %v409 = vpop.f32.mrf.mxu0
    %v410 = vadd.f32 0.0, %v409
    %411 = vdwg.mxu0
    %412 = vmatpush.msra.mxu0 %v370
    %413 = vmatpush.msra.mxu0 %v366
    %414 = vmatpush.msra.mxu0 %v362
    %415 = vmatpush.msra.mxu0 %v358
    %416 = vmatpush.msra.mxu0 %v354
    %417 = vmatpush.msra.mxu0 %v350
    %418 = vmatpush.msra.mxu0 %v346
    %419 = vmatpush.msra.mxu0 %v342
    %420 = vmatpush.msra.mxu0 %v338
    %421 = vmatpush.msra.mxu0 %v334
    %422 = vmatpush.msra.mxu0 %v330
    %423 = vmatpush.msra.mxu0 %v326
    %424 = vmatpush.msra.mxu0 %v322
    %425 = vmatpush.msra.mxu0 %v318
    %426 = vmatpush.msra.mxu0 %v314
    %427 = vmatpush.msra.mxu0 %v310
    %428 = vmatmul.f32.gmra.mxu0 %v307
    %v429 = vpop.f32.mrf.mxu0
    %v430 = vadd.f32 0.0, %v429
    %431 = vdwg.mxu0
    %432 = vmatpush.msra.mxu0 %v371
    %433 = vmatpush.msra.mxu0 %v367
    %434 = vmatpush.msra.mxu0 %v363
    %435 = vmatpush.msra.mxu0 %v359
    %436 = vmatpush.msra.mxu0 %v355
    %437 = vmatpush.msra.mxu0 %v351
    %438 = vmatpush.msra.mxu0 %v347
    %439 = vmatpush.msra.mxu0 %v343
    %440 = vmatpush.msra.mxu0 %v339
    %441 = vmatpush.msra.mxu0 %v335
    %442 = vmatpush.msra.mxu0 %v331
    %443 = vmatpush.msra.mxu0 %v327
    %444 = vmatpush.msra.mxu0 %v323
    %445 = vmatpush.msra.mxu0 %v319
    %446 = vmatpush.msra.mxu0 %v315
    %447 = vmatpush.msra.mxu0 %v311
    %448 = vmatmul.f32.gmra.mxu0 %v307
    %v449 = vpop.f32.mrf.mxu0
    %v450 = vadd.f32 0.0, %v449
    %451 = vdwg.mxu0
    %v452 = vadd.f32 %v303, %v390
    %v453 = vadd.f32 %v304, %v410
    %v454 = vadd.f32 %v305, %v430
    %v455 = vadd.f32 %v306, %v450
    %v456 = vld [vmem:[#allocation3] sm:$0xff]
    %v457 = vxor.u32 %v298, 2147483648
    %v458 = vxor.u32 %v299, 2147483648
    %v459 = vxor.u32 %v300, 2147483648
    %v460 = vmul.f32 %v457, 1.442695
    %v461 = vpow.pop %v460
    %v462 = vmul.f32 %v458, 1.442695
    %v463 = vpow.pop %v462
    %v464 = vmul.f32 %v459, 1.442695
    %v465 = vpow.pop %v464
    %v466 = vadd.f32 %v461, 1.0
    %v467 = vadd.f32 %v463, 1.0
    %v468 = vadd.f32 %v465, 1.0
    %v469 = vrcp.pop %v466
    %v470 = vmul.f32 %v466, %v469
    %v471 = vsub.f32 1.0, %v470
    %v472 = vmul.f32 %v469, %v471
    %v473 = vadd.f32 %v469, %v472
    %vm474 = vweird.f32 %v466
    %vm475 = vweird.f32 %v469
    %vm476 = vmor %vm474, %vm475
    %v477 = vsel %vm476, %v469, %v473
    %v478 = vand.u32 2147483647, %v466
    %vm479 = vcmp.eq.f32.partialorder %v478, 8.507059e+37
    %v480 = vand.u32 %v466, 2147483648
    %v481 = vor.u32 1.1754944e-38, %v480
    %v482 = vsel %vm479, %v481, %v477
    %v483 = vmul.f32 1.0, %v482
    %v484 = vrcp.pop %v467
    %v485 = vmul.f32 %v467, %v484
    %v486 = vsub.f32 1.0, %v485
    %v487 = vmul.f32 %v484, %v486
    %v488 = vadd.f32 %v484, %v487
    %vm489 = vweird.f32 %v467
    %vm490 = vweird.f32 %v484
    %vm491 = vmor %vm489, %vm490
    %v492 = vsel %vm491, %v484, %v488
    %v493 = vand.u32 2147483647, %v467
    %vm494 = vcmp.eq.f32.partialorder %v493, 8.507059e+37
    %v495 = vand.u32 %v467, 2147483648
    %v496 = vor.u32 1.1754944e-38, %v495
    %v497 = vsel %vm494, %v496, %v492
    %v498 = vmul.f32 1.0, %v497
    %v499 = vrcp.pop %v468
    %v500 = vmul.f32 %v468, %v499
    %v501 = vsub.f32 1.0, %v500
    %v502 = vmul.f32 %v499, %v501
    %v503 = vadd.f32 %v499, %v502
    %vm504 = vweird.f32 %v468
    %vm505 = vweird.f32 %v499
    %vm506 = vmor %vm504, %vm505
    %v507 = vsel %vm506, %v499, %v503
    %v508 = vand.u32 2147483647, %v468
    %vm509 = vcmp.eq.f32.partialorder %v508, 8.507059e+37
    %v510 = vand.u32 %v468, 2147483648
    %v511 = vor.u32 1.1754944e-38, %v510
    %v512 = vsel %vm509, %v511, %v507
    %v513 = vmul.f32 1.0, %v512
    %v514 = vtanh.pop %v301
    %v515 = vmul.f32 %v498, %v456
    %v516 = vmul.f32 %v483, %v514
    %v517 = vadd.f32 %v515, %v516
    %v518 = vtanh.pop %v517
    %v519 = vmul.f32 %v513, %v518
    %v520 = vld [vmem:[#allocation5] sm:$0xff]
    %v521 = vxor.u32 %v452, 2147483648
    %v522 = vxor.u32 %v453, 2147483648
    %v523 = vxor.u32 %v454, 2147483648
    %v524 = vmul.f32 %v521, 1.442695
    %v525 = vpow.pop %v524
    %v526 = vmul.f32 %v522, 1.442695
    %v527 = vpow.pop %v526
    %v528 = vmul.f32 %v523, 1.442695
    %v529 = vpow.pop %v528
    %v530 = vadd.f32 %v525, 1.0
    %v531 = vadd.f32 %v527, 1.0
    %v532 = vadd.f32 %v529, 1.0
    %v533 = vrcp.pop %v530
    %v534 = vmul.f32 %v530, %v533
    %v535 = vsub.f32 1.0, %v534
    %v536 = vmul.f32 %v533, %v535
    %v537 = vadd.f32 %v533, %v536
    %vm538 = vweird.f32 %v530
    %vm539 = vweird.f32 %v533
    %vm540 = vmor %vm538, %vm539
    %v541 = vsel %vm540, %v533, %v537
    %v542 = vand.u32 2147483647, %v530
    %vm543 = vcmp.eq.f32.partialorder %v542, 8.507059e+37
    %v544 = vand.u32 %v530, 2147483648
    %v545 = vor.u32 1.1754944e-38, %v544
    %v546 = vsel %vm543, %v545, %v541
    %v547 = vmul.f32 1.0, %v546
    %v548 = vrcp.pop %v531
    %v549 = vmul.f32 %v531, %v548
    %v550 = vsub.f32 1.0, %v549
    %v551 = vmul.f32 %v548, %v550
    %v552 = vadd.f32 %v548, %v551
    %vm553 = vweird.f32 %v531
    %vm554 = vweird.f32 %v548
    %vm555 = vmor %vm553, %vm554
    %v556 = vsel %vm555, %v548, %v552
    %v557 = vand.u32 2147483647, %v531
    %vm558 = vcmp.eq.f32.partialorder %v557, 8.507059e+37
    %v559 = vand.u32 %v531, 2147483648
    %v560 = vor.u32 1.1754944e-38, %v559
    %v561 = vsel %vm558, %v560, %v556
    %v562 = vmul.f32 1.0, %v561
    %v563 = vrcp.pop %v532
    %v564 = vmul.f32 %v532, %v563
    %v565 = vsub.f32 1.0, %v564
    %v566 = vmul.f32 %v563, %v565
    %v567 = vadd.f32 %v563, %v566
    %vm568 = vweird.f32 %v532
    %vm569 = vweird.f32 %v563
    %vm570 = vmor %vm568, %vm569
    %v571 = vsel %vm570, %v563, %v567
    %v572 = vand.u32 2147483647, %v532
    %vm573 = vcmp.eq.f32.partialorder %v572, 8.507059e+37
    %v574 = vand.u32 %v532, 2147483648
    %v575 = vor.u32 1.1754944e-38, %v574
    %v576 = vsel %vm573, %v575, %v571
    %v577 = vmul.f32 1.0, %v576
    %v578 = vtanh.pop %v455
    %v579 = vmul.f32 %v562, %v520
    %v580 = vmul.f32 %v547, %v578
    %v581 = vadd.f32 %v579, %v580
    %v582 = vtanh.pop %v581
    %v583 = vmul.f32 %v577, %v582
    %584 = vst [vmem:[#allocation2] sm:$0xff] %v519
    %585 = vst [vmem:[#allocation3] sm:$0xff] %v517
    %586 = vst [vmem:[#allocation4] sm:$0xff] %v583
    %587 = vst [vmem:[#allocation5] sm:$0xff] %v581
    %588 = vst [vmem:[%s4] sm:$0xff] %v519
    %s589 = scalar_lea.vmem %s138, 24
    %590 = vst [vmem:[%s589] sm:$0xff] %v583
    %s591 = scalar_lea.vmem [#allocation6], 32
    %v592 = vld [vmem:[%s591] sm:$0xff]
    %v593 = vld [vmem:[%s591 + $0x8] sm:$0xff]
    %v594 = vld [vmem:[%s591 + $0x10] sm:$0xff]
    %v595 = vld [vmem:[%s591 + $0x18] sm:$0xff]
    %v596 = vld [vmem:[#allocation2] sm:$0xff]
    %v597 = vld [vmem:[%s2] sm:$0xff]
    %v598 = vld [vmem:[%s2 + $0x8] sm:$0xff]
    %v599 = vld [vmem:[%s2 + $0x10] sm:$0xff]
    %v600 = vld [vmem:[%s2 + $0x18] sm:$0xff]
    %v601 = vld [vmem:[%s2 + $0x20] sm:$0xff]
    %v602 = vld [vmem:[%s2 + $0x28] sm:$0xff]
    %v603 = vld [vmem:[%s2 + $0x30] sm:$0xff]
    %v604 = vld [vmem:[%s2 + $0x38] sm:$0xff]
    %v605 = vld [vmem:[%s2 + $0x40] sm:$0xff]
    %v606 = vld [vmem:[%s2 + $0x48] sm:$0xff]
    %v607 = vld [vmem:[%s2 + $0x50] sm:$0xff]
    %v608 = vld [vmem:[%s2 + $0x58] sm:$0xff]
    %v609 = vld [vmem:[%s2 + $0x60] sm:$0xff]
    %v610 = vld [vmem:[%s2 + $0x68] sm:$0xff]
    %v611 = vld [vmem:[%s2 + $0x70] sm:$0xff]
    %v612 = vld [vmem:[%s2 + $0x78] sm:$0xff]
    %v613 = vld [vmem:[%s2 + $0x80] sm:$0xff]
    %v614 = vld [vmem:[%s2 + $0x88] sm:$0xff]
    %v615 = vld [vmem:[%s2 + $0x90] sm:$0xff]
    %v616 = vld [vmem:[%s2 + $0x98] sm:$0xff]
    %v617 = vld [vmem:[%s2 + $0xa0] sm:$0xff]
    %v618 = vld [vmem:[%s2 + $0xa8] sm:$0xff]
    %v619 = vld [vmem:[%s2 + $0xb0] sm:$0xff]
    %v620 = vld [vmem:[%s2 + $0xb8] sm:$0xff]
    %v621 = vld [vmem:[%s2 + $0xc0] sm:$0xff]
    %v622 = vld [vmem:[%s2 + $0xc8] sm:$0xff]
    %v623 = vld [vmem:[%s2 + $0xd0] sm:$0xff]
    %v624 = vld [vmem:[%s2 + $0xd8] sm:$0xff]
    %v625 = vld [vmem:[%s2 + $0xe0] sm:$0xff]
    %v626 = vld [vmem:[%s2 + $0xe8] sm:$0xff]
    %v627 = vld [vmem:[%s2 + $0xf0] sm:$0xff]
    %v628 = vld [vmem:[%s2 + $0xf8] sm:$0xff]
    %v629 = vld [vmem:[%s2 + $0x100] sm:$0xff]
    %v630 = vld [vmem:[%s2 + $0x108] sm:$0xff]
    %v631 = vld [vmem:[%s2 + $0x110] sm:$0xff]
    %v632 = vld [vmem:[%s2 + $0x118] sm:$0xff]
    %v633 = vld [vmem:[%s2 + $0x120] sm:$0xff]
    %v634 = vld [vmem:[%s2 + $0x128] sm:$0xff]
    %v635 = vld [vmem:[%s2 + $0x130] sm:$0xff]
    %v636 = vld [vmem:[%s2 + $0x138] sm:$0xff]
    %v637 = vld [vmem:[%s2 + $0x140] sm:$0xff]
    %v638 = vld [vmem:[%s2 + $0x148] sm:$0xff]
    %v639 = vld [vmem:[%s2 + $0x150] sm:$0xff]
    %v640 = vld [vmem:[%s2 + $0x158] sm:$0xff]
    %v641 = vld [vmem:[%s2 + $0x160] sm:$0xff]
    %v642 = vld [vmem:[%s2 + $0x168] sm:$0xff]
    %v643 = vld [vmem:[%s2 + $0x170] sm:$0xff]
    %v644 = vld [vmem:[%s2 + $0x178] sm:$0xff]
    %v645 = vld [vmem:[%s2 + $0x180] sm:$0xff]
    %v646 = vld [vmem:[%s2 + $0x188] sm:$0xff]
    %v647 = vld [vmem:[%s2 + $0x190] sm:$0xff]
    %v648 = vld [vmem:[%s2 + $0x198] sm:$0xff]
    %v649 = vld [vmem:[%s2 + $0x1a0] sm:$0xff]
    %v650 = vld [vmem:[%s2 + $0x1a8] sm:$0xff]
    %v651 = vld [vmem:[%s2 + $0x1b0] sm:$0xff]
    %v652 = vld [vmem:[%s2 + $0x1b8] sm:$0xff]
    %v653 = vld [vmem:[%s2 + $0x1c0] sm:$0xff]
    %v654 = vld [vmem:[%s2 + $0x1c8] sm:$0xff]
    %v655 = vld [vmem:[%s2 + $0x1d0] sm:$0xff]
    %v656 = vld [vmem:[%s2 + $0x1d8] sm:$0xff]
    %v657 = vld [vmem:[%s2 + $0x1e0] sm:$0xff]
    %v658 = vld [vmem:[%s2 + $0x1e8] sm:$0xff]
    %v659 = vld [vmem:[%s2 + $0x1f0] sm:$0xff]
    %v660 = vld [vmem:[%s2 + $0x1f8] sm:$0xff]
    %661 = vmatpush.msra.mxu0 %v657
    %662 = vmatpush.msra.mxu0 %v653
    %663 = vmatpush.msra.mxu0 %v649
    %664 = vmatpush.msra.mxu0 %v645
    %665 = vmatpush.msra.mxu0 %v641
    %666 = vmatpush.msra.mxu0 %v637
    %667 = vmatpush.msra.mxu0 %v633
    %668 = vmatpush.msra.mxu0 %v629
    %669 = vmatpush.msra.mxu0 %v625
    %670 = vmatpush.msra.mxu0 %v621
    %671 = vmatpush.msra.mxu0 %v617
    %672 = vmatpush.msra.mxu0 %v613
    %673 = vmatpush.msra.mxu0 %v609
    %674 = vmatpush.msra.mxu0 %v605
    %675 = vmatpush.msra.mxu0 %v601
    %676 = vmatpush.msra.mxu0 %v597
    %677 = vmatmul.f32.gmra.mxu0 %v596
    %v678 = vpop.f32.mrf.mxu0
    %v679 = vadd.f32 0.0, %v678
    %680 = vdwg.mxu0
    %681 = vmatpush.msra.mxu0 %v658
    %682 = vmatpush.msra.mxu0 %v654
    %683 = vmatpush.msra.mxu0 %v650
    %684 = vmatpush.msra.mxu0 %v646
    %685 = vmatpush.msra.mxu0 %v642
    %686 = vmatpush.msra.mxu0 %v638
    %687 = vmatpush.msra.mxu0 %v634
    %688 = vmatpush.msra.mxu0 %v630
    %689 = vmatpush.msra.mxu0 %v626
    %690 = vmatpush.msra.mxu0 %v622
    %691 = vmatpush.msra.mxu0 %v618
    %692 = vmatpush.msra.mxu0 %v614
    %693 = vmatpush.msra.mxu0 %v610
    %694 = vmatpush.msra.mxu0 %v606
    %695 = vmatpush.msra.mxu0 %v602
    %696 = vmatpush.msra.mxu0 %v598
    %697 = vmatmul.f32.gmra.mxu0 %v596
    %v698 = vpop.f32.mrf.mxu0
    %v699 = vadd.f32 0.0, %v698
    %700 = vdwg.mxu0
    %701 = vmatpush.msra.mxu0 %v659
    %702 = vmatpush.msra.mxu0 %v655
    %703 = vmatpush.msra.mxu0 %v651
    %704 = vmatpush.msra.mxu0 %v647
    %705 = vmatpush.msra.mxu0 %v643
    %706 = vmatpush.msra.mxu0 %v639
    %707 = vmatpush.msra.mxu0 %v635
    %708 = vmatpush.msra.mxu0 %v631
    %709 = vmatpush.msra.mxu0 %v627
    %710 = vmatpush.msra.mxu0 %v623
    %711 = vmatpush.msra.mxu0 %v619
    %712 = vmatpush.msra.mxu0 %v615
    %713 = vmatpush.msra.mxu0 %v611
    %714 = vmatpush.msra.mxu0 %v607
    %715 = vmatpush.msra.mxu0 %v603
    %716 = vmatpush.msra.mxu0 %v599
    %717 = vmatmul.f32.gmra.mxu0 %v596
    %v718 = vpop.f32.mrf.mxu0
    %v719 = vadd.f32 0.0, %v718
    %720 = vdwg.mxu0
    %721 = vmatpush.msra.mxu0 %v660
    %722 = vmatpush.msra.mxu0 %v656
    %723 = vmatpush.msra.mxu0 %v652
    %724 = vmatpush.msra.mxu0 %v648
    %725 = vmatpush.msra.mxu0 %v644
    %726 = vmatpush.msra.mxu0 %v640
    %727 = vmatpush.msra.mxu0 %v636
    %728 = vmatpush.msra.mxu0 %v632
    %729 = vmatpush.msra.mxu0 %v628
    %730 = vmatpush.msra.mxu0 %v624
    %731 = vmatpush.msra.mxu0 %v620
    %732 = vmatpush.msra.mxu0 %v616
    %733 = vmatpush.msra.mxu0 %v612
    %734 = vmatpush.msra.mxu0 %v608
    %735 = vmatpush.msra.mxu0 %v604
    %736 = vmatpush.msra.mxu0 %v600
    %737 = vmatmul.f32.gmra.mxu0 %v596
    %v738 = vpop.f32.mrf.mxu0
    %v739 = vadd.f32 0.0, %v738
    %740 = vdwg.mxu0
    %v741 = vadd.f32 %v592, %v679
    %v742 = vadd.f32 %v593, %v699
    %v743 = vadd.f32 %v594, %v719
    %v744 = vadd.f32 %v595, %v739
    %s745 = scalar_lea.vmem [#allocation7], 64
    %v746 = vld [vmem:[%s745] sm:$0xff]
    %v747 = vld [vmem:[%s745 + $0x8] sm:$0xff]
    %v748 = vld [vmem:[%s745 + $0x10] sm:$0xff]
    %v749 = vld [vmem:[%s745 + $0x18] sm:$0xff]
    %v750 = vld [vmem:[#allocation4] sm:$0xff]
    %v751 = vld [vmem:[%s3] sm:$0xff]
    %v752 = vld [vmem:[%s3 + $0x8] sm:$0xff]
    %v753 = vld [vmem:[%s3 + $0x10] sm:$0xff]
    %v754 = vld [vmem:[%s3 + $0x18] sm:$0xff]
    %v755 = vld [vmem:[%s3 + $0x20] sm:$0xff]
    %v756 = vld [vmem:[%s3 + $0x28] sm:$0xff]
    %v757 = vld [vmem:[%s3 + $0x30] sm:$0xff]
    %v758 = vld [vmem:[%s3 + $0x38] sm:$0xff]
    %v759 = vld [vmem:[%s3 + $0x40] sm:$0xff]
    %v760 = vld [vmem:[%s3 + $0x48] sm:$0xff]
    %v761 = vld [vmem:[%s3 + $0x50] sm:$0xff]
    %v762 = vld [vmem:[%s3 + $0x58] sm:$0xff]
    %v763 = vld [vmem:[%s3 + $0x60] sm:$0xff]
    %v764 = vld [vmem:[%s3 + $0x68] sm:$0xff]
    %v765 = vld [vmem:[%s3 + $0x70] sm:$0xff]
    %v766 = vld [vmem:[%s3 + $0x78] sm:$0xff]
    %v767 = vld [vmem:[%s3 + $0x80] sm:$0xff]
    %v768 = vld [vmem:[%s3 + $0x88] sm:$0xff]
    %v769 = vld [vmem:[%s3 + $0x90] sm:$0xff]
    %v770 = vld [vmem:[%s3 + $0x98] sm:$0xff]
    %v771 = vld [vmem:[%s3 + $0xa0] sm:$0xff]
    %v772 = vld [vmem:[%s3 + $0xa8] sm:$0xff]
    %v773 = vld [vmem:[%s3 + $0xb0] sm:$0xff]
    %v774 = vld [vmem:[%s3 + $0xb8] sm:$0xff]
    %v775 = vld [vmem:[%s3 + $0xc0] sm:$0xff]
    %v776 = vld [vmem:[%s3 + $0xc8] sm:$0xff]
    %v777 = vld [vmem:[%s3 + $0xd0] sm:$0xff]
    %v778 = vld [vmem:[%s3 + $0xd8] sm:$0xff]
    %v779 = vld [vmem:[%s3 + $0xe0] sm:$0xff]
    %v780 = vld [vmem:[%s3 + $0xe8] sm:$0xff]
    %v781 = vld [vmem:[%s3 + $0xf0] sm:$0xff]
    %v782 = vld [vmem:[%s3 + $0xf8] sm:$0xff]
    %v783 = vld [vmem:[%s3 + $0x100] sm:$0xff]
    %v784 = vld [vmem:[%s3 + $0x108] sm:$0xff]
    %v785 = vld [vmem:[%s3 + $0x110] sm:$0xff]
    %v786 = vld [vmem:[%s3 + $0x118] sm:$0xff]
    %v787 = vld [vmem:[%s3 + $0x120] sm:$0xff]
    %v788 = vld [vmem:[%s3 + $0x128] sm:$0xff]
    %v789 = vld [vmem:[%s3 + $0x130] sm:$0xff]
    %v790 = vld [vmem:[%s3 + $0x138] sm:$0xff]
    %v791 = vld [vmem:[%s3 + $0x140] sm:$0xff]
    %v792 = vld [vmem:[%s3 + $0x148] sm:$0xff]
    %v793 = vld [vmem:[%s3 + $0x150] sm:$0xff]
    %v794 = vld [vmem:[%s3 + $0x158] sm:$0xff]
    %v795 = vld [vmem:[%s3 + $0x160] sm:$0xff]
    %v796 = vld [vmem:[%s3 + $0x168] sm:$0xff]
    %v797 = vld [vmem:[%s3 + $0x170] sm:$0xff]
    %v798 = vld [vmem:[%s3 + $0x178] sm:$0xff]
    %v799 = vld [vmem:[%s3 + $0x180] sm:$0xff]
    %v800 = vld [vmem:[%s3 + $0x188] sm:$0xff]
    %v801 = vld [vmem:[%s3 + $0x190] sm:$0xff]
    %v802 = vld [vmem:[%s3 + $0x198] sm:$0xff]
    %v803 = vld [vmem:[%s3 + $0x1a0] sm:$0xff]
    %v804 = vld [vmem:[%s3 + $0x1a8] sm:$0xff]
    %v805 = vld [vmem:[%s3 + $0x1b0] sm:$0xff]
    %v806 = vld [vmem:[%s3 + $0x1b8] sm:$0xff]
    %v807 = vld [vmem:[%s3 + $0x1c0] sm:$0xff]
    %v808 = vld [vmem:[%s3 + $0x1c8] sm:$0xff]
    %v809 = vld [vmem:[%s3 + $0x1d0] sm:$0xff]
    %v810 = vld [vmem:[%s3 + $0x1d8] sm:$0xff]
    %v811 = vld [vmem:[%s3 + $0x1e0] sm:$0xff]
    %v812 = vld [vmem:[%s3 + $0x1e8] sm:$0xff]
    %v813 = vld [vmem:[%s3 + $0x1f0] sm:$0xff]
    %v814 = vld [vmem:[%s3 + $0x1f8] sm:$0xff]
    %815 = vmatpush.msra.mxu0 %v811
    %816 = vmatpush.msra.mxu0 %v807
    %817 = vmatpush.msra.mxu0 %v803
    %818 = vmatpush.msra.mxu0 %v799
    %819 = vmatpush.msra.mxu0 %v795
    %820 = vmatpush.msra.mxu0 %v791
    %821 = vmatpush.msra.mxu0 %v787
    %822 = vmatpush.msra.mxu0 %v783
    %823 = vmatpush.msra.mxu0 %v779
    %824 = vmatpush.msra.mxu0 %v775
    %825 = vmatpush.msra.mxu0 %v771
    %826 = vmatpush.msra.mxu0 %v767
    %827 = vmatpush.msra.mxu0 %v763
    %828 = vmatpush.msra.mxu0 %v759
    %829 = vmatpush.msra.mxu0 %v755
    %830 = vmatpush.msra.mxu0 %v751
    %831 = vmatmul.f32.gmra.mxu0 %v750
    %v832 = vpop.f32.mrf.mxu0
    %v833 = vadd.f32 0.0, %v832
    %834 = vdwg.mxu0
    %835 = vmatpush.msra.mxu0 %v812
    %836 = vmatpush.msra.mxu0 %v808
    %837 = vmatpush.msra.mxu0 %v804
    %838 = vmatpush.msra.mxu0 %v800
    %839 = vmatpush.msra.mxu0 %v796
    %840 = vmatpush.msra.mxu0 %v792
    %841 = vmatpush.msra.mxu0 %v788
    %842 = vmatpush.msra.mxu0 %v784
    %843 = vmatpush.msra.mxu0 %v780
    %844 = vmatpush.msra.mxu0 %v776
    %845 = vmatpush.msra.mxu0 %v772
    %846 = vmatpush.msra.mxu0 %v768
    %847 = vmatpush.msra.mxu0 %v764
    %848 = vmatpush.msra.mxu0 %v760
    %849 = vmatpush.msra.mxu0 %v756
    %850 = vmatpush.msra.mxu0 %v752
    %851 = vmatmul.f32.gmra.mxu0 %v750
    %v852 = vpop.f32.mrf.mxu0
    %v853 = vadd.f32 0.0, %v852
    %854 = vdwg.mxu0
    %855 = vmatpush.msra.mxu0 %v813
    %856 = vmatpush.msra.mxu0 %v809
    %857 = vmatpush.msra.mxu0 %v805
    %858 = vmatpush.msra.mxu0 %v801
    %859 = vmatpush.msra.mxu0 %v797
    %860 = vmatpush.msra.mxu0 %v793
    %861 = vmatpush.msra.mxu0 %v789
    %862 = vmatpush.msra.mxu0 %v785
    %863 = vmatpush.msra.mxu0 %v781
    %864 = vmatpush.msra.mxu0 %v777
    %865 = vmatpush.msra.mxu0 %v773
    %866 = vmatpush.msra.mxu0 %v769
    %867 = vmatpush.msra.mxu0 %v765
    %868 = vmatpush.msra.mxu0 %v761
    %869 = vmatpush.msra.mxu0 %v757
    %870 = vmatpush.msra.mxu0 %v753
    %871 = vmatmul.f32.gmra.mxu0 %v750
    %v872 = vpop.f32.mrf.mxu0
    %v873 = vadd.f32 0.0, %v872
    %874 = vdwg.mxu0
    %875 = vmatpush.msra.mxu0 %v814
    %876 = vmatpush.msra.mxu0 %v810
    %877 = vmatpush.msra.mxu0 %v806
    %878 = vmatpush.msra.mxu0 %v802
    %879 = vmatpush.msra.mxu0 %v798
    %880 = vmatpush.msra.mxu0 %v794
    %881 = vmatpush.msra.mxu0 %v790
    %882 = vmatpush.msra.mxu0 %v786
    %883 = vmatpush.msra.mxu0 %v782
    %884 = vmatpush.msra.mxu0 %v778
    %885 = vmatpush.msra.mxu0 %v774
    %886 = vmatpush.msra.mxu0 %v770
    %887 = vmatpush.msra.mxu0 %v766
    %888 = vmatpush.msra.mxu0 %v762
    %889 = vmatpush.msra.mxu0 %v758
    %890 = vmatpush.msra.mxu0 %v754
    %891 = vmatmul.f32.gmra.mxu0 %v750
    %v892 = vpop.f32.mrf.mxu0
    %v893 = vadd.f32 0.0, %v892
    %894 = vdwg.mxu0
    %v895 = vadd.f32 %v746, %v833
    %v896 = vadd.f32 %v747, %v853
    %v897 = vadd.f32 %v748, %v873
    %v898 = vadd.f32 %v749, %v893
    %v899 = vld [vmem:[#allocation3] sm:$0xff]
    %v900 = vxor.u32 %v741, 2147483648
    %v901 = vxor.u32 %v742, 2147483648
    %v902 = vxor.u32 %v743, 2147483648
    %v903 = vmul.f32 %v900, 1.442695
    %v904 = vpow.pop %v903
    %v905 = vmul.f32 %v901, 1.442695
    %v906 = vpow.pop %v905
    %v907 = vmul.f32 %v902, 1.442695
    %v908 = vpow.pop %v907
    %v909 = vadd.f32 %v904, 1.0
    %v910 = vadd.f32 %v906, 1.0
    %v911 = vadd.f32 %v908, 1.0
    %v912 = vrcp.pop %v909
    %v913 = vmul.f32 %v909, %v912
    %v914 = vsub.f32 1.0, %v913
    %v915 = vmul.f32 %v912, %v914
    %v916 = vadd.f32 %v912, %v915
    %vm917 = vweird.f32 %v909
    %vm918 = vweird.f32 %v912
    %vm919 = vmor %vm917, %vm918
    %v920 = vsel %vm919, %v912, %v916
    %v921 = vand.u32 2147483647, %v909
    %vm922 = vcmp.eq.f32.partialorder %v921, 8.507059e+37
    %v923 = vand.u32 %v909, 2147483648
    %v924 = vor.u32 1.1754944e-38, %v923
    %v925 = vsel %vm922, %v924, %v920
    %v926 = vmul.f32 1.0, %v925
    %v927 = vrcp.pop %v910
    %v928 = vmul.f32 %v910, %v927
    %v929 = vsub.f32 1.0, %v928
    %v930 = vmul.f32 %v927, %v929
    %v931 = vadd.f32 %v927, %v930
    %vm932 = vweird.f32 %v910
    %vm933 = vweird.f32 %v927
    %vm934 = vmor %vm932, %vm933
    %v935 = vsel %vm934, %v927, %v931
    %v936 = vand.u32 2147483647, %v910
    %vm937 = vcmp.eq.f32.partialorder %v936, 8.507059e+37
    %v938 = vand.u32 %v910, 2147483648
    %v939 = vor.u32 1.1754944e-38, %v938
    %v940 = vsel %vm937, %v939, %v935
    %v941 = vmul.f32 1.0, %v940
    %v942 = vrcp.pop %v911
    %v943 = vmul.f32 %v911, %v942
    %v944 = vsub.f32 1.0, %v943
    %v945 = vmul.f32 %v942, %v944
    %v946 = vadd.f32 %v942, %v945
    %vm947 = vweird.f32 %v911
    %vm948 = vweird.f32 %v942
    %vm949 = vmor %vm947, %vm948
    %v950 = vsel %vm949, %v942, %v946
    %v951 = vand.u32 2147483647, %v911
    %vm952 = vcmp.eq.f32.partialorder %v951, 8.507059e+37
    %v953 = vand.u32 %v911, 2147483648
    %v954 = vor.u32 1.1754944e-38, %v953
    %v955 = vsel %vm952, %v954, %v950
    %v956 = vmul.f32 1.0, %v955
    %v957 = vtanh.pop %v744
    %v958 = vmul.f32 %v941, %v899
    %v959 = vmul.f32 %v926, %v957
    %v960 = vadd.f32 %v958, %v959
    %v961 = vtanh.pop %v960
    %v962 = vmul.f32 %v956, %v961
    %v963 = vld [vmem:[#allocation5] sm:$0xff]
    %v964 = vxor.u32 %v895, 2147483648
    %v965 = vxor.u32 %v896, 2147483648
    %v966 = vxor.u32 %v897, 2147483648
    %v967 = vmul.f32 %v964, 1.442695
    %v968 = vpow.pop %v967
    %v969 = vmul.f32 %v965, 1.442695
    %v970 = vpow.pop %v969
    %v971 = vmul.f32 %v966, 1.442695
    %v972 = vpow.pop %v971
    %v973 = vadd.f32 %v968, 1.0
    %v974 = vadd.f32 %v970, 1.0
    %v975 = vadd.f32 %v972, 1.0
    %v976 = vrcp.pop %v973
    %v977 = vmul.f32 %v973, %v976
    %v978 = vsub.f32 1.0, %v977
    %v979 = vmul.f32 %v976, %v978
    %v980 = vadd.f32 %v976, %v979
    %vm981 = vweird.f32 %v973
    %vm982 = vweird.f32 %v976
    %vm983 = vmor %vm981, %vm982
    %v984 = vsel %vm983, %v976, %v980
    %v985 = vand.u32 2147483647, %v973
    %vm986 = vcmp.eq.f32.partialorder %v985, 8.507059e+37
    %v987 = vand.u32 %v973, 2147483648
    %v988 = vor.u32 1.1754944e-38, %v987
    %v989 = vsel %vm986, %v988, %v984
    %v990 = vmul.f32 1.0, %v989
    %v991 = vrcp.pop %v974
    %v992 = vmul.f32 %v974, %v991
    %v993 = vsub.f32 1.0, %v992
    %v994 = vmul.f32 %v991, %v993
    %v995 = vadd.f32 %v991, %v994
    %vm996 = vweird.f32 %v974
    %vm997 = vweird.f32 %v991
    %vm998 = vmor %vm996, %vm997
    %v999 = vsel %vm998, %v991, %v995
    %v1000 = vand.u32 2147483647, %v974
    %vm1001 = vcmp.eq.f32.partialorder %v1000, 8.507059e+37
    %v1002 = vand.u32 %v974, 2147483648
    %v1003 = vor.u32 1.1754944e-38, %v1002
    %v1004 = vsel %vm1001, %v1003, %v999
    %v1005 = vmul.f32 1.0, %v1004
    %v1006 = vrcp.pop %v975
    %v1007 = vmul.f32 %v975, %v1006
    %v1008 = vsub.f32 1.0, %v1007
    %v1009 = vmul.f32 %v1006, %v1008
    %v1010 = vadd.f32 %v1006, %v1009
    %vm1011 = vweird.f32 %v975
    %vm1012 = vweird.f32 %v1006
    %vm1013 = vmor %vm1011, %vm1012
    %v1014 = vsel %vm1013, %v1006, %v1010
    %v1015 = vand.u32 2147483647, %v975
    %vm1016 = vcmp.eq.f32.partialorder %v1015, 8.507059e+37
    %v1017 = vand.u32 %v975, 2147483648
    %v1018 = vor.u32 1.1754944e-38, %v1017
    %v1019 = vsel %vm1016, %v1018, %v1014
    %v1020 = vmul.f32 1.0, %v1019
    %v1021 = vtanh.pop %v898
    %v1022 = vmul.f32 %v1005, %v963
    %v1023 = vmul.f32 %v990, %v1021
    %v1024 = vadd.f32 %v1022, %v1023
    %v1025 = vtanh.pop %v1024
    %v1026 = vmul.f32 %v1020, %v1025
    %1027 = vst [vmem:[#allocation2] sm:$0xff] %v962
    %1028 = vst [vmem:[#allocation3] sm:$0xff] %v960
    %1029 = vst [vmem:[#allocation4] sm:$0xff] %v1026
    %1030 = vst [vmem:[#allocation5] sm:$0xff] %v1024
    %s1031 = scalar_lea.vmem %s4, 8
    %1032 = vst [vmem:[%s1031] sm:$0xff] %v962
    %s1033 = scalar_lea.vmem %s138, 16
    %1034 = vst [vmem:[%s1033] sm:$0xff] %v1026
    %s1035 = scalar_lea.vmem [#allocation6], 64
    %v1036 = vld [vmem:[%s1035] sm:$0xff]
    %v1037 = vld [vmem:[%s1035 + $0x8] sm:$0xff]
    %v1038 = vld [vmem:[%s1035 + $0x10] sm:$0xff]
    %v1039 = vld [vmem:[%s1035 + $0x18] sm:$0xff]
    %v1040 = vld [vmem:[#allocation2] sm:$0xff]
    %v1041 = vld [vmem:[%s2] sm:$0xff]
    %v1042 = vld [vmem:[%s2 + $0x8] sm:$0xff]
    %v1043 = vld [vmem:[%s2 + $0x10] sm:$0xff]
    %v1044 = vld [vmem:[%s2 + $0x18] sm:$0xff]
    %v1045 = vld [vmem:[%s2 + $0x20] sm:$0xff]
    %v1046 = vld [vmem:[%s2 + $0x28] sm:$0xff]
    %v1047 = vld [vmem:[%s2 + $0x30] sm:$0xff]
    %v1048 = vld [vmem:[%s2 + $0x38] sm:$0xff]
    %v1049 = vld [vmem:[%s2 + $0x40] sm:$0xff]
    %v1050 = vld [vmem:[%s2 + $0x48] sm:$0xff]
    %v1051 = vld [vmem:[%s2 + $0x50] sm:$0xff]
    %v1052 = vld [vmem:[%s2 + $0x58] sm:$0xff]
    %v1053 = vld [vmem:[%s2 + $0x60] sm:$0xff]
    %v1054 = vld [vmem:[%s2 + $0x68] sm:$0xff]
    %v1055 = vld [vmem:[%s2 + $0x70] sm:$0xff]
    %v1056 = vld [vmem:[%s2 + $0x78] sm:$0xff]
    %v1057 = vld [vmem:[%s2 + $0x80] sm:$0xff]
    %v1058 = vld [vmem:[%s2 + $0x88] sm:$0xff]
    %v1059 = vld [vmem:[%s2 + $0x90] sm:$0xff]
    %v1060 = vld [vmem:[%s2 + $0x98] sm:$0xff]
    %v1061 = vld [vmem:[%s2 + $0xa0] sm:$0xff]
    %v1062 = vld [vmem:[%s2 + $0xa8] sm:$0xff]
    %v1063 = vld [vmem:[%s2 + $0xb0] sm:$0xff]
    %v1064 = vld [vmem:[%s2 + $0xb8] sm:$0xff]
    %v1065 = vld [vmem:[%s2 + $0xc0] sm:$0xff]
    %v1066 = vld [vmem:[%s2 + $0xc8] sm:$0xff]
    %v1067 = vld [vmem:[%s2 + $0xd0] sm:$0xff]
    %v1068 = vld [vmem:[%s2 + $0xd8] sm:$0xff]
    %v1069 = vld [vmem:[%s2 + $0xe0] sm:$0xff]
    %v1070 = vld [vmem:[%s2 + $0xe8] sm:$0xff]
    %v1071 = vld [vmem:[%s2 + $0xf0] sm:$0xff]
    %v1072 = vld [vmem:[%s2 + $0xf8] sm:$0xff]
    %v1073 = vld [vmem:[%s2 + $0x100] sm:$0xff]
    %v1074 = vld [vmem:[%s2 + $0x108] sm:$0xff]
    %v1075 = vld [vmem:[%s2 + $0x110] sm:$0xff]
    %v1076 = vld [vmem:[%s2 + $0x118] sm:$0xff]
    %v1077 = vld [vmem:[%s2 + $0x120] sm:$0xff]
    %v1078 = vld [vmem:[%s2 + $0x128] sm:$0xff]
    %v1079 = vld [vmem:[%s2 + $0x130] sm:$0xff]
    %v1080 = vld [vmem:[%s2 + $0x138] sm:$0xff]
    %v1081 = vld [vmem:[%s2 + $0x140] sm:$0xff]
    %v1082 = vld [vmem:[%s2 + $0x148] sm:$0xff]
    %v1083 = vld [vmem:[%s2 + $0x150] sm:$0xff]
    %v1084 = vld [vmem:[%s2 + $0x158] sm:$0xff]
    %v1085 = vld [vmem:[%s2 + $0x160] sm:$0xff]
    %v1086 = vld [vmem:[%s2 + $0x168] sm:$0xff]
    %v1087 = vld [vmem:[%s2 + $0x170] sm:$0xff]
    %v1088 = vld [vmem:[%s2 + $0x178] sm:$0xff]
    %v1089 = vld [vmem:[%s2 + $0x180] sm:$0xff]
    %v1090 = vld [vmem:[%s2 + $0x188] sm:$0xff]
    %v1091 = vld [vmem:[%s2 + $0x190] sm:$0xff]
    %v1092 = vld [vmem:[%s2 + $0x198] sm:$0xff]
    %v1093 = vld [vmem:[%s2 + $0x1a0] sm:$0xff]
    %v1094 = vld [vmem:[%s2 + $0x1a8] sm:$0xff]
    %v1095 = vld [vmem:[%s2 + $0x1b0] sm:$0xff]
    %v1096 = vld [vmem:[%s2 + $0x1b8] sm:$0xff]
    %v1097 = vld [vmem:[%s2 + $0x1c0] sm:$0xff]
    %v1098 = vld [vmem:[%s2 + $0x1c8] sm:$0xff]
    %v1099 = vld [vmem:[%s2 + $0x1d0] sm:$0xff]
    %v1100 = vld [vmem:[%s2 + $0x1d8] sm:$0xff]
    %v1101 = vld [vmem:[%s2 + $0x1e0] sm:$0xff]
    %v1102 = vld [vmem:[%s2 + $0x1e8] sm:$0xff]
    %v1103 = vld [vmem:[%s2 + $0x1f0] sm:$0xff]
    %v1104 = vld [vmem:[%s2 + $0x1f8] sm:$0xff]
    %1105 = vmatpush.msra.mxu0 %v1101
    %1106 = vmatpush.msra.mxu0 %v1097
    %1107 = vmatpush.msra.mxu0 %v1093
    %1108 = vmatpush.msra.mxu0 %v1089
    %1109 = vmatpush.msra.mxu0 %v1085
    %1110 = vmatpush.msra.mxu0 %v1081
    %1111 = vmatpush.msra.mxu0 %v1077
    %1112 = vmatpush.msra.mxu0 %v1073
    %1113 = vmatpush.msra.mxu0 %v1069
    %1114 = vmatpush.msra.mxu0 %v1065
    %1115 = vmatpush.msra.mxu0 %v1061
    %1116 = vmatpush.msra.mxu0 %v1057
    %1117 = vmatpush.msra.mxu0 %v1053
    %1118 = vmatpush.msra.mxu0 %v1049
    %1119 = vmatpush.msra.mxu0 %v1045
    %1120 = vmatpush.msra.mxu0 %v1041
    %1121 = vmatmul.f32.gmra.mxu0 %v1040
    %v1122 = vpop.f32.mrf.mxu0
    %v1123 = vadd.f32 0.0, %v1122
    %1124 = vdwg.mxu0
    %1125 = vmatpush.msra.mxu0 %v1102
    %1126 = vmatpush.msra.mxu0 %v1098
    %1127 = vmatpush.msra.mxu0 %v1094
    %1128 = vmatpush.msra.mxu0 %v1090
    %1129 = vmatpush.msra.mxu0 %v1086
    %1130 = vmatpush.msra.mxu0 %v1082
    %1131 = vmatpush.msra.mxu0 %v1078
    %1132 = vmatpush.msra.mxu0 %v1074
    %1133 = vmatpush.msra.mxu0 %v1070
    %1134 = vmatpush.msra.mxu0 %v1066
    %1135 = vmatpush.msra.mxu0 %v1062
    %1136 = vmatpush.msra.mxu0 %v1058
    %1137 = vmatpush.msra.mxu0 %v1054
    %1138 = vmatpush.msra.mxu0 %v1050
    %1139 = vmatpush.msra.mxu0 %v1046
    %1140 = vmatpush.msra.mxu0 %v1042
    %1141 = vmatmul.f32.gmra.mxu0 %v1040
    %v1142 = vpop.f32.mrf.mxu0
    %v1143 = vadd.f32 0.0, %v1142
    %1144 = vdwg.mxu0
    %1145 = vmatpush.msra.mxu0 %v1103
    %1146 = vmatpush.msra.mxu0 %v1099
    %1147 = vmatpush.msra.mxu0 %v1095
    %1148 = vmatpush.msra.mxu0 %v1091
    %1149 = vmatpush.msra.mxu0 %v1087
    %1150 = vmatpush.msra.mxu0 %v1083
    %1151 = vmatpush.msra.mxu0 %v1079
    %1152 = vmatpush.msra.mxu0 %v1075
    %1153 = vmatpush.msra.mxu0 %v1071
    %1154 = vmatpush.msra.mxu0 %v1067
    %1155 = vmatpush.msra.mxu0 %v1063
    %1156 = vmatpush.msra.mxu0 %v1059
    %1157 = vmatpush.msra.mxu0 %v1055
    %1158 = vmatpush.msra.mxu0 %v1051
    %1159 = vmatpush.msra.mxu0 %v1047
    %1160 = vmatpush.msra.mxu0 %v1043
    %1161 = vmatmul.f32.gmra.mxu0 %v1040
    %v1162 = vpop.f32.mrf.mxu0
    %v1163 = vadd.f32 0.0, %v1162
    %1164 = vdwg.mxu0
    %1165 = vmatpush.msra.mxu0 %v1104
    %1166 = vmatpush.msra.mxu0 %v1100
    %1167 = vmatpush.msra.mxu0 %v1096
    %1168 = vmatpush.msra.mxu0 %v1092
    %1169 = vmatpush.msra.mxu0 %v1088
    %1170 = vmatpush.msra.mxu0 %v1084
    %1171 = vmatpush.msra.mxu0 %v1080
    %1172 = vmatpush.msra.mxu0 %v1076
    %1173 = vmatpush.msra.mxu0 %v1072
    %1174 = vmatpush.msra.mxu0 %v1068
    %1175 = vmatpush.msra.mxu0 %v1064
    %1176 = vmatpush.msra.mxu0 %v1060
    %1177 = vmatpush.msra.mxu0 %v1056
    %1178 = vmatpush.msra.mxu0 %v1052
    %1179 = vmatpush.msra.mxu0 %v1048
    %1180 = vmatpush.msra.mxu0 %v1044
    %1181 = vmatmul.f32.gmra.mxu0 %v1040
    %v1182 = vpop.f32.mrf.mxu0
    %v1183 = vadd.f32 0.0, %v1182
    %1184 = vdwg.mxu0
    %v1185 = vadd.f32 %v1036, %v1123
    %v1186 = vadd.f32 %v1037, %v1143
    %v1187 = vadd.f32 %v1038, %v1163
    %v1188 = vadd.f32 %v1039, %v1183
    %s1189 = scalar_lea.vmem [#allocation7], 32
    %v1190 = vld [vmem:[%s1189] sm:$0xff]
    %v1191 = vld [vmem:[%s1189 + $0x8] sm:$0xff]
    %v1192 = vld [vmem:[%s1189 + $0x10] sm:$0xff]
    %v1193 = vld [vmem:[%s1189 + $0x18] sm:$0xff]
    %v1194 = vld [vmem:[#allocation4] sm:$0xff]
    %v1195 = vld [vmem:[%s3] sm:$0xff]
    %v1196 = vld [vmem:[%s3 + $0x8] sm:$0xff]
    %v1197 = vld [vmem:[%s3 + $0x10] sm:$0xff]
    %v1198 = vld [vmem:[%s3 + $0x18] sm:$0xff]
    %v1199 = vld [vmem:[%s3 + $0x20] sm:$0xff]
    %v1200 = vld [vmem:[%s3 + $0x28] sm:$0xff]
    %v1201 = vld [vmem:[%s3 + $0x30] sm:$0xff]
    %v1202 = vld [vmem:[%s3 + $0x38] sm:$0xff]
    %v1203 = vld [vmem:[%s3 + $0x40] sm:$0xff]
    %v1204 = vld [vmem:[%s3 + $0x48] sm:$0xff]
    %v1205 = vld [vmem:[%s3 + $0x50] sm:$0xff]
    %v1206 = vld [vmem:[%s3 + $0x58] sm:$0xff]
    %v1207 = vld [vmem:[%s3 + $0x60] sm:$0xff]
    %v1208 = vld [vmem:[%s3 + $0x68] sm:$0xff]
    %v1209 = vld [vmem:[%s3 + $0x70] sm:$0xff]
    %v1210 = vld [vmem:[%s3 + $0x78] sm:$0xff]
    %v1211 = vld [vmem:[%s3 + $0x80] sm:$0xff]
    %v1212 = vld [vmem:[%s3 + $0x88] sm:$0xff]
    %v1213 = vld [vmem:[%s3 + $0x90] sm:$0xff]
    %v1214 = vld [vmem:[%s3 + $0x98] sm:$0xff]
    %v1215 = vld [vmem:[%s3 + $0xa0] sm:$0xff]
    %v1216 = vld [vmem:[%s3 + $0xa8] sm:$0xff]
    %v1217 = vld [vmem:[%s3 + $0xb0] sm:$0xff]
    %v1218 = vld [vmem:[%s3 + $0xb8] sm:$0xff]
    %v1219 = vld [vmem:[%s3 + $0xc0] sm:$0xff]
    %v1220 = vld [vmem:[%s3 + $0xc8] sm:$0xff]
    %v1221 = vld [vmem:[%s3 + $0xd0] sm:$0xff]
    %v1222 = vld [vmem:[%s3 + $0xd8] sm:$0xff]
    %v1223 = vld [vmem:[%s3 + $0xe0] sm:$0xff]
    %v1224 = vld [vmem:[%s3 + $0xe8] sm:$0xff]
    %v1225 = vld [vmem:[%s3 + $0xf0] sm:$0xff]
    %v1226 = vld [vmem:[%s3 + $0xf8] sm:$0xff]
    %v1227 = vld [vmem:[%s3 + $0x100] sm:$0xff]
    %v1228 = vld [vmem:[%s3 + $0x108] sm:$0xff]
    %v1229 = vld [vmem:[%s3 + $0x110] sm:$0xff]
    %v1230 = vld [vmem:[%s3 + $0x118] sm:$0xff]
    %v1231 = vld [vmem:[%s3 + $0x120] sm:$0xff]
    %v1232 = vld [vmem:[%s3 + $0x128] sm:$0xff]
    %v1233 = vld [vmem:[%s3 + $0x130] sm:$0xff]
    %v1234 = vld [vmem:[%s3 + $0x138] sm:$0xff]
    %v1235 = vld [vmem:[%s3 + $0x140] sm:$0xff]
    %v1236 = vld [vmem:[%s3 + $0x148] sm:$0xff]
    %v1237 = vld [vmem:[%s3 + $0x150] sm:$0xff]
    %v1238 = vld [vmem:[%s3 + $0x158] sm:$0xff]
    %v1239 = vld [vmem:[%s3 + $0x160] sm:$0xff]
    %v1240 = vld [vmem:[%s3 + $0x168] sm:$0xff]
    %v1241 = vld [vmem:[%s3 + $0x170] sm:$0xff]
    %v1242 = vld [vmem:[%s3 + $0x178] sm:$0xff]
    %v1243 = vld [vmem:[%s3 + $0x180] sm:$0xff]
    %v1244 = vld [vmem:[%s3 + $0x188] sm:$0xff]
    %v1245 = vld [vmem:[%s3 + $0x190] sm:$0xff]
    %v1246 = vld [vmem:[%s3 + $0x198] sm:$0xff]
    %v1247 = vld [vmem:[%s3 + $0x1a0] sm:$0xff]
    %v1248 = vld [vmem:[%s3 + $0x1a8] sm:$0xff]
    %v1249 = vld [vmem:[%s3 + $0x1b0] sm:$0xff]
    %v1250 = vld [vmem:[%s3 + $0x1b8] sm:$0xff]
    %v1251 = vld [vmem:[%s3 + $0x1c0] sm:$0xff]
    %v1252 = vld [vmem:[%s3 + $0x1c8] sm:$0xff]
    %v1253 = vld [vmem:[%s3 + $0x1d0] sm:$0xff]
    %v1254 = vld [vmem:[%s3 + $0x1d8] sm:$0xff]
    %v1255 = vld [vmem:[%s3 + $0x1e0] sm:$0xff]
    %v1256 = vld [vmem:[%s3 + $0x1e8] sm:$0xff]
    %v1257 = vld [vmem:[%s3 + $0x1f0] sm:$0xff]
    %v1258 = vld [vmem:[%s3 + $0x1f8] sm:$0xff]
    %1259 = vmatpush.msra.mxu0 %v1255
    %1260 = vmatpush.msra.mxu0 %v1251
    %1261 = vmatpush.msra.mxu0 %v1247
    %1262 = vmatpush.msra.mxu0 %v1243
    %1263 = vmatpush.msra.mxu0 %v1239
    %1264 = vmatpush.msra.mxu0 %v1235
    %1265 = vmatpush.msra.mxu0 %v1231
    %1266 = vmatpush.msra.mxu0 %v1227
    %1267 = vmatpush.msra.mxu0 %v1223
    %1268 = vmatpush.msra.mxu0 %v1219
    %1269 = vmatpush.msra.mxu0 %v1215
    %1270 = vmatpush.msra.mxu0 %v1211
    %1271 = vmatpush.msra.mxu0 %v1207
    %1272 = vmatpush.msra.mxu0 %v1203
    %1273 = vmatpush.msra.mxu0 %v1199
    %1274 = vmatpush.msra.mxu0 %v1195
    %1275 = vmatmul.f32.gmra.mxu0 %v1194
    %v1276 = vpop.f32.mrf.mxu0
    %v1277 = vadd.f32 0.0, %v1276
    %1278 = vdwg.mxu0
    %1279 = vmatpush.msra.mxu0 %v1256
    %1280 = vmatpush.msra.mxu0 %v1252
    %1281 = vmatpush.msra.mxu0 %v1248
    %1282 = vmatpush.msra.mxu0 %v1244
    %1283 = vmatpush.msra.mxu0 %v1240
    %1284 = vmatpush.msra.mxu0 %v1236
    %1285 = vmatpush.msra.mxu0 %v1232
    %1286 = vmatpush.msra.mxu0 %v1228
    %1287 = vmatpush.msra.mxu0 %v1224
    %1288 = vmatpush.msra.mxu0 %v1220
    %1289 = vmatpush.msra.mxu0 %v1216
    %1290 = vmatpush.msra.mxu0 %v1212
    %1291 = vmatpush.msra.mxu0 %v1208
    %1292 = vmatpush.msra.mxu0 %v1204
    %1293 = vmatpush.msra.mxu0 %v1200
    %1294 = vmatpush.msra.mxu0 %v1196
    %1295 = vmatmul.f32.gmra.mxu0 %v1194
    %v1296 = vpop.f32.mrf.mxu0
    %v1297 = vadd.f32 0.0, %v1296
    %1298 = vdwg.mxu0
    %1299 = vmatpush.msra.mxu0 %v1257
    %1300 = vmatpush.msra.mxu0 %v1253
    %1301 = vmatpush.msra.mxu0 %v1249
    %1302 = vmatpush.msra.mxu0 %v1245
    %1303 = vmatpush.msra.mxu0 %v1241
    %1304 = vmatpush.msra.mxu0 %v1237
    %1305 = vmatpush.msra.mxu0 %v1233
    %1306 = vmatpush.msra.mxu0 %v1229
    %1307 = vmatpush.msra.mxu0 %v1225
    %1308 = vmatpush.msra.mxu0 %v1221
    %1309 = vmatpush.msra.mxu0 %v1217
    %1310 = vmatpush.msra.mxu0 %v1213
    %1311 = vmatpush.msra.mxu0 %v1209
    %1312 = vmatpush.msra.mxu0 %v1205
    %1313 = vmatpush.msra.mxu0 %v1201
    %1314 = vmatpush.msra.mxu0 %v1197
    %1315 = vmatmul.f32.gmra.mxu0 %v1194
    %v1316 = vpop.f32.mrf.mxu0
    %v1317 = vadd.f32 0.0, %v1316
    %1318 = vdwg.mxu0
    %1319 = vmatpush.msra.mxu0 %v1258
    %1320 = vmatpush.msra.mxu0 %v1254
    %1321 = vmatpush.msra.mxu0 %v1250
    %1322 = vmatpush.msra.mxu0 %v1246
    %1323 = vmatpush.msra.mxu0 %v1242
    %1324 = vmatpush.msra.mxu0 %v1238
    %1325 = vmatpush.msra.mxu0 %v1234
    %1326 = vmatpush.msra.mxu0 %v1230
    %1327 = vmatpush.msra.mxu0 %v1226
    %1328 = vmatpush.msra.mxu0 %v1222
    %1329 = vmatpush.msra.mxu0 %v1218
    %1330 = vmatpush.msra.mxu0 %v1214
    %1331 = vmatpush.msra.mxu0 %v1210
    %1332 = vmatpush.msra.mxu0 %v1206
    %1333 = vmatpush.msra.mxu0 %v1202
    %1334 = vmatpush.msra.mxu0 %v1198
    %1335 = vmatmul.f32.gmra.mxu0 %v1194
    %v1336 = vpop.f32.mrf.mxu0
    %v1337 = vadd.f32 0.0, %v1336
    %1338 = vdwg.mxu0
    %v1339 = vadd.f32 %v1190, %v1277
    %v1340 = vadd.f32 %v1191, %v1297
    %v1341 = vadd.f32 %v1192, %v1317
    %v1342 = vadd.f32 %v1193, %v1337
    %v1343 = vld [vmem:[#allocation3] sm:$0xff]
    %v1344 = vxor.u32 %v1185, 2147483648
    %v1345 = vxor.u32 %v1186, 2147483648
    %v1346 = vxor.u32 %v1187, 2147483648
    %v1347 = vmul.f32 %v1344, 1.442695
    %v1348 = vpow.pop %v1347
    %v1349 = vmul.f32 %v1345, 1.442695
    %v1350 = vpow.pop %v1349
    %v1351 = vmul.f32 %v1346, 1.442695
    %v1352 = vpow.pop %v1351
    %v1353 = vadd.f32 %v1348, 1.0
    %v1354 = vadd.f32 %v1350, 1.0
    %v1355 = vadd.f32 %v1352, 1.0
    %v1356 = vrcp.pop %v1353
    %v1357 = vmul.f32 %v1353, %v1356
    %v1358 = vsub.f32 1.0, %v1357
    %v1359 = vmul.f32 %v1356, %v1358
    %v1360 = vadd.f32 %v1356, %v1359
    %vm1361 = vweird.f32 %v1353
    %vm1362 = vweird.f32 %v1356
    %vm1363 = vmor %vm1361, %vm1362
    %v1364 = vsel %vm1363, %v1356, %v1360
    %v1365 = vand.u32 2147483647, %v1353
    %vm1366 = vcmp.eq.f32.partialorder %v1365, 8.507059e+37
    %v1367 = vand.u32 %v1353, 2147483648
    %v1368 = vor.u32 1.1754944e-38, %v1367
    %v1369 = vsel %vm1366, %v1368, %v1364
    %v1370 = vmul.f32 1.0, %v1369
    %v1371 = vrcp.pop %v1354
    %v1372 = vmul.f32 %v1354, %v1371
    %v1373 = vsub.f32 1.0, %v1372
    %v1374 = vmul.f32 %v1371, %v1373
    %v1375 = vadd.f32 %v1371, %v1374
    %vm1376 = vweird.f32 %v1354
    %vm1377 = vweird.f32 %v1371
    %vm1378 = vmor %vm1376, %vm1377
    %v1379 = vsel %vm1378, %v1371, %v1375
    %v1380 = vand.u32 2147483647, %v1354
    %vm1381 = vcmp.eq.f32.partialorder %v1380, 8.507059e+37
    %v1382 = vand.u32 %v1354, 2147483648
    %v1383 = vor.u32 1.1754944e-38, %v1382
    %v1384 = vsel %vm1381, %v1383, %v1379
    %v1385 = vmul.f32 1.0, %v1384
    %v1386 = vrcp.pop %v1355
    %v1387 = vmul.f32 %v1355, %v1386
    %v1388 = vsub.f32 1.0, %v1387
    %v1389 = vmul.f32 %v1386, %v1388
    %v1390 = vadd.f32 %v1386, %v1389
    %vm1391 = vweird.f32 %v1355
    %vm1392 = vweird.f32 %v1386
    %vm1393 = vmor %vm1391, %vm1392
    %v1394 = vsel %vm1393, %v1386, %v1390
    %v1395 = vand.u32 2147483647, %v1355
    %vm1396 = vcmp.eq.f32.partialorder %v1395, 8.507059e+37
    %v1397 = vand.u32 %v1355, 2147483648
    %v1398 = vor.u32 1.1754944e-38, %v1397
    %v1399 = vsel %vm1396, %v1398, %v1394
    %v1400 = vmul.f32 1.0, %v1399
    %v1401 = vtanh.pop %v1188
    %v1402 = vmul.f32 %v1385, %v1343
    %v1403 = vmul.f32 %v1370, %v1401
    %v1404 = vadd.f32 %v1402, %v1403
    %v1405 = vtanh.pop %v1404
    %v1406 = vmul.f32 %v1400, %v1405
    %v1407 = vld [vmem:[#allocation5] sm:$0xff]
    %v1408 = vxor.u32 %v1339, 2147483648
    %v1409 = vxor.u32 %v1340, 2147483648
    %v1410 = vxor.u32 %v1341, 2147483648
    %v1411 = vmul.f32 %v1408, 1.442695
    %v1412 = vpow.pop %v1411
    %v1413 = vmul.f32 %v1409, 1.442695
    %v1414 = vpow.pop %v1413
    %v1415 = vmul.f32 %v1410, 1.442695
    %v1416 = vpow.pop %v1415
    %v1417 = vadd.f32 %v1412, 1.0
    %v1418 = vadd.f32 %v1414, 1.0
    %v1419 = vadd.f32 %v1416, 1.0
    %v1420 = vrcp.pop %v1417
    %v1421 = vmul.f32 %v1417, %v1420
    %v1422 = vsub.f32 1.0, %v1421
    %v1423 = vmul.f32 %v1420, %v1422
    %v1424 = vadd.f32 %v1420, %v1423
    %vm1425 = vweird.f32 %v1417
    %vm1426 = vweird.f32 %v1420
    %vm1427 = vmor %vm1425, %vm1426
    %v1428 = vsel %vm1427, %v1420, %v1424
    %v1429 = vand.u32 2147483647, %v1417
    %vm1430 = vcmp.eq.f32.partialorder %v1429, 8.507059e+37
    %v1431 = vand.u32 %v1417, 2147483648
    %v1432 = vor.u32 1.1754944e-38, %v1431
    %v1433 = vsel %vm1430, %v1432, %v1428
    %v1434 = vmul.f32 1.0, %v1433
    %v1435 = vrcp.pop %v1418
    %v1436 = vmul.f32 %v1418, %v1435
    %v1437 = vsub.f32 1.0, %v1436
    %v1438 = vmul.f32 %v1435, %v1437
    %v1439 = vadd.f32 %v1435, %v1438
    %vm1440 = vweird.f32 %v1418
    %vm1441 = vweird.f32 %v1435
    %vm1442 = vmor %vm1440, %vm1441
    %v1443 = vsel %vm1442, %v1435, %v1439
    %v1444 = vand.u32 2147483647, %v1418
    %vm1445 = vcmp.eq.f32.partialorder %v1444, 8.507059e+37
    %v1446 = vand.u32 %v1418, 2147483648
    %v1447 = vor.u32 1.1754944e-38, %v1446
    %v1448 = vsel %vm1445, %v1447, %v1443
    %v1449 = vmul.f32 1.0, %v1448
    %v1450 = vrcp.pop %v1419
    %v1451 = vmul.f32 %v1419, %v1450
    %v1452 = vsub.f32 1.0, %v1451
    %v1453 = vmul.f32 %v1450, %v1452
    %v1454 = vadd.f32 %v1450, %v1453
    %vm1455 = vweird.f32 %v1419
    %vm1456 = vweird.f32 %v1450
    %vm1457 = vmor %vm1455, %vm1456
    %v1458 = vsel %vm1457, %v1450, %v1454
    %v1459 = vand.u32 2147483647, %v1419
    %vm1460 = vcmp.eq.f32.partialorder %v1459, 8.507059e+37
    %v1461 = vand.u32 %v1419, 2147483648
    %v1462 = vor.u32 1.1754944e-38, %v1461
    %v1463 = vsel %vm1460, %v1462, %v1458
    %v1464 = vmul.f32 1.0, %v1463
    %v1465 = vtanh.pop %v1342
    %v1466 = vmul.f32 %v1449, %v1407
    %v1467 = vmul.f32 %v1434, %v1465
    %v1468 = vadd.f32 %v1466, %v1467
    %v1469 = vtanh.pop %v1468
    %v1470 = vmul.f32 %v1464, %v1469
    %1471 = vst [vmem:[#allocation2] sm:$0xff] %v1406
    %1472 = vst [vmem:[#allocation3] sm:$0xff] %v1404
    %1473 = vst [vmem:[#allocation4] sm:$0xff] %v1470
    %1474 = vst [vmem:[#allocation5] sm:$0xff] %v1468
    %s1475 = scalar_lea.vmem %s4, 16
    %1476 = vst [vmem:[%s1475] sm:$0xff] %v1406
    %s1477 = scalar_lea.vmem %s138, 8
    %1478 = vst [vmem:[%s1477] sm:$0xff] %v1470
    %s1479 = scalar_lea.vmem [#allocation6], 96
    %v1480 = vld [vmem:[%s1479] sm:$0xff]
    %v1481 = vld [vmem:[%s1479 + $0x8] sm:$0xff]
    %v1482 = vld [vmem:[%s1479 + $0x10] sm:$0xff]
    %v1483 = vld [vmem:[%s1479 + $0x18] sm:$0xff]
    %v1484 = vld [vmem:[#allocation2] sm:$0xff]
    %v1485 = vld [vmem:[%s2] sm:$0xff]
    %v1486 = vld [vmem:[%s2 + $0x8] sm:$0xff]
    %v1487 = vld [vmem:[%s2 + $0x10] sm:$0xff]
    %v1488 = vld [vmem:[%s2 + $0x18] sm:$0xff]
    %v1489 = vld [vmem:[%s2 + $0x20] sm:$0xff]
    %v1490 = vld [vmem:[%s2 + $0x28] sm:$0xff]
    %v1491 = vld [vmem:[%s2 + $0x30] sm:$0xff]
    %v1492 = vld [vmem:[%s2 + $0x38] sm:$0xff]
    %v1493 = vld [vmem:[%s2 + $0x40] sm:$0xff]
    %v1494 = vld [vmem:[%s2 + $0x48] sm:$0xff]
    %v1495 = vld [vmem:[%s2 + $0x50] sm:$0xff]
    %v1496 = vld [vmem:[%s2 + $0x58] sm:$0xff]
    %v1497 = vld [vmem:[%s2 + $0x60] sm:$0xff]
    %v1498 = vld [vmem:[%s2 + $0x68] sm:$0xff]
    %v1499 = vld [vmem:[%s2 + $0x70] sm:$0xff]
    %v1500 = vld [vmem:[%s2 + $0x78] sm:$0xff]
    %v1501 = vld [vmem:[%s2 + $0x80] sm:$0xff]
    %v1502 = vld [vmem:[%s2 + $0x88] sm:$0xff]
    %v1503 = vld [vmem:[%s2 + $0x90] sm:$0xff]
    %v1504 = vld [vmem:[%s2 + $0x98] sm:$0xff]
    %v1505 = vld [vmem:[%s2 + $0xa0] sm:$0xff]
    %v1506 = vld [vmem:[%s2 + $0xa8] sm:$0xff]
    %v1507 = vld [vmem:[%s2 + $0xb0] sm:$0xff]
    %v1508 = vld [vmem:[%s2 + $0xb8] sm:$0xff]
    %v1509 = vld [vmem:[%s2 + $0xc0] sm:$0xff]
    %v1510 = vld [vmem:[%s2 + $0xc8] sm:$0xff]
    %v1511 = vld [vmem:[%s2 + $0xd0] sm:$0xff]
    %v1512 = vld [vmem:[%s2 + $0xd8] sm:$0xff]
    %v1513 = vld [vmem:[%s2 + $0xe0] sm:$0xff]
    %v1514 = vld [vmem:[%s2 + $0xe8] sm:$0xff]
    %v1515 = vld [vmem:[%s2 + $0xf0] sm:$0xff]
    %v1516 = vld [vmem:[%s2 + $0xf8] sm:$0xff]
    %v1517 = vld [vmem:[%s2 + $0x100] sm:$0xff]
    %v1518 = vld [vmem:[%s2 + $0x108] sm:$0xff]
    %v1519 = vld [vmem:[%s2 + $0x110] sm:$0xff]
    %v1520 = vld [vmem:[%s2 + $0x118] sm:$0xff]
    %v1521 = vld [vmem:[%s2 + $0x120] sm:$0xff]
    %v1522 = vld [vmem:[%s2 + $0x128] sm:$0xff]
    %v1523 = vld [vmem:[%s2 + $0x130] sm:$0xff]
    %v1524 = vld [vmem:[%s2 + $0x138] sm:$0xff]
    %v1525 = vld [vmem:[%s2 + $0x140] sm:$0xff]
    %v1526 = vld [vmem:[%s2 + $0x148] sm:$0xff]
    %v1527 = vld [vmem:[%s2 + $0x150] sm:$0xff]
    %v1528 = vld [vmem:[%s2 + $0x158] sm:$0xff]
    %v1529 = vld [vmem:[%s2 + $0x160] sm:$0xff]
    %v1530 = vld [vmem:[%s2 + $0x168] sm:$0xff]
    %v1531 = vld [vmem:[%s2 + $0x170] sm:$0xff]
    %v1532 = vld [vmem:[%s2 + $0x178] sm:$0xff]
    %v1533 = vld [vmem:[%s2 + $0x180] sm:$0xff]
    %v1534 = vld [vmem:[%s2 + $0x188] sm:$0xff]
    %v1535 = vld [vmem:[%s2 + $0x190] sm:$0xff]
    %v1536 = vld [vmem:[%s2 + $0x198] sm:$0xff]
    %v1537 = vld [vmem:[%s2 + $0x1a0] sm:$0xff]
    %v1538 = vld [vmem:[%s2 + $0x1a8] sm:$0xff]
    %v1539 = vld [vmem:[%s2 + $0x1b0] sm:$0xff]
    %v1540 = vld [vmem:[%s2 + $0x1b8] sm:$0xff]
    %v1541 = vld [vmem:[%s2 + $0x1c0] sm:$0xff]
    %v1542 = vld [vmem:[%s2 + $0x1c8] sm:$0xff]
    %v1543 = vld [vmem:[%s2 + $0x1d0] sm:$0xff]
    %v1544 = vld [vmem:[%s2 + $0x1d8] sm:$0xff]
    %v1545 = vld [vmem:[%s2 + $0x1e0] sm:$0xff]
    %v1546 = vld [vmem:[%s2 + $0x1e8] sm:$0xff]
    %v1547 = vld [vmem:[%s2 + $0x1f0] sm:$0xff]
    %v1548 = vld [vmem:[%s2 + $0x1f8] sm:$0xff]
    %1549 = vmatpush.msra.mxu0 %v1545
    %1550 = vmatpush.msra.mxu0 %v1541
    %1551 = vmatpush.msra.mxu0 %v1537
    %1552 = vmatpush.msra.mxu0 %v1533
    %1553 = vmatpush.msra.mxu0 %v1529
    %1554 = vmatpush.msra.mxu0 %v1525
    %1555 = vmatpush.msra.mxu0 %v1521
    %1556 = vmatpush.msra.mxu0 %v1517
    %1557 = vmatpush.msra.mxu0 %v1513
    %1558 = vmatpush.msra.mxu0 %v1509
    %1559 = vmatpush.msra.mxu0 %v1505
    %1560 = vmatpush.msra.mxu0 %v1501
    %1561 = vmatpush.msra.mxu0 %v1497
    %1562 = vmatpush.msra.mxu0 %v1493
    %1563 = vmatpush.msra.mxu0 %v1489
    %1564 = vmatpush.msra.mxu0 %v1485
    %1565 = vmatmul.f32.gmra.mxu0 %v1484
    %v1566 = vpop.f32.mrf.mxu0
    %v1567 = vadd.f32 0.0, %v1566
    %1568 = vdwg.mxu0
    %1569 = vmatpush.msra.mxu0 %v1546
    %1570 = vmatpush.msra.mxu0 %v1542
    %1571 = vmatpush.msra.mxu0 %v1538
    %1572 = vmatpush.msra.mxu0 %v1534
    %1573 = vmatpush.msra.mxu0 %v1530
    %1574 = vmatpush.msra.mxu0 %v1526
    %1575 = vmatpush.msra.mxu0 %v1522
    %1576 = vmatpush.msra.mxu0 %v1518
    %1577 = vmatpush.msra.mxu0 %v1514
    %1578 = vmatpush.msra.mxu0 %v1510
    %1579 = vmatpush.msra.mxu0 %v1506
    %1580 = vmatpush.msra.mxu0 %v1502
    %1581 = vmatpush.msra.mxu0 %v1498
    %1582 = vmatpush.msra.mxu0 %v1494
    %1583 = vmatpush.msra.mxu0 %v1490
    %1584 = vmatpush.msra.mxu0 %v1486
    %1585 = vmatmul.f32.gmra.mxu0 %v1484
    %v1586 = vpop.f32.mrf.mxu0
    %v1587 = vadd.f32 0.0, %v1586
    %1588 = vdwg.mxu0
    %1589 = vmatpush.msra.mxu0 %v1547
    %1590 = vmatpush.msra.mxu0 %v1543
    %1591 = vmatpush.msra.mxu0 %v1539
    %1592 = vmatpush.msra.mxu0 %v1535
    %1593 = vmatpush.msra.mxu0 %v1531
    %1594 = vmatpush.msra.mxu0 %v1527
    %1595 = vmatpush.msra.mxu0 %v1523
    %1596 = vmatpush.msra.mxu0 %v1519
    %1597 = vmatpush.msra.mxu0 %v1515
    %1598 = vmatpush.msra.mxu0 %v1511
    %1599 = vmatpush.msra.mxu0 %v1507
    %1600 = vmatpush.msra.mxu0 %v1503
    %1601 = vmatpush.msra.mxu0 %v1499
    %1602 = vmatpush.msra.mxu0 %v1495
    %1603 = vmatpush.msra.mxu0 %v1491
    %1604 = vmatpush.msra.mxu0 %v1487
    %1605 = vmatmul.f32.gmra.mxu0 %v1484
    %v1606 = vpop.f32.mrf.mxu0
    %v1607 = vadd.f32 0.0, %v1606
    %1608 = vdwg.mxu0
    %1609 = vmatpush.msra.mxu0 %v1548
    %1610 = vmatpush.msra.mxu0 %v1544
    %1611 = vmatpush.msra.mxu0 %v1540
    %1612 = vmatpush.msra.mxu0 %v1536
    %1613 = vmatpush.msra.mxu0 %v1532
    %1614 = vmatpush.msra.mxu0 %v1528
    %1615 = vmatpush.msra.mxu0 %v1524
    %1616 = vmatpush.msra.mxu0 %v1520
    %1617 = vmatpush.msra.mxu0 %v1516
    %1618 = vmatpush.msra.mxu0 %v1512
    %1619 = vmatpush.msra.mxu0 %v1508
    %1620 = vmatpush.msra.mxu0 %v1504
    %1621 = vmatpush.msra.mxu0 %v1500
    %1622 = vmatpush.msra.mxu0 %v1496
    %1623 = vmatpush.msra.mxu0 %v1492
    %1624 = vmatpush.msra.mxu0 %v1488
    %1625 = vmatmul.f32.gmra.mxu0 %v1484
    %v1626 = vpop.f32.mrf.mxu0
    %v1627 = vadd.f32 0.0, %v1626
    %1628 = vdwg.mxu0
    %v1629 = vadd.f32 %v1480, %v1567
    %v1630 = vadd.f32 %v1481, %v1587
    %v1631 = vadd.f32 %v1482, %v1607
    %v1632 = vadd.f32 %v1483, %v1627
    %v1633 = vld [vmem:[#allocation7] sm:$0xff]
    %v1634 = vld [vmem:[#allocation7 + $0x8] sm:$0xff]
    %v1635 = vld [vmem:[#allocation7 + $0x10] sm:$0xff]
    %v1636 = vld [vmem:[#allocation7 + $0x18] sm:$0xff]
    %v1637 = vld [vmem:[#allocation4] sm:$0xff]
    %v1638 = vld [vmem:[%s3] sm:$0xff]
    %v1639 = vld [vmem:[%s3 + $0x8] sm:$0xff]
    %v1640 = vld [vmem:[%s3 + $0x10] sm:$0xff]
    %v1641 = vld [vmem:[%s3 + $0x18] sm:$0xff]
    %v1642 = vld [vmem:[%s3 + $0x20] sm:$0xff]
    %v1643 = vld [vmem:[%s3 + $0x28] sm:$0xff]
    %v1644 = vld [vmem:[%s3 + $0x30] sm:$0xff]
    %v1645 = vld [vmem:[%s3 + $0x38] sm:$0xff]
    %v1646 = vld [vmem:[%s3 + $0x40] sm:$0xff]
    %v1647 = vld [vmem:[%s3 + $0x48] sm:$0xff]
    %v1648 = vld [vmem:[%s3 + $0x50] sm:$0xff]
    %v1649 = vld [vmem:[%s3 + $0x58] sm:$0xff]
    %v1650 = vld [vmem:[%s3 + $0x60] sm:$0xff]
    %v1651 = vld [vmem:[%s3 + $0x68] sm:$0xff]
    %v1652 = vld [vmem:[%s3 + $0x70] sm:$0xff]
    %v1653 = vld [vmem:[%s3 + $0x78] sm:$0xff]
    %v1654 = vld [vmem:[%s3 + $0x80] sm:$0xff]
    %v1655 = vld [vmem:[%s3 + $0x88] sm:$0xff]
    %v1656 = vld [vmem:[%s3 + $0x90] sm:$0xff]
    %v1657 = vld [vmem:[%s3 + $0x98] sm:$0xff]
    %v1658 = vld [vmem:[%s3 + $0xa0] sm:$0xff]
    %v1659 = vld [vmem:[%s3 + $0xa8] sm:$0xff]
    %v1660 = vld [vmem:[%s3 + $0xb0] sm:$0xff]
    %v1661 = vld [vmem:[%s3 + $0xb8] sm:$0xff]
    %v1662 = vld [vmem:[%s3 + $0xc0] sm:$0xff]
    %v1663 = vld [vmem:[%s3 + $0xc8] sm:$0xff]
    %v1664 = vld [vmem:[%s3 + $0xd0] sm:$0xff]
    %v1665 = vld [vmem:[%s3 + $0xd8] sm:$0xff]
    %v1666 = vld [vmem:[%s3 + $0xe0] sm:$0xff]
    %v1667 = vld [vmem:[%s3 + $0xe8] sm:$0xff]
    %v1668 = vld [vmem:[%s3 + $0xf0] sm:$0xff]
    %v1669 = vld [vmem:[%s3 + $0xf8] sm:$0xff]
    %v1670 = vld [vmem:[%s3 + $0x100] sm:$0xff]
    %v1671 = vld [vmem:[%s3 + $0x108] sm:$0xff]
    %v1672 = vld [vmem:[%s3 + $0x110] sm:$0xff]
    %v1673 = vld [vmem:[%s3 + $0x118] sm:$0xff]
    %v1674 = vld [vmem:[%s3 + $0x120] sm:$0xff]
    %v1675 = vld [vmem:[%s3 + $0x128] sm:$0xff]
    %v1676 = vld [vmem:[%s3 + $0x130] sm:$0xff]
    %v1677 = vld [vmem:[%s3 + $0x138] sm:$0xff]
    %v1678 = vld [vmem:[%s3 + $0x140] sm:$0xff]
    %v1679 = vld [vmem:[%s3 + $0x148] sm:$0xff]
    %v1680 = vld [vmem:[%s3 + $0x150] sm:$0xff]
    %v1681 = vld [vmem:[%s3 + $0x158] sm:$0xff]
    %v1682 = vld [vmem:[%s3 + $0x160] sm:$0xff]
    %v1683 = vld [vmem:[%s3 + $0x168] sm:$0xff]
    %v1684 = vld [vmem:[%s3 + $0x170] sm:$0xff]
    %v1685 = vld [vmem:[%s3 + $0x178] sm:$0xff]
    %v1686 = vld [vmem:[%s3 + $0x180] sm:$0xff]
    %v1687 = vld [vmem:[%s3 + $0x188] sm:$0xff]
    %v1688 = vld [vmem:[%s3 + $0x190] sm:$0xff]
    %v1689 = vld [vmem:[%s3 + $0x198] sm:$0xff]
    %v1690 = vld [vmem:[%s3 + $0x1a0] sm:$0xff]
    %v1691 = vld [vmem:[%s3 + $0x1a8] sm:$0xff]
    %v1692 = vld [vmem:[%s3 + $0x1b0] sm:$0xff]
    %v1693 = vld [vmem:[%s3 + $0x1b8] sm:$0xff]
    %v1694 = vld [vmem:[%s3 + $0x1c0] sm:$0xff]
    %v1695 = vld [vmem:[%s3 + $0x1c8] sm:$0xff]
    %v1696 = vld [vmem:[%s3 + $0x1d0] sm:$0xff]
    %v1697 = vld [vmem:[%s3 + $0x1d8] sm:$0xff]
    %v1698 = vld [vmem:[%s3 + $0x1e0] sm:$0xff]
    %v1699 = vld [vmem:[%s3 + $0x1e8] sm:$0xff]
    %v1700 = vld [vmem:[%s3 + $0x1f0] sm:$0xff]
    %v1701 = vld [vmem:[%s3 + $0x1f8] sm:$0xff]
    %1702 = vmatpush.msra.mxu0 %v1698
    %1703 = vmatpush.msra.mxu0 %v1694
    %1704 = vmatpush.msra.mxu0 %v1690
    %1705 = vmatpush.msra.mxu0 %v1686
    %1706 = vmatpush.msra.mxu0 %v1682
    %1707 = vmatpush.msra.mxu0 %v1678
    %1708 = vmatpush.msra.mxu0 %v1674
    %1709 = vmatpush.msra.mxu0 %v1670
    %1710 = vmatpush.msra.mxu0 %v1666
    %1711 = vmatpush.msra.mxu0 %v1662
    %1712 = vmatpush.msra.mxu0 %v1658
    %1713 = vmatpush.msra.mxu0 %v1654
    %1714 = vmatpush.msra.mxu0 %v1650
    %1715 = vmatpush.msra.mxu0 %v1646
    %1716 = vmatpush.msra.mxu0 %v1642
    %1717 = vmatpush.msra.mxu0 %v1638
    %1718 = vmatmul.f32.gmra.mxu0 %v1637
    %v1719 = vpop.f32.mrf.mxu0
    %v1720 = vadd.f32 0.0, %v1719
    %1721 = vdwg.mxu0
    %1722 = vmatpush.msra.mxu0 %v1699
    %1723 = vmatpush.msra.mxu0 %v1695
    %1724 = vmatpush.msra.mxu0 %v1691
    %1725 = vmatpush.msra.mxu0 %v1687
    %1726 = vmatpush.msra.mxu0 %v1683
    %1727 = vmatpush.msra.mxu0 %v1679
    %1728 = vmatpush.msra.mxu0 %v1675
    %1729 = vmatpush.msra.mxu0 %v1671
    %1730 = vmatpush.msra.mxu0 %v1667
    %1731 = vmatpush.msra.mxu0 %v1663
    %1732 = vmatpush.msra.mxu0 %v1659
    %1733 = vmatpush.msra.mxu0 %v1655
    %1734 = vmatpush.msra.mxu0 %v1651
    %1735 = vmatpush.msra.mxu0 %v1647
    %1736 = vmatpush.msra.mxu0 %v1643
    %1737 = vmatpush.msra.mxu0 %v1639
    %1738 = vmatmul.f32.gmra.mxu0 %v1637
    %v1739 = vpop.f32.mrf.mxu0
    %v1740 = vadd.f32 0.0, %v1739
    %1741 = vdwg.mxu0
    %1742 = vmatpush.msra.mxu0 %v1700
    %1743 = vmatpush.msra.mxu0 %v1696
    %1744 = vmatpush.msra.mxu0 %v1692
    %1745 = vmatpush.msra.mxu0 %v1688
    %1746 = vmatpush.msra.mxu0 %v1684
    %1747 = vmatpush.msra.mxu0 %v1680
    %1748 = vmatpush.msra.mxu0 %v1676
    %1749 = vmatpush.msra.mxu0 %v1672
    %1750 = vmatpush.msra.mxu0 %v1668
    %1751 = vmatpush.msra.mxu0 %v1664
    %1752 = vmatpush.msra.mxu0 %v1660
    %1753 = vmatpush.msra.mxu0 %v1656
    %1754 = vmatpush.msra.mxu0 %v1652
    %1755 = vmatpush.msra.mxu0 %v1648
    %1756 = vmatpush.msra.mxu0 %v1644
    %1757 = vmatpush.msra.mxu0 %v1640
    %1758 = vmatmul.f32.gmra.mxu0 %v1637
    %v1759 = vpop.f32.mrf.mxu0
    %v1760 = vadd.f32 0.0, %v1759
    %1761 = vdwg.mxu0
    %1762 = vmatpush.msra.mxu0 %v1701
    %1763 = vmatpush.msra.mxu0 %v1697
    %1764 = vmatpush.msra.mxu0 %v1693
    %1765 = vmatpush.msra.mxu0 %v1689
    %1766 = vmatpush.msra.mxu0 %v1685
    %1767 = vmatpush.msra.mxu0 %v1681
    %1768 = vmatpush.msra.mxu0 %v1677
    %1769 = vmatpush.msra.mxu0 %v1673
    %1770 = vmatpush.msra.mxu0 %v1669
    %1771 = vmatpush.msra.mxu0 %v1665
    %1772 = vmatpush.msra.mxu0 %v1661
    %1773 = vmatpush.msra.mxu0 %v1657
    %1774 = vmatpush.msra.mxu0 %v1653
    %1775 = vmatpush.msra.mxu0 %v1649
    %1776 = vmatpush.msra.mxu0 %v1645
    %1777 = vmatpush.msra.mxu0 %v1641
    %1778 = vmatmul.f32.gmra.mxu0 %v1637
    %v1779 = vpop.f32.mrf.mxu0
    %v1780 = vadd.f32 0.0, %v1779
    %1781 = vdwg.mxu0
    %v1782 = vadd.f32 %v1633, %v1720
    %v1783 = vadd.f32 %v1634, %v1740
    %v1784 = vadd.f32 %v1635, %v1760
    %v1785 = vadd.f32 %v1636, %v1780
    %v1786 = vld [vmem:[#allocation3] sm:$0xff]
    %v1787 = vxor.u32 %v1629, 2147483648
    %v1788 = vxor.u32 %v1630, 2147483648
    %v1789 = vxor.u32 %v1631, 2147483648
    %v1790 = vmul.f32 %v1787, 1.442695
    %v1791 = vpow.pop %v1790
    %v1792 = vmul.f32 %v1788, 1.442695
    %v1793 = vpow.pop %v1792
    %v1794 = vmul.f32 %v1789, 1.442695
    %v1795 = vpow.pop %v1794
    %v1796 = vadd.f32 %v1791, 1.0
    %v1797 = vadd.f32 %v1793, 1.0
    %v1798 = vadd.f32 %v1795, 1.0
    %v1799 = vrcp.pop %v1796
    %v1800 = vmul.f32 %v1796, %v1799
    %v1801 = vsub.f32 1.0, %v1800
    %v1802 = vmul.f32 %v1799, %v1801
    %v1803 = vadd.f32 %v1799, %v1802
    %vm1804 = vweird.f32 %v1796
    %vm1805 = vweird.f32 %v1799
    %vm1806 = vmor %vm1804, %vm1805
    %v1807 = vsel %vm1806, %v1799, %v1803
    %v1808 = vand.u32 2147483647, %v1796
    %vm1809 = vcmp.eq.f32.partialorder %v1808, 8.507059e+37
    %v1810 = vand.u32 %v1796, 2147483648
    %v1811 = vor.u32 1.1754944e-38, %v1810
    %v1812 = vsel %vm1809, %v1811, %v1807
    %v1813 = vmul.f32 1.0, %v1812
    %v1814 = vrcp.pop %v1797
    %v1815 = vmul.f32 %v1797, %v1814
    %v1816 = vsub.f32 1.0, %v1815
    %v1817 = vmul.f32 %v1814, %v1816
    %v1818 = vadd.f32 %v1814, %v1817
    %vm1819 = vweird.f32 %v1797
    %vm1820 = vweird.f32 %v1814
    %vm1821 = vmor %vm1819, %vm1820
    %v1822 = vsel %vm1821, %v1814, %v1818
    %v1823 = vand.u32 2147483647, %v1797
    %vm1824 = vcmp.eq.f32.partialorder %v1823, 8.507059e+37
    %v1825 = vand.u32 %v1797, 2147483648
    %v1826 = vor.u32 1.1754944e-38, %v1825
    %v1827 = vsel %vm1824, %v1826, %v1822
    %v1828 = vmul.f32 1.0, %v1827
    %v1829 = vrcp.pop %v1798
    %v1830 = vmul.f32 %v1798, %v1829
    %v1831 = vsub.f32 1.0, %v1830
    %v1832 = vmul.f32 %v1829, %v1831
    %v1833 = vadd.f32 %v1829, %v1832
    %vm1834 = vweird.f32 %v1798
    %vm1835 = vweird.f32 %v1829
    %vm1836 = vmor %vm1834, %vm1835
    %v1837 = vsel %vm1836, %v1829, %v1833
    %v1838 = vand.u32 2147483647, %v1798
    %vm1839 = vcmp.eq.f32.partialorder %v1838, 8.507059e+37
    %v1840 = vand.u32 %v1798, 2147483648
    %v1841 = vor.u32 1.1754944e-38, %v1840
    %v1842 = vsel %vm1839, %v1841, %v1837
    %v1843 = vmul.f32 1.0, %v1842
    %v1844 = vtanh.pop %v1632
    %v1845 = vmul.f32 %v1828, %v1786
    %v1846 = vmul.f32 %v1813, %v1844
    %v1847 = vadd.f32 %v1845, %v1846
    %v1848 = vtanh.pop %v1847
    %v1849 = vmul.f32 %v1843, %v1848
    %v1850 = vld [vmem:[#allocation5] sm:$0xff]
    %v1851 = vxor.u32 %v1782, 2147483648
    %v1852 = vxor.u32 %v1783, 2147483648
    %v1853 = vxor.u32 %v1784, 2147483648
    %v1854 = vmul.f32 %v1851, 1.442695
    %v1855 = vpow.pop %v1854
    %v1856 = vmul.f32 %v1852, 1.442695
    %v1857 = vpow.pop %v1856
    %v1858 = vmul.f32 %v1853, 1.442695
    %v1859 = vpow.pop %v1858
    %v1860 = vadd.f32 %v1855, 1.0
    %v1861 = vadd.f32 %v1857, 1.0
    %v1862 = vadd.f32 %v1859, 1.0
    %v1863 = vrcp.pop %v1860
    %v1864 = vmul.f32 %v1860, %v1863
    %v1865 = vsub.f32 1.0, %v1864
    %v1866 = vmul.f32 %v1863, %v1865
    %v1867 = vadd.f32 %v1863, %v1866
    %vm1868 = vweird.f32 %v1860
    %vm1869 = vweird.f32 %v1863
    %vm1870 = vmor %vm1868, %vm1869
    %v1871 = vsel %vm1870, %v1863, %v1867
    %v1872 = vand.u32 2147483647, %v1860
    %vm1873 = vcmp.eq.f32.partialorder %v1872, 8.507059e+37
    %v1874 = vand.u32 %v1860, 2147483648
    %v1875 = vor.u32 1.1754944e-38, %v1874
    %v1876 = vsel %vm1873, %v1875, %v1871
    %v1877 = vmul.f32 1.0, %v1876
    %v1878 = vrcp.pop %v1861
    %v1879 = vmul.f32 %v1861, %v1878
    %v1880 = vsub.f32 1.0, %v1879
    %v1881 = vmul.f32 %v1878, %v1880
    %v1882 = vadd.f32 %v1878, %v1881
    %vm1883 = vweird.f32 %v1861
    %vm1884 = vweird.f32 %v1878
    %vm1885 = vmor %vm1883, %vm1884
    %v1886 = vsel %vm1885, %v1878, %v1882
    %v1887 = vand.u32 2147483647, %v1861
    %vm1888 = vcmp.eq.f32.partialorder %v1887, 8.507059e+37
    %v1889 = vand.u32 %v1861, 2147483648
    %v1890 = vor.u32 1.1754944e-38, %v1889
    %v1891 = vsel %vm1888, %v1890, %v1886
    %v1892 = vmul.f32 1.0, %v1891
    %v1893 = vrcp.pop %v1862
    %v1894 = vmul.f32 %v1862, %v1893
    %v1895 = vsub.f32 1.0, %v1894
    %v1896 = vmul.f32 %v1893, %v1895
    %v1897 = vadd.f32 %v1893, %v1896
    %vm1898 = vweird.f32 %v1862
    %vm1899 = vweird.f32 %v1893
    %vm1900 = vmor %vm1898, %vm1899
    %v1901 = vsel %vm1900, %v1893, %v1897
    %v1902 = vand.u32 2147483647, %v1862
    %vm1903 = vcmp.eq.f32.partialorder %v1902, 8.507059e+37
    %v1904 = vand.u32 %v1862, 2147483648
    %v1905 = vor.u32 1.1754944e-38, %v1904
    %v1906 = vsel %vm1903, %v1905, %v1901
    %v1907 = vmul.f32 1.0, %v1906
    %v1908 = vtanh.pop %v1785
    %v1909 = vmul.f32 %v1892, %v1850
    %v1910 = vmul.f32 %v1877, %v1908
    %v1911 = vadd.f32 %v1909, %v1910
    %v1912 = vtanh.pop %v1911
    %v1913 = vmul.f32 %v1907, %v1912
    %1914 = vst [vmem:[#allocation2] sm:$0xff] %v1849
    %1915 = vst [vmem:[#allocation3] sm:$0xff] %v1847
    %1916 = vst [vmem:[#allocation4] sm:$0xff] %v1913
    %1917 = vst [vmem:[#allocation5] sm:$0xff] %v1911
    %s1918 = scalar_lea.vmem %s4, 24
    %1919 = vst [vmem:[%s1918] sm:$0xff] %v1849
    %1920 = vst [vmem:[%s138] sm:$0xff] %v1913
    // Predicated region
    $region68: #{pyramid_lstm_layer.1} parent=1 // pred_check
      %p1921 = pneg %p141
    $region69: #{pyramid_lstm_layer.1} parent=1 // pred_check_branch
      %1923 = sbr.rel (%p1921) target = $region71
    $region70: #{pyramid_lstm_layer.1} parent=1 // pred_region
      %v1924 = vld [vmem:[#allocation2] sm:$0xff]
      %1925 = vst [vmem:[%s6] sm:$0xff] %v1924
      %v1926 = vld [vmem:[#allocation4] sm:$0xff]
      %s1927 = scalar_lea.vmem %s6, 8
      %1928 = vst [vmem:[%s1927] sm:$0xff] %v1926
      %v1929 = vld [vmem:[#allocation3] sm:$0xff]
      %1930 = vst [vmem:[%s7] sm:$0xff] %v1929
      %v1931 = vld [vmem:[#allocation5] sm:$0xff]
      %s1932 = scalar_lea.vmem %s7, 8
      %1933 = vst [vmem:[%s1932] sm:$0xff] %v1931
    $region71: #{pyramid_lstm_layer.1} parent=1 // pred_fallthru
      _
    %s1934 = ssub.s32 0, 0
    %s1935 = smul.u32 4, %s1934
    %p1936 = scmp.lt.s32.totalorder %s1935, 3
    %s1937 = scalar_select %p1936, %s1935, 3
    %s1938 = smul.addr %s1937, 8
    %s1939 = scalar_lea.vmem %s5, %s1938
    // Predicated region
    $region72: #{pyramid_lstm_layer.1} parent=1 // pred_check
      _
    $region73: #{pyramid_lstm_layer.1} parent=1 // pred_check_branch
      %1941 = sbr.rel (0) target = $region75
    $region74: #{pyramid_lstm_layer.1} parent=1 // pred_region
      _
    $region75: #{pyramid_lstm_layer.1} parent=1 // pred_fallthru
      _
    // Predicated region
    $region76: #{pyramid_lstm_layer.1} parent=1 // pred_check
      _
    $region77: #{pyramid_lstm_layer.1} parent=1 // pred_check_branch
      %1943 = sbr.rel (0) target = $region79
    $region78: #{pyramid_lstm_layer.1} parent=1 // pred_region
      %s1944 = ssub.s32 0, 0
      %s1945 = smul.u32 4, %s1944
    $region79: #{pyramid_lstm_layer.1} parent=1 // pred_fallthru
      _
    // Predicated region
    $region80: #{pyramid_lstm_layer.1} parent=1 // pred_check
      _
    $region81: #{pyramid_lstm_layer.1} parent=1 // pred_check_branch
      %1947 = sbr.rel (0) target = $region83
    $region82: #{pyramid_lstm_layer.1} parent=1 // pred_region
      _
    $region83: #{pyramid_lstm_layer.1} parent=1 // pred_fallthru
      _
    // Predicated region
    $region84: #{pyramid_lstm_layer.1} parent=1 // pred_check
      _
    $region85: #{pyramid_lstm_layer.1} parent=1 // pred_check_branch
      %1949 = sbr.rel (0) target = $region87
    $region86: #{pyramid_lstm_layer.1} parent=1 // pred_region
      _
    $region87: #{pyramid_lstm_layer.1} parent=1 // pred_fallthru
      _
    // Predicated region
    $region88: #{pyramid_lstm_layer.1} parent=1 // pred_check
      _
    $region89: #{pyramid_lstm_layer.1} parent=1 // pred_check_branch
      %1951 = sbr.rel (0) target = $region91
    $region90: #{pyramid_lstm_layer.1} parent=1 // pred_region
      _
    $region91: #{pyramid_lstm_layer.1} parent=1 // pred_fallthru
      _
    // Predicated region
    $region92: #{pyramid_lstm_layer.1} parent=1 // pred_check
      _
    $region93: #{pyramid_lstm_layer.1} parent=1 // pred_check_branch
      %1953 = sbr.rel (0) target = $region95
    $region94: #{pyramid_lstm_layer.1} parent=1 // pred_region
      %s1954 = ssub.s32 0, 0
      %s1955 = smul.u32 4, %s1954
      %p1956 = scmp.lt.s32.totalorder %s1955, 3
      %s1957 = scalar_select %p1956, %s1955, 3
      %s1958 = smul.addr %s1957, 8
      %s1959 = scalar_lea.vmem %s5, %s1958
    $region95: #{pyramid_lstm_layer.1} parent=1 // pred_fallthru
      _
    // Predicated region
    $region96: #{pyramid_lstm_layer.1} parent=1 // pred_check
      _
    $region97: #{pyramid_lstm_layer.1} parent=1 // pred_check_branch
      %1961 = sbr.rel (0) target = $region99
    $region98: #{pyramid_lstm_layer.1} parent=1 // pred_region
      _
    $region99: #{pyramid_lstm_layer.1} parent=1 // pred_fallthru
      _
    // Predicated region
    $region100: #{pyramid_lstm_layer.1} parent=1 // pred_check
      _
    $region101: #{pyramid_lstm_layer.1} parent=1 // pred_check_branch
      %1963 = sbr.rel (0) target = $region103
    $region102: #{pyramid_lstm_layer.1} parent=1 // pred_region
      _
    $region103: #{pyramid_lstm_layer.1} parent=1 // pred_fallthru
      _

</llo_original>
